<compile_context>
chip_gen: v7x
topology: tpu7x:2x2x1
jax: 0.10.0
libtpu: 0.0.40
codegen_flags: <defaults>
</compile_context>

<pallas_src>
import jax
import jax.numpy as jnp
from jax.experimental import pallas as pl
from jax.experimental.pallas import tpu as pltpu

# logical dims
D_IN, D1, D2, D3, D_OUT = 784, 600, 600, 200, 10
# lane-padded dims (multiples of 128)
P_IN, P1, P2, P3, P_OUT = 896, 640, 640, 256, 128

THR1, THR2, THR3, THR4 = 0.5, 0.3, 0.3, 0.3


def _round_up(a, m):
    return -(-a // m) * m


def _pad_to(x, shape):
    pads = [(0, s - d) for d, s in zip(x.shape, shape)]
    return jnp.pad(x, pads)


def snn_kernel(x_ref, w1_ref, t1_ref, w2_ref, t2_ref, w3_ref, t3_ref,
               w4_ref, b4_ref, mem4_ref):
    # x is already bf16; the /255 scale is folded into w1 by the wrapper.
    # Layers 1-3: MXU matmul (bf16 operands, f32 accumulation), compare against the
    # bias-folded threshold, emit spikes directly in bf16 (next layer's MXU operand).
    z1 = jnp.dot(x_ref[...], w1_ref[...], preferred_element_type=jnp.float32)
    spk1 = (z1 > t1_ref[...]).astype(jnp.bfloat16)
    # TODO(synk): nn.Dropout(0.3) is treated as identity (inference/eval mode).

    z2 = jnp.dot(spk1, w2_ref[...], preferred_element_type=jnp.float32)
    spk2 = (z2 > t2_ref[...]).astype(jnp.bfloat16) + spk1   # residual add; {0,1,2} exact in bf16

    z3 = jnp.dot(spk2, w3_ref[...], preferred_element_type=jnp.float32)
    spk3 = (z3 > t3_ref[...]).astype(jnp.bfloat16)

    # Layer 4: explicit f32 bias add because mem4 (= cur4) is returned.
    mem4_ref[...] = (jnp.dot(spk3, w4_ref[...], preferred_element_type=jnp.float32)
                     + b4_ref[...])


def init_params(key):
    """Deterministic PyTorch-Linear-style init: U(-1/sqrt(fan_in), 1/sqrt(fan_in)).
    Weights are stored [fan_in, fan_out] (transposed from PyTorch's [out, in])."""
    def linear(k, fan_in, fan_out):
        kw, kb = jax.random.split(k)
        bound = 1.0 / jnp.sqrt(jnp.float32(fan_in))
        w = jax.random.uniform(kw, (fan_in, fan_out), jnp.float32, -bound, bound)
        b = jax.random.uniform(kb, (fan_out,), jnp.float32, -bound, bound)
        return w, b
    ks = jax.random.split(key, 4)
    return (linear(ks[0], D_IN, D1), linear(ks[1], D1, D2),
            linear(ks[2], D2, D3), linear(ks[3], D3, D_OUT))


def prepare_params(params):
    """One-time prep:
      * zero-pad everything to lane multiples,
      * fold biases 1-3 into per-unit thresholds (thr = THR - b; padded cols get thr = THR > 0
        so they never spike),
      * cast w2/w3/w4 to bf16 (MXU operands). w1 stays padded f32 so the runtime /255 scale
        can be folded into it per call before the bf16 cast."""
    (w1, b1), (w2, b2), (w3, b3), (w4, b4) = params

    w1p = _pad_to(w1, (P_IN, P1)).astype(jnp.float32)
    t1 = (THR1 - _pad_to(b1, (P1,))).reshape(1, P1).astype(jnp.float32)

    w2p = _pad_to(w2, (P1, P2)).astype(jnp.bfloat16)
    t2 = (THR2 - _pad_to(b2, (P2,))).reshape(1, P2).astype(jnp.float32)

    w3p = _pad_to(w3, (P2, P3)).astype(jnp.bfloat16)
    t3 = (THR3 - _pad_to(b3, (P3,))).reshape(1, P3).astype(jnp.float32)

    w4p = _pad_to(w4, (P3, P_OUT)).astype(jnp.bfloat16)
    b4p = _pad_to(b4, (P_OUT,)).reshape(1, P_OUT).astype(jnp.float32)

    return (w1p, t1, w2p, t2, w3p, t3, w4p, b4p)


@jax.jit
def residual_spiking_forward(x, prepped):
    B = x.shape[0]
    w1p, t1, w2p, t2, w3p, t3, w4p, b4p = prepped

    # Hoisted global-max /255 decision -> a scalar scale folded into W1 (tiny per-call op),
    # so no scaled copy of x is materialized and the kernel does zero per-row scaling work.
    x32 = x.astype(jnp.float32)
    scale = jnp.where(jnp.max(x32) > 1.0, jnp.float32(1.0 / 255.0), jnp.float32(1.0))
    w1_eff = (w1p * scale).astype(jnp.bfloat16)

    # Stream x as bf16 (cast fused with the pad) -> half the input DMA / VMEM footprint.
    # Batch tile: up to 512 rows, but chosen so the grid has >= 2 steps whenever B > 8
    # (keeps v7x's 2nd TensorCore busy); always a multiple of 8 (sublane).
    TB = min(512, max(8, _round_up(pl.cdiv(B, 2), 8)))
    B_pad = _round_up(B, TB)
    nb = B_pad // TB
    xp = _pad_to(x32, (B_pad, P_IN)).astype(jnp.bfloat16)

    # Advisory cost hint for the XLA scheduler.
    mac = P_IN * P1 + P1 * P2 + P2 * P3 + P3 * P_OUT
    flops = 2 * B_pad * mac
    bytes_accessed = (2 * mac                         # bf16 weights (resident, read once)
                      + 4 * (P1 + P2 + P3 + P_OUT)    # f32 thresholds/bias
                      + 2 * B_pad * P_IN              # bf16 x in
                      + 4 * B_pad * P_OUT)            # f32 mem4 out

    row = lambda i: (i, 0)     # batch-tiled arrays
    const = lambda i: (0, 0)   # weights/thresholds: same block every step -> stay resident

    mem4_p = pl.pallas_call(
        snn_kernel,
        out_shape=jax.ShapeDtypeStruct((B_pad, P_OUT), jnp.float32),
        grid_spec=pltpu.PrefetchScalarGridSpec(
            num_scalar_prefetch=0,
            grid=(nb,),
            in_specs=[
                pl.BlockSpec((TB, P_IN), row),
                pl.BlockSpec((P_IN, P1), const), pl.BlockSpec((1, P1), const),
                pl.BlockSpec((P1, P2), const), pl.BlockSpec((1, P2), const),
                pl.BlockSpec((P2, P3), const), pl.BlockSpec((1, P3), const),
                pl.BlockSpec((P3, P_OUT), const), pl.BlockSpec((1, P_OUT), const),
            ],
            out_specs=pl.BlockSpec((TB, P_OUT), row),
        ),
        compiler_params=pltpu.CompilerParams(
            dimension_semantics=("parallel",),      # shard batch tiles across TCs (v7x)
            vmem_limit_bytes=40 * 1024 * 1024,      # safe on v7x's 64 MiB physical VMEM
        ),
        cost_estimate=pl.CostEstimate(flops=flops, transcendentals=0,
                                      bytes_accessed=bytes_accessed),
    )(xp, w1_eff, t1, w2p, t2, w3p, t3, w4p, b4p)

    mem4 = mem4_p[:B, :D_OUT]
    spk4 = (mem4 > THR4).astype(jnp.float32)   # tiny (B,10) compare in the wrapper
    return spk4, mem4


def reference_forward(x, params):
    """Plain-JAX reference mirroring the kernel numerics (bf16 MXU operands, f32 accumulation,
    /255 folded into W1, biases 1-3 folded into thresholds). Forward structure matches the
    PyTorch module; only MXU-vs-XLA accumulation order can differ (ulp-level)."""
    (w1, b1), (w2, b2), (w3, b3), (w4, b4) = params
    x = x.astype(jnp.float32)
    scale = jnp.where(jnp.max(x) > 1.0, jnp.float32(1.0 / 255.0), jnp.float32(1.0))

    xb = x.astype(jnp.bfloat16)
    w1e = (w1 * scale).astype(jnp.bfloat16)

    z1 = jnp.dot(xb, w1e, preferred_element_type=jnp.float32)
    spk1 = (z1 > (THR1 - b1)).astype(jnp.bfloat16)
    z2 = jnp.dot(spk1, w2.astype(jnp.bfloat16), preferred_element_type=jnp.float32)
    spk2 = (z2 > (THR2 - b2)).astype(jnp.bfloat16) + spk1
    z3 = jnp.dot(spk2, w3.astype(jnp.bfloat16), preferred_element_type=jnp.float32)
    spk3 = (z3 > (THR3 - b3)).astype(jnp.bfloat16)
    mem4 = jnp.dot(spk3, w4.astype(jnp.bfloat16), preferred_element_type=jnp.float32) + b4
    spk4 = (mem4 > THR4).astype(jnp.float32)
    return spk4, mem4


if __name__ == "__main__":
    key = jax.random.PRNGKey(0)
    k_param, k_x = jax.random.split(key)
    params = init_params(k_param)
    prepped = prepare_params(params)   # pad / fold / cast weights ONCE, reused every forward

    # small batch; raw-pixel-scale values to exercise the /255 branch
    batch = 2
    x = jax.random.uniform(k_x, (batch, D_IN), jnp.float32, 0.0, 255.0)

    spk4, mem4 = residual_spiking_forward(x, prepped)
    jax.block_until_ready((spk4, mem4))

    spk4_ref, mem4_ref = reference_forward(x, params)
    assert spk4.shape == (batch, D_OUT) and mem4.shape == (batch, D_OUT)
    assert jnp.allclose(mem4, mem4_ref, atol=2e-3, rtol=2e-3), "mem4 mismatch"
    # Spike check robust to threshold-boundary ulp flips: only compare where the reference
    # pre-activation is clearly away from the threshold.
    safe = jnp.abs(mem4_ref - THR4) > 1e-3
    assert bool(jnp.all(jnp.where(safe, spk4 == spk4_ref, True))), "spk4 mismatch"

    print("KERNEL_OK")
</pallas_src>

<mosaic_0001>
module attributes {stable_mosaic.version = 11 : i64} {
  func.func @snn_kernel(%arg0: i32, %arg1: memref<8x896xbf16, #tpu.memory_space<vmem>>, %arg2: memref<896x640xbf16, #tpu.memory_space<vmem>>, %arg3: memref<1x640xf32, #tpu.memory_space<vmem>>, %arg4: memref<640x640xbf16, #tpu.memory_space<vmem>>, %arg5: memref<1x640xf32, #tpu.memory_space<vmem>>, %arg6: memref<640x256xbf16, #tpu.memory_space<vmem>>, %arg7: memref<1x256xf32, #tpu.memory_space<vmem>>, %arg8: memref<256x128xbf16, #tpu.memory_space<vmem>>, %arg9: memref<1x128xf32, #tpu.memory_space<vmem>>, %arg10: memref<8x128xf32, #tpu.memory_space<vmem>>) attributes {dimension_semantics = [#tpu.dimension_semantics<parallel>], iteration_bounds = array<i64: 1>, scalar_prefetch = 0 : i64, scratch_operands = 0 : i64, tpu.core_type = #tpu.core_type<tc>, window_params = [{transform_indices = @transform_0, window_bounds = array<i64: 8, 896>}, {pipeline_mode = #tpu.pipeline_mode<synchronous>, transform_indices = @transform_1, window_bounds = array<i64: 896, 640>}, {pipeline_mode = #tpu.pipeline_mode<synchronous>, transform_indices = @transform_2, window_bounds = array<i64: 1, 640>}, {pipeline_mode = #tpu.pipeline_mode<synchronous>, transform_indices = @transform_3, window_bounds = array<i64: 640, 640>}, {pipeline_mode = #tpu.pipeline_mode<synchronous>, transform_indices = @transform_4, window_bounds = array<i64: 1, 640>}, {pipeline_mode = #tpu.pipeline_mode<synchronous>, transform_indices = @transform_5, window_bounds = array<i64: 640, 256>}, {pipeline_mode = #tpu.pipeline_mode<synchronous>, transform_indices = @transform_6, window_bounds = array<i64: 1, 256>}, {pipeline_mode = #tpu.pipeline_mode<synchronous>, transform_indices = @transform_7, window_bounds = array<i64: 256, 128>}, {pipeline_mode = #tpu.pipeline_mode<synchronous>, transform_indices = @transform_8, window_bounds = array<i64: 1, 128>}, {transform_indices = @transform_9, window_bounds = array<i64: 8, 128>}]} {
    %c0 = arith.constant 0 : index
    %c0_0 = arith.constant 0 : index
    %0 = vector.load %arg1[%c0, %c0_0] : memref<8x896xbf16, #tpu.memory_space<vmem>>, vector<8x896xbf16>
    %c0_1 = arith.constant 0 : index
    %c0_2 = arith.constant 0 : index
    %1 = vector.load %arg2[%c0_1, %c0_2] : memref<896x640xbf16, #tpu.memory_space<vmem>>, vector<896x640xbf16>
    %cst = arith.constant dense<0.000000e+00> : vector<8x640xf32>
    %2 = tpu.matmul %0, %1, %cst {dimension_numbers = #tpu.dot_dimension_numbers<[1], [0], [0], [1], [0, 0, 1, 1], [], []>} : vector<8x896xbf16>, vector<896x640xbf16>, vector<8x640xf32> -> vector<8x640xf32>
    %c0_3 = arith.constant 0 : index
    %c0_4 = arith.constant 0 : index
    %3 = vector.load %arg3[%c0_3, %c0_4] : memref<1x640xf32, #tpu.memory_space<vmem>>, vector<1x640xf32>
    %4 = vector.broadcast %3 : vector<1x640xf32> to vector<8x640xf32>
    %5 = arith.cmpf ogt, %2, %4 : vector<8x640xf32>
    %6 = arith.extui %5 : vector<8x640xi1> to vector<8x640xi32>
    %7 = arith.sitofp %6 : vector<8x640xi32> to vector<8x640xf32>
    %8 = arith.truncf %7 : vector<8x640xf32> to vector<8x640xbf16>
    %c0_5 = arith.constant 0 : index
    %c0_6 = arith.constant 0 : index
    %9 = vector.load %arg4[%c0_5, %c0_6] : memref<640x640xbf16, #tpu.memory_space<vmem>>, vector<640x640xbf16>
    %cst_7 = arith.constant dense<0.000000e+00> : vector<8x640xf32>
    %10 = tpu.matmul %8, %9, %cst_7 {dimension_numbers = #tpu.dot_dimension_numbers<[1], [0], [0], [1], [0, 0, 1, 1], [], []>} : vector<8x640xbf16>, vector<640x640xbf16>, vector<8x640xf32> -> vector<8x640xf32>
    %c0_8 = arith.constant 0 : index
    %c0_9 = arith.constant 0 : index
    %11 = vector.load %arg5[%c0_8, %c0_9] : memref<1x640xf32, #tpu.memory_space<vmem>>, vector<1x640xf32>
    %12 = vector.broadcast %11 : vector<1x640xf32> to vector<8x640xf32>
    %13 = arith.cmpf ogt, %10, %12 : vector<8x640xf32>
    %14 = arith.extui %13 : vector<8x640xi1> to vector<8x640xi32>
    %15 = arith.sitofp %14 : vector<8x640xi32> to vector<8x640xf32>
    %16 = arith.truncf %15 : vector<8x640xf32> to vector<8x640xbf16>
    %17 = arith.addf %16, %8 : vector<8x640xbf16>
    %c0_10 = arith.constant 0 : index
    %c0_11 = arith.constant 0 : index
    %18 = vector.load %arg6[%c0_10, %c0_11] : memref<640x256xbf16, #tpu.memory_space<vmem>>, vector<640x256xbf16>
    %cst_12 = arith.constant dense<0.000000e+00> : vector<8x256xf32>
    %19 = tpu.matmul %17, %18, %cst_12 {dimension_numbers = #tpu.dot_dimension_numbers<[1], [0], [0], [1], [0, 0, 1, 1], [], []>} : vector<8x640xbf16>, vector<640x256xbf16>, vector<8x256xf32> -> vector<8x256xf32>
    %c0_13 = arith.constant 0 : index
    %c0_14 = arith.constant 0 : index
    %20 = vector.load %arg7[%c0_13, %c0_14] : memref<1x256xf32, #tpu.memory_space<vmem>>, vector<1x256xf32>
    %21 = vector.broadcast %20 : vector<1x256xf32> to vector<8x256xf32>
    %22 = arith.cmpf ogt, %19, %21 : vector<8x256xf32>
    %23 = arith.extui %22 : vector<8x256xi1> to vector<8x256xi32>
    %24 = arith.sitofp %23 : vector<8x256xi32> to vector<8x256xf32>
    %25 = arith.truncf %24 : vector<8x256xf32> to vector<8x256xbf16>
    %c0_15 = arith.constant 0 : index
    %c0_16 = arith.constant 0 : index
    %26 = vector.load %arg8[%c0_15, %c0_16] : memref<256x128xbf16, #tpu.memory_space<vmem>>, vector<256x128xbf16>
    %cst_17 = arith.constant dense<0.000000e+00> : vector<8x128xf32>
    %27 = tpu.matmul %25, %26, %cst_17 {dimension_numbers = #tpu.dot_dimension_numbers<[1], [0], [0], [1], [0, 0, 1, 1], [], []>} : vector<8x256xbf16>, vector<256x128xbf16>, vector<8x128xf32> -> vector<8x128xf32>
    %c0_18 = arith.constant 0 : index
    %c0_19 = arith.constant 0 : index
    %28 = vector.load %arg9[%c0_18, %c0_19] : memref<1x128xf32, #tpu.memory_space<vmem>>, vector<1x128xf32>
    %29 = vector.broadcast %28 : vector<1x128xf32> to vector<8x128xf32>
    %30 = arith.addf %27, %29 : vector<8x128xf32>
    %c0_20 = arith.constant 0 : index
    %c0_21 = arith.constant 0 : index
    %31 = vector.load %arg10[%c0_20, %c0_21] : memref<8x128xf32, #tpu.memory_space<vmem>>, vector<8x128xf32>
    tpu.vector_store %arg10[%c0_20, %c0_21], %30 {strides = array<i32>} : memref<8x128xf32, #tpu.memory_space<vmem>>, vector<8x128xf32>,
    return
  }
  func.func @transform_0(%arg0: i32) -> (i32, i32) {
    %c0_i32 = arith.constant 0 : i32
    %c0_i32_0 = arith.constant 0 : i32
    return %arg0, %c0_i32 : i32, i32
  }
  func.func @transform_1(%arg0: i32) -> (i32, i32) {
    %c0_i32 = arith.constant 0 : i32
    %c0_i32_0 = arith.constant 0 : i32
    %c0_i32_1 = arith.constant 0 : i32
    return %c0_i32, %c0_i32_0 : i32, i32
  }
  func.func @transform_2(%arg0: i32) -> (i32, i32) {
    %c0_i32 = arith.constant 0 : i32
    %c0_i32_0 = arith.constant 0 : i32
    %c0_i32_1 = arith.constant 0 : i32
    return %c0_i32, %c0_i32_0 : i32, i32
  }
  func.func @transform_3(%arg0: i32) -> (i32, i32) {
    %c0_i32 = arith.constant 0 : i32
    %c0_i32_0 = arith.constant 0 : i32
    %c0_i32_1 = arith.constant 0 : i32
    return %c0_i32, %c0_i32_0 : i32, i32
  }
  func.func @transform_4(%arg0: i32) -> (i32, i32) {
    %c0_i32 = arith.constant 0 : i32
    %c0_i32_0 = arith.constant 0 : i32
    %c0_i32_1 = arith.constant 0 : i32
    return %c0_i32, %c0_i32_0 : i32, i32
  }
  func.func @transform_5(%arg0: i32) -> (i32, i32) {
    %c0_i32 = arith.constant 0 : i32
    %c0_i32_0 = arith.constant 0 : i32
    %c0_i32_1 = arith.constant 0 : i32
    return %c0_i32, %c0_i32_0 : i32, i32
  }
  func.func @transform_6(%arg0: i32) -> (i32, i32) {
    %c0_i32 = arith.constant 0 : i32
    %c0_i32_0 = arith.constant 0 : i32
    %c0_i32_1 = arith.constant 0 : i32
    return %c0_i32, %c0_i32_0 : i32, i32
  }
  func.func @transform_7(%arg0: i32) -> (i32, i32) {
    %c0_i32 = arith.constant 0 : i32
    %c0_i32_0 = arith.constant 0 : i32
    %c0_i32_1 = arith.constant 0 : i32
    return %c0_i32, %c0_i32_0 : i32, i32
  }
  func.func @transform_8(%arg0: i32) -> (i32, i32) {
    %c0_i32 = arith.constant 0 : i32
    %c0_i32_0 = arith.constant 0 : i32
    %c0_i32_1 = arith.constant 0 : i32
    return %c0_i32, %c0_i32_0 : i32, i32
  }
  func.func @transform_9(%arg0: i32) -> (i32, i32) {
    %c0_i32 = arith.constant 0 : i32
    %c0_i32_0 = arith.constant 0 : i32
    return %arg0, %c0_i32 : i32, i32
  }
}

</mosaic_0001>

<llo_original>
// kernel: residual_spiking_forward.1
$region0: #{residual_spiking_forward.1}
  #allocation0 [shape = 'u32[]', space=smem, size = 0x4, offset = 0x4, fixed_abs, tag = 'smem constant byte address 0x4 - core index']
  #allocation1 [shape = 'u32[144,128]{1,0:T(1,128)}', space=vmem, size = 0x12000, scoped, tag = 'internal scratch']
  %s0 = inlined_call_operand.vmem [shape: bf16[8,896], index: 0, kind: input, shape index: {}]
  %s1 = inlined_call_operand.vmem [shape: bf16[896,640], index: 1, kind: input, shape index: {}]
  %s2 = inlined_call_operand.vmem [shape: f32[1,640], index: 2, kind: input, shape index: {}]
  %s3 = inlined_call_operand.vmem [shape: bf16[640,640], index: 3, kind: input, shape index: {}]
  %s4 = inlined_call_operand.vmem [shape: f32[1,640], index: 4, kind: input, shape index: {}]
  %s5 = inlined_call_operand.vmem [shape: bf16[640,256], index: 5, kind: input, shape index: {}]
  %s6 = inlined_call_operand.vmem [shape: f32[1,256], index: 6, kind: input, shape index: {}]
  %s7 = inlined_call_operand.vmem [shape: bf16[256,128], index: 7, kind: input, shape index: {}]
  %s8 = inlined_call_operand.vmem [shape: f32[1,128], index: 8, kind: input, shape index: {}]
  %s9 = inlined_call_operand.vmem [shape: f32[8,128], index: 9, kind: output, shape index: {}]
  %s10 = sld [smem:[#allocation0]]
  $region46: #{residual_spiking_forward.1} parent=0
    _
  %s12 = ssub.s32 1, %s10
  %s13 = scalar_select 0, %s12, %s10
  // Predicated region
  $region2: #{residual_spiking_forward.1} parent=0 // pred_check
    _
  $region3: #{residual_spiking_forward.1} parent=0 // pred_check_branch
    %15 = sbr.rel (0) target = $region5
  $region4: #{residual_spiking_forward.1} parent=0 // pred_region
    _
  $region5: #{residual_spiking_forward.1} parent=0 // pred_fallthru
    _
  // Predicated region
  $region6: #{residual_spiking_forward.1} parent=0 // pred_check
    _
  $region7: #{residual_spiking_forward.1} parent=0 // pred_check_branch
    %17 = sbr.rel (0) target = $region9
  $region8: #{residual_spiking_forward.1} parent=0 // pred_region
    _
  $region9: #{residual_spiking_forward.1} parent=0 // pred_fallthru
    _
  // Predicated region
  $region10: #{residual_spiking_forward.1} parent=0 // pred_check
    _
  $region11: #{residual_spiking_forward.1} parent=0 // pred_check_branch
    %19 = sbr.rel (0) target = $region13
  $region12: #{residual_spiking_forward.1} parent=0 // pred_region
    _
  $region13: #{residual_spiking_forward.1} parent=0 // pred_fallthru
    _
  // Predicated region
  $region14: #{residual_spiking_forward.1} parent=0 // pred_check
    _
  $region15: #{residual_spiking_forward.1} parent=0 // pred_check_branch
    %21 = sbr.rel (0) target = $region17
  $region16: #{residual_spiking_forward.1} parent=0 // pred_region
    _
  $region17: #{residual_spiking_forward.1} parent=0 // pred_fallthru
    _
  // Predicated region
  $region18: #{residual_spiking_forward.1} parent=0 // pred_check
    _
  $region19: #{residual_spiking_forward.1} parent=0 // pred_check_branch
    %23 = sbr.rel (0) target = $region21
  $region20: #{residual_spiking_forward.1} parent=0 // pred_region
    _
  $region21: #{residual_spiking_forward.1} parent=0 // pred_fallthru
    _
  // Predicated region
  $region22: #{residual_spiking_forward.1} parent=0 // pred_check
    _
  $region23: #{residual_spiking_forward.1} parent=0 // pred_check_branch
    %25 = sbr.rel (0) target = $region25
  $region24: #{residual_spiking_forward.1} parent=0 // pred_region
    _
  $region25: #{residual_spiking_forward.1} parent=0 // pred_fallthru
    _
  // Predicated region
  $region26: #{residual_spiking_forward.1} parent=0 // pred_check
    _
  $region27: #{residual_spiking_forward.1} parent=0 // pred_check_branch
    %27 = sbr.rel (0) target = $region29
  $region28: #{residual_spiking_forward.1} parent=0 // pred_region
    _
  $region29: #{residual_spiking_forward.1} parent=0 // pred_fallthru
    _
  // Predicated region
  $region30: #{residual_spiking_forward.1} parent=0 // pred_check
    _
  $region31: #{residual_spiking_forward.1} parent=0 // pred_check_branch
    %29 = sbr.rel (0) target = $region33
  $region32: #{residual_spiking_forward.1} parent=0 // pred_region
    _
  $region33: #{residual_spiking_forward.1} parent=0 // pred_fallthru
    _
  // Predicated region
  $region34: #{residual_spiking_forward.1} parent=0 // pred_check
    _
  $region35: #{residual_spiking_forward.1} parent=0 // pred_check_branch
    %31 = sbr.rel (0) target = $region37
  $region36: #{residual_spiking_forward.1} parent=0 // pred_region
    _
  $region37: #{residual_spiking_forward.1} parent=0 // pred_fallthru
    _
  %v33 = vld [vmem:[%s0] sm:$0xff]
  %v34 = vld [vmem:[%s0 + $0x8] sm:$0xff]
  %v35 = vld [vmem:[%s0 + $0x10] sm:$0xff]
  %v36 = vld [vmem:[%s0 + $0x18] sm:$0xf]
  %v37 = vld [vmem:[%s1] sm:$0xff]
  %v38 = vld [vmem:[%s1 + $0x8] sm:$0xff]
  %v39 = vld [vmem:[%s1 + $0x10] sm:$0xf]
  %v40 = vld [vmem:[%s1 + $0x14] sm:$0xff]
  %v41 = vld [vmem:[%s1 + $0x1c] sm:$0xff]
  %v42 = vld [vmem:[%s1 + $0x24] sm:$0xf]
  %v43 = vld [vmem:[%s1 + $0x28] sm:$0xff]
  %v44 = vld [vmem:[%s1 + $0x30] sm:$0xff]
  %v45 = vld [vmem:[%s1 + $0x38] sm:$0xf]
  %v46 = vld [vmem:[%s1 + $0x3c] sm:$0xff]
  %v47 = vld [vmem:[%s1 + $0x44] sm:$0xff]
  %v48 = vld [vmem:[%s1 + $0x4c] sm:$0xf]
  %v49 = vld [vmem:[%s1 + $0x50] sm:$0xff]
  %v50 = vld [vmem:[%s1 + $0x58] sm:$0xff]
  %v51 = vld [vmem:[%s1 + $0x60] sm:$0xf]
  %v52 = vld [vmem:[%s1 + $0x64] sm:$0xff]
  %v53 = vld [vmem:[%s1 + $0x6c] sm:$0xff]
  %v54 = vld [vmem:[%s1 + $0x74] sm:$0xf]
  %v55 = vld [vmem:[%s1 + $0x78] sm:$0xff]
  %v56 = vld [vmem:[%s1 + $0x80] sm:$0xff]
  %v57 = vld [vmem:[%s1 + $0x88] sm:$0xf]
  %v58 = vld [vmem:[%s1 + $0x8c] sm:$0xff]
  %v59 = vld [vmem:[%s1 + $0x94] sm:$0xff]
  %v60 = vld [vmem:[%s1 + $0x9c] sm:$0xf]
  %v61 = vld [vmem:[%s1 + $0xa0] sm:$0xff]
  %v62 = vld [vmem:[%s1 + $0xa8] sm:$0xff]
  %v63 = vld [vmem:[%s1 + $0xb0] sm:$0xf]
  %v64 = vld [vmem:[%s1 + $0xb4] sm:$0xff]
  %v65 = vld [vmem:[%s1 + $0xbc] sm:$0xff]
  %v66 = vld [vmem:[%s1 + $0xc4] sm:$0xf]
  %v67 = vld [vmem:[%s1 + $0xc8] sm:$0xff]
  %v68 = vld [vmem:[%s1 + $0xd0] sm:$0xff]
  %v69 = vld [vmem:[%s1 + $0xd8] sm:$0xf]
  %v70 = vld [vmem:[%s1 + $0xdc] sm:$0xff]
  %v71 = vld [vmem:[%s1 + $0xe4] sm:$0xff]
  %v72 = vld [vmem:[%s1 + $0xec] sm:$0xf]
  %v73 = vld [vmem:[%s1 + $0xf0] sm:$0xff]
  %v74 = vld [vmem:[%s1 + $0xf8] sm:$0xff]
  %v75 = vld [vmem:[%s1 + $0x100] sm:$0xf]
  %v76 = vld [vmem:[%s1 + $0x104] sm:$0xff]
  %v77 = vld [vmem:[%s1 + $0x10c] sm:$0xff]
  %v78 = vld [vmem:[%s1 + $0x114] sm:$0xf]
  %v79 = vld [vmem:[%s1 + $0x118] sm:$0xff]
  %v80 = vld [vmem:[%s1 + $0x120] sm:$0xff]
  %v81 = vld [vmem:[%s1 + $0x128] sm:$0xf]
  %v82 = vld [vmem:[%s1 + $0x12c] sm:$0xff]
  %v83 = vld [vmem:[%s1 + $0x134] sm:$0xff]
  %v84 = vld [vmem:[%s1 + $0x13c] sm:$0xf]
  %v85 = vld [vmem:[%s1 + $0x140] sm:$0xff]
  %v86 = vld [vmem:[%s1 + $0x148] sm:$0xff]
  %v87 = vld [vmem:[%s1 + $0x150] sm:$0xf]
  %v88 = vld [vmem:[%s1 + $0x154] sm:$0xff]
  %v89 = vld [vmem:[%s1 + $0x15c] sm:$0xff]
  %v90 = vld [vmem:[%s1 + $0x164] sm:$0xf]
  %v91 = vld [vmem:[%s1 + $0x168] sm:$0xff]
  %v92 = vld [vmem:[%s1 + $0x170] sm:$0xff]
  %v93 = vld [vmem:[%s1 + $0x178] sm:$0xf]
  %v94 = vld [vmem:[%s1 + $0x17c] sm:$0xff]
  %v95 = vld [vmem:[%s1 + $0x184] sm:$0xff]
  %v96 = vld [vmem:[%s1 + $0x18c] sm:$0xf]
  %v97 = vld [vmem:[%s1 + $0x190] sm:$0xff]
  %v98 = vld [vmem:[%s1 + $0x198] sm:$0xff]
  %v99 = vld [vmem:[%s1 + $0x1a0] sm:$0xf]
  %v100 = vld [vmem:[%s1 + $0x1a4] sm:$0xff]
  %v101 = vld [vmem:[%s1 + $0x1ac] sm:$0xff]
  %v102 = vld [vmem:[%s1 + $0x1b4] sm:$0xf]
  %v103 = vld [vmem:[%s1 + $0x1b8] sm:$0xff]
  %v104 = vld [vmem:[%s1 + $0x1c0] sm:$0xff]
  %v105 = vld [vmem:[%s1 + $0x1c8] sm:$0xf]
  %v106 = vld [vmem:[%s1 + $0x1cc] sm:$0xff]
  %v107 = vld [vmem:[%s1 + $0x1d4] sm:$0xff]
  %v108 = vld [vmem:[%s1 + $0x1dc] sm:$0xf]
  %v109 = vld [vmem:[%s1 + $0x1e0] sm:$0xff]
  %v110 = vld [vmem:[%s1 + $0x1e8] sm:$0xff]
  %v111 = vld [vmem:[%s1 + $0x1f0] sm:$0xf]
  %v112 = vld [vmem:[%s1 + $0x1f4] sm:$0xff]
  %v113 = vld [vmem:[%s1 + $0x1fc] sm:$0xff]
  %v114 = vld [vmem:[%s1 + $0x204] sm:$0xf]
  %v115 = vld [vmem:[%s1 + $0x208] sm:$0xff]
  %v116 = vld [vmem:[%s1 + $0x210] sm:$0xff]
  %v117 = vld [vmem:[%s1 + $0x218] sm:$0xf]
  %v118 = vld [vmem:[%s1 + $0x21c] sm:$0xff]
  %v119 = vld [vmem:[%s1 + $0x224] sm:$0xff]
  %v120 = vld [vmem:[%s1 + $0x22c] sm:$0xf]
  %v121 = vld [vmem:[%s1 + $0x230] sm:$0xff]
  %v122 = vld [vmem:[%s1 + $0x238] sm:$0xff]
  %v123 = vld [vmem:[%s1 + $0x240] sm:$0xf]
  %v124 = vld [vmem:[%s1 + $0x244] sm:$0xff]
  %v125 = vld [vmem:[%s1 + $0x24c] sm:$0xff]
  %v126 = vld [vmem:[%s1 + $0x254] sm:$0xf]
  %v127 = vld [vmem:[%s1 + $0x258] sm:$0xff]
  %v128 = vld [vmem:[%s1 + $0x260] sm:$0xff]
  %v129 = vld [vmem:[%s1 + $0x268] sm:$0xf]
  %v130 = vld [vmem:[%s1 + $0x26c] sm:$0xff]
  %v131 = vld [vmem:[%s1 + $0x274] sm:$0xff]
  %v132 = vld [vmem:[%s1 + $0x27c] sm:$0xf]
  %v133 = vld [vmem:[%s1 + $0x280] sm:$0xff]
  %v134 = vld [vmem:[%s1 + $0x288] sm:$0xff]
  %v135 = vld [vmem:[%s1 + $0x290] sm:$0xf]
  %v136 = vld [vmem:[%s1 + $0x294] sm:$0xff]
  %v137 = vld [vmem:[%s1 + $0x29c] sm:$0xff]
  %v138 = vld [vmem:[%s1 + $0x2a4] sm:$0xf]
  %v139 = vld [vmem:[%s1 + $0x2a8] sm:$0xff]
  %v140 = vld [vmem:[%s1 + $0x2b0] sm:$0xff]
  %v141 = vld [vmem:[%s1 + $0x2b8] sm:$0xf]
  %v142 = vld [vmem:[%s1 + $0x2bc] sm:$0xff]
  %v143 = vld [vmem:[%s1 + $0x2c4] sm:$0xff]
  %v144 = vld [vmem:[%s1 + $0x2cc] sm:$0xf]
  %v145 = vld [vmem:[%s1 + $0x2d0] sm:$0xff]
  %v146 = vld [vmem:[%s1 + $0x2d8] sm:$0xff]
  %v147 = vld [vmem:[%s1 + $0x2e0] sm:$0xf]
  %v148 = vld [vmem:[%s1 + $0x2e4] sm:$0xff]
  %v149 = vld [vmem:[%s1 + $0x2ec] sm:$0xff]
  %v150 = vld [vmem:[%s1 + $0x2f4] sm:$0xf]
  %v151 = vld [vmem:[%s1 + $0x2f8] sm:$0xff]
  %v152 = vld [vmem:[%s1 + $0x300] sm:$0xff]
  %v153 = vld [vmem:[%s1 + $0x308] sm:$0xf]
  %v154 = vld [vmem:[%s1 + $0x30c] sm:$0xff]
  %v155 = vld [vmem:[%s1 + $0x314] sm:$0xff]
  %v156 = vld [vmem:[%s1 + $0x31c] sm:$0xf]
  %v157 = vld [vmem:[%s1 + $0x320] sm:$0xff]
  %v158 = vld [vmem:[%s1 + $0x328] sm:$0xff]
  %v159 = vld [vmem:[%s1 + $0x330] sm:$0xf]
  %v160 = vld [vmem:[%s1 + $0x334] sm:$0xff]
  %v161 = vld [vmem:[%s1 + $0x33c] sm:$0xff]
  %v162 = vld [vmem:[%s1 + $0x344] sm:$0xf]
  %v163 = vld [vmem:[%s1 + $0x348] sm:$0xff]
  %v164 = vld [vmem:[%s1 + $0x350] sm:$0xff]
  %v165 = vld [vmem:[%s1 + $0x358] sm:$0xf]
  %v166 = vld [vmem:[%s1 + $0x35c] sm:$0xff]
  %v167 = vld [vmem:[%s1 + $0x364] sm:$0xff]
  %v168 = vld [vmem:[%s1 + $0x36c] sm:$0xf]
  %v169 = vld [vmem:[%s1 + $0x370] sm:$0xff]
  %v170 = vld [vmem:[%s1 + $0x378] sm:$0xff]
  %v171 = vld [vmem:[%s1 + $0x380] sm:$0xf]
  %v172 = vld [vmem:[%s1 + $0x384] sm:$0xff]
  %v173 = vld [vmem:[%s1 + $0x38c] sm:$0xff]
  %v174 = vld [vmem:[%s1 + $0x394] sm:$0xf]
  %v175 = vld [vmem:[%s1 + $0x398] sm:$0xff]
  %v176 = vld [vmem:[%s1 + $0x3a0] sm:$0xff]
  %v177 = vld [vmem:[%s1 + $0x3a8] sm:$0xf]
  %v178 = vld [vmem:[%s1 + $0x3ac] sm:$0xff]
  %v179 = vld [vmem:[%s1 + $0x3b4] sm:$0xff]
  %v180 = vld [vmem:[%s1 + $0x3bc] sm:$0xf]
  %v181 = vld [vmem:[%s1 + $0x3c0] sm:$0xff]
  %v182 = vld [vmem:[%s1 + $0x3c8] sm:$0xff]
  %v183 = vld [vmem:[%s1 + $0x3d0] sm:$0xf]
  %v184 = vld [vmem:[%s1 + $0x3d4] sm:$0xff]
  %v185 = vld [vmem:[%s1 + $0x3dc] sm:$0xff]
  %v186 = vld [vmem:[%s1 + $0x3e4] sm:$0xf]
  %v187 = vld [vmem:[%s1 + $0x3e8] sm:$0xff]
  %v188 = vld [vmem:[%s1 + $0x3f0] sm:$0xff]
  %v189 = vld [vmem:[%s1 + $0x3f8] sm:$0xf]
  %v190 = vld [vmem:[%s1 + $0x3fc] sm:$0xff]
  %v191 = vld [vmem:[%s1 + $0x404] sm:$0xff]
  %v192 = vld [vmem:[%s1 + $0x40c] sm:$0xf]
  %v193 = vld [vmem:[%s1 + $0x410] sm:$0xff]
  %v194 = vld [vmem:[%s1 + $0x418] sm:$0xff]
  %v195 = vld [vmem:[%s1 + $0x420] sm:$0xf]
  %v196 = vld [vmem:[%s1 + $0x424] sm:$0xff]
  %v197 = vld [vmem:[%s1 + $0x42c] sm:$0xff]
  %v198 = vld [vmem:[%s1 + $0x434] sm:$0xf]
  %v199 = vld [vmem:[%s1 + $0x438] sm:$0xff]
  %v200 = vld [vmem:[%s1 + $0x440] sm:$0xff]
  %v201 = vld [vmem:[%s1 + $0x448] sm:$0xf]
  %v202 = vld [vmem:[%s1 + $0x44c] sm:$0xff]
  %v203 = vld [vmem:[%s1 + $0x454] sm:$0xff]
  %v204 = vld [vmem:[%s1 + $0x45c] sm:$0xf]
  %v205 = vld [vmem:[%s1 + $0x460] sm:$0xff]
  %v206 = vld [vmem:[%s1 + $0x468] sm:$0xff]
  %v207 = vld [vmem:[%s1 + $0x470] sm:$0xf]
  %v208 = vld [vmem:[%s1 + $0x474] sm:$0xff]
  %v209 = vld [vmem:[%s1 + $0x47c] sm:$0xff]
  %v210 = vld [vmem:[%s1 + $0x484] sm:$0xf]
  %v211 = vld [vmem:[%s1 + $0x488] sm:$0xff]
  %v212 = vld [vmem:[%s1 + $0x490] sm:$0xff]
  %v213 = vld [vmem:[%s1 + $0x498] sm:$0xf]
  %v214 = vld [vmem:[%s1 + $0x49c] sm:$0xff]
  %v215 = vld [vmem:[%s1 + $0x4a4] sm:$0xff]
  %v216 = vld [vmem:[%s1 + $0x4ac] sm:$0xf]
  %v217 = vld [vmem:[%s1 + $0x4b0] sm:$0xff]
  %v218 = vld [vmem:[%s1 + $0x4b8] sm:$0xff]
  %v219 = vld [vmem:[%s1 + $0x4c0] sm:$0xf]
  %v220 = vld [vmem:[%s1 + $0x4c4] sm:$0xff]
  %v221 = vld [vmem:[%s1 + $0x4cc] sm:$0xff]
  %v222 = vld [vmem:[%s1 + $0x4d4] sm:$0xf]
  %v223 = vld [vmem:[%s1 + $0x4d8] sm:$0xff]
  %v224 = vld [vmem:[%s1 + $0x4e0] sm:$0xff]
  %v225 = vld [vmem:[%s1 + $0x4e8] sm:$0xf]
  %v226 = vld [vmem:[%s1 + $0x4ec] sm:$0xff]
  %v227 = vld [vmem:[%s1 + $0x4f4] sm:$0xff]
  %v228 = vld [vmem:[%s1 + $0x4fc] sm:$0xf]
  %v229 = vld [vmem:[%s1 + $0x500] sm:$0xff]
  %v230 = vld [vmem:[%s1 + $0x508] sm:$0xff]
  %v231 = vld [vmem:[%s1 + $0x510] sm:$0xf]
  %v232 = vld [vmem:[%s1 + $0x514] sm:$0xff]
  %v233 = vld [vmem:[%s1 + $0x51c] sm:$0xff]
  %v234 = vld [vmem:[%s1 + $0x524] sm:$0xf]
  %v235 = vld [vmem:[%s1 + $0x528] sm:$0xff]
  %v236 = vld [vmem:[%s1 + $0x530] sm:$0xff]
  %v237 = vld [vmem:[%s1 + $0x538] sm:$0xf]
  %v238 = vld [vmem:[%s1 + $0x53c] sm:$0xff]
  %v239 = vld [vmem:[%s1 + $0x544] sm:$0xff]
  %v240 = vld [vmem:[%s1 + $0x54c] sm:$0xf]
  %v241 = vld [vmem:[%s1 + $0x550] sm:$0xff]
  %v242 = vld [vmem:[%s1 + $0x558] sm:$0xff]
  %v243 = vld [vmem:[%s1 + $0x560] sm:$0xf]
  %v244 = vld [vmem:[%s1 + $0x564] sm:$0xff]
  %v245 = vld [vmem:[%s1 + $0x56c] sm:$0xff]
  %v246 = vld [vmem:[%s1 + $0x574] sm:$0xf]
  %v247 = vld [vmem:[%s1 + $0x578] sm:$0xff]
  %v248 = vld [vmem:[%s1 + $0x580] sm:$0xff]
  %v249 = vld [vmem:[%s1 + $0x588] sm:$0xf]
  %v250 = vld [vmem:[%s1 + $0x58c] sm:$0xff]
  %v251 = vld [vmem:[%s1 + $0x594] sm:$0xff]
  %v252 = vld [vmem:[%s1 + $0x59c] sm:$0xf]
  %v253 = vld [vmem:[%s1 + $0x5a0] sm:$0xff]
  %v254 = vld [vmem:[%s1 + $0x5a8] sm:$0xff]
  %v255 = vld [vmem:[%s1 + $0x5b0] sm:$0xf]
  %v256 = vld [vmem:[%s1 + $0x5b4] sm:$0xff]
  %v257 = vld [vmem:[%s1 + $0x5bc] sm:$0xff]
  %v258 = vld [vmem:[%s1 + $0x5c4] sm:$0xf]
  %v259 = vld [vmem:[%s1 + $0x5c8] sm:$0xff]
  %v260 = vld [vmem:[%s1 + $0x5d0] sm:$0xff]
  %v261 = vld [vmem:[%s1 + $0x5d8] sm:$0xf]
  %v262 = vld [vmem:[%s1 + $0x5dc] sm:$0xff]
  %v263 = vld [vmem:[%s1 + $0x5e4] sm:$0xff]
  %v264 = vld [vmem:[%s1 + $0x5ec] sm:$0xf]
  %v265 = vld [vmem:[%s1 + $0x5f0] sm:$0xff]
  %v266 = vld [vmem:[%s1 + $0x5f8] sm:$0xff]
  %v267 = vld [vmem:[%s1 + $0x600] sm:$0xf]
  %v268 = vld [vmem:[%s1 + $0x604] sm:$0xff]
  %v269 = vld [vmem:[%s1 + $0x60c] sm:$0xff]
  %v270 = vld [vmem:[%s1 + $0x614] sm:$0xf]
  %v271 = vld [vmem:[%s1 + $0x618] sm:$0xff]
  %v272 = vld [vmem:[%s1 + $0x620] sm:$0xff]
  %v273 = vld [vmem:[%s1 + $0x628] sm:$0xf]
  %v274 = vld [vmem:[%s1 + $0x62c] sm:$0xff]
  %v275 = vld [vmem:[%s1 + $0x634] sm:$0xff]
  %v276 = vld [vmem:[%s1 + $0x63c] sm:$0xf]
  %v277 = vld [vmem:[%s1 + $0x640] sm:$0xff]
  %v278 = vld [vmem:[%s1 + $0x648] sm:$0xff]
  %v279 = vld [vmem:[%s1 + $0x650] sm:$0xf]
  %v280 = vld [vmem:[%s1 + $0x654] sm:$0xff]
  %v281 = vld [vmem:[%s1 + $0x65c] sm:$0xff]
  %v282 = vld [vmem:[%s1 + $0x664] sm:$0xf]
  %v283 = vld [vmem:[%s1 + $0x668] sm:$0xff]
  %v284 = vld [vmem:[%s1 + $0x670] sm:$0xff]
  %v285 = vld [vmem:[%s1 + $0x678] sm:$0xf]
  %v286 = vld [vmem:[%s1 + $0x67c] sm:$0xff]
  %v287 = vld [vmem:[%s1 + $0x684] sm:$0xff]
  %v288 = vld [vmem:[%s1 + $0x68c] sm:$0xf]
  %v289 = vld [vmem:[%s1 + $0x690] sm:$0xff]
  %v290 = vld [vmem:[%s1 + $0x698] sm:$0xff]
  %v291 = vld [vmem:[%s1 + $0x6a0] sm:$0xf]
  %v292 = vld [vmem:[%s1 + $0x6a4] sm:$0xff]
  %v293 = vld [vmem:[%s1 + $0x6ac] sm:$0xff]
  %v294 = vld [vmem:[%s1 + $0x6b4] sm:$0xf]
  %v295 = vld [vmem:[%s1 + $0x6b8] sm:$0xff]
  %v296 = vld [vmem:[%s1 + $0x6c0] sm:$0xff]
  %v297 = vld [vmem:[%s1 + $0x6c8] sm:$0xf]
  %v298 = vld [vmem:[%s1 + $0x6cc] sm:$0xff]
  %v299 = vld [vmem:[%s1 + $0x6d4] sm:$0xff]
  %v300 = vld [vmem:[%s1 + $0x6dc] sm:$0xf]
  %v301 = vld [vmem:[%s1 + $0x6e0] sm:$0xff]
  %v302 = vld [vmem:[%s1 + $0x6e8] sm:$0xff]
  %v303 = vld [vmem:[%s1 + $0x6f0] sm:$0xf]
  %v304 = vld [vmem:[%s1 + $0x6f4] sm:$0xff]
  %v305 = vld [vmem:[%s1 + $0x6fc] sm:$0xff]
  %v306 = vld [vmem:[%s1 + $0x704] sm:$0xf]
  %v307 = vld [vmem:[%s1 + $0x708] sm:$0xff]
  %v308 = vld [vmem:[%s1 + $0x710] sm:$0xff]
  %v309 = vld [vmem:[%s1 + $0x718] sm:$0xf]
  %v310 = vld [vmem:[%s1 + $0x71c] sm:$0xff]
  %v311 = vld [vmem:[%s1 + $0x724] sm:$0xff]
  %v312 = vld [vmem:[%s1 + $0x72c] sm:$0xf]
  %v313 = vld [vmem:[%s1 + $0x730] sm:$0xff]
  %v314 = vld [vmem:[%s1 + $0x738] sm:$0xff]
  %v315 = vld [vmem:[%s1 + $0x740] sm:$0xf]
  %v316 = vld [vmem:[%s1 + $0x744] sm:$0xff]
  %v317 = vld [vmem:[%s1 + $0x74c] sm:$0xff]
  %v318 = vld [vmem:[%s1 + $0x754] sm:$0xf]
  %v319 = vld [vmem:[%s1 + $0x758] sm:$0xff]
  %v320 = vld [vmem:[%s1 + $0x760] sm:$0xff]
  %v321 = vld [vmem:[%s1 + $0x768] sm:$0xf]
  %v322 = vld [vmem:[%s1 + $0x76c] sm:$0xff]
  %v323 = vld [vmem:[%s1 + $0x774] sm:$0xff]
  %v324 = vld [vmem:[%s1 + $0x77c] sm:$0xf]
  %v325 = vld [vmem:[%s1 + $0x780] sm:$0xff]
  %v326 = vld [vmem:[%s1 + $0x788] sm:$0xff]
  %v327 = vld [vmem:[%s1 + $0x790] sm:$0xf]
  %v328 = vld [vmem:[%s1 + $0x794] sm:$0xff]
  %v329 = vld [vmem:[%s1 + $0x79c] sm:$0xff]
  %v330 = vld [vmem:[%s1 + $0x7a4] sm:$0xf]
  %v331 = vld [vmem:[%s1 + $0x7a8] sm:$0xff]
  %v332 = vld [vmem:[%s1 + $0x7b0] sm:$0xff]
  %v333 = vld [vmem:[%s1 + $0x7b8] sm:$0xf]
  %v334 = vld [vmem:[%s1 + $0x7bc] sm:$0xff]
  %v335 = vld [vmem:[%s1 + $0x7c4] sm:$0xff]
  %v336 = vld [vmem:[%s1 + $0x7cc] sm:$0xf]
  %v337 = vld [vmem:[%s1 + $0x7d0] sm:$0xff]
  %v338 = vld [vmem:[%s1 + $0x7d8] sm:$0xff]
  %v339 = vld [vmem:[%s1 + $0x7e0] sm:$0xf]
  %v340 = vld [vmem:[%s1 + $0x7e4] sm:$0xff]
  %v341 = vld [vmem:[%s1 + $0x7ec] sm:$0xff]
  %v342 = vld [vmem:[%s1 + $0x7f4] sm:$0xf]
  %v343 = vld [vmem:[%s1 + $0x7f8] sm:$0xff]
  %v344 = vld [vmem:[%s1 + $0x800] sm:$0xff]
  %v345 = vld [vmem:[%s1 + $0x808] sm:$0xf]
  %v346 = vld [vmem:[%s1 + $0x80c] sm:$0xff]
  %v347 = vld [vmem:[%s1 + $0x814] sm:$0xff]
  %v348 = vld [vmem:[%s1 + $0x81c] sm:$0xf]
  %v349 = vld [vmem:[%s1 + $0x820] sm:$0xff]
  %v350 = vld [vmem:[%s1 + $0x828] sm:$0xff]
  %v351 = vld [vmem:[%s1 + $0x830] sm:$0xf]
  %v352 = vld [vmem:[%s1 + $0x834] sm:$0xff]
  %v353 = vld [vmem:[%s1 + $0x83c] sm:$0xff]
  %v354 = vld [vmem:[%s1 + $0x844] sm:$0xf]
  %v355 = vld [vmem:[%s1 + $0x848] sm:$0xff]
  %v356 = vld [vmem:[%s1 + $0x850] sm:$0xff]
  %v357 = vld [vmem:[%s1 + $0x858] sm:$0xf]
  %v358 = vld [vmem:[%s1 + $0x85c] sm:$0xff]
  %v359 = vld [vmem:[%s1 + $0x864] sm:$0xff]
  %v360 = vld [vmem:[%s1 + $0x86c] sm:$0xf]
  %v361 = vld [vmem:[%s1 + $0x870] sm:$0xff]
  %v362 = vld [vmem:[%s1 + $0x878] sm:$0xff]
  %v363 = vld [vmem:[%s1 + $0x880] sm:$0xf]
  %v364 = vld [vmem:[%s1 + $0x884] sm:$0xff]
  %v365 = vld [vmem:[%s1 + $0x88c] sm:$0xff]
  %v366 = vld [vmem:[%s1 + $0x894] sm:$0xf]
  %v367 = vld [vmem:[%s1 + $0x898] sm:$0xff]
  %v368 = vld [vmem:[%s1 + $0x8a0] sm:$0xff]
  %v369 = vld [vmem:[%s1 + $0x8a8] sm:$0xf]
  %v370 = vld [vmem:[%s1 + $0x8ac] sm:$0xff]
  %v371 = vld [vmem:[%s1 + $0x8b4] sm:$0xff]
  %v372 = vld [vmem:[%s1 + $0x8bc] sm:$0xf]
  %v377 = vunpack.c.l.b16 %v33
  %v378 = vunpack.c.h.b16 %v33
  %v379 = vunpack.c.l.b16 %v34
  %v380 = vunpack.c.h.b16 %v34
  %v381 = vunpack.c.l.b16 %v35
  %v382 = vunpack.c.h.b16 %v35
  %v383 = vunpack.c.l.b16 %v36
  %v384 = vpack.c.b16 %v377, %v377
  %v385 = vpack.c.b16 %v378, %v378
  %v386 = vpack.c.b16 %v379, %v379
  %v387 = vpack.c.b16 %v380, %v380
  %v388 = vpack.c.b16 %v381, %v381
  %v389 = vpack.c.b16 %v382, %v382
  %v390 = vpack.c.b16 %v383, %v383
  %v734 = vunpack.c.l.b16 %v37
  %v735 = vunpack.c.h.b16 %v37
  %v736 = vunpack.c.l.b16 %v38
  %v737 = vunpack.c.h.b16 %v38
  %v738 = vunpack.c.l.b16 %v39
  %v739 = vunpack.c.l.b16 %v40
  %v740 = vunpack.c.h.b16 %v40
  %v741 = vunpack.c.l.b16 %v41
  %v742 = vunpack.c.h.b16 %v41
  %v743 = vunpack.c.l.b16 %v42
  %v744 = vunpack.c.l.b16 %v43
  %v745 = vunpack.c.h.b16 %v43
  %v746 = vunpack.c.l.b16 %v44
  %v747 = vunpack.c.h.b16 %v44
  %v748 = vunpack.c.l.b16 %v45
  %v749 = vunpack.c.l.b16 %v46
  %v750 = vunpack.c.h.b16 %v46
  %v751 = vunpack.c.l.b16 %v47
  %v752 = vunpack.c.h.b16 %v47
  %v753 = vunpack.c.l.b16 %v48
  %v754 = vunpack.c.l.b16 %v49
  %v755 = vunpack.c.h.b16 %v49
  %v756 = vunpack.c.l.b16 %v50
  %v757 = vunpack.c.h.b16 %v50
  %v758 = vunpack.c.l.b16 %v51
  %v759 = vunpack.c.l.b16 %v52
  %v760 = vunpack.c.h.b16 %v52
  %v761 = vunpack.c.l.b16 %v53
  %v762 = vunpack.c.h.b16 %v53
  %v763 = vunpack.c.l.b16 %v54
  %v764 = vunpack.c.l.b16 %v55
  %v765 = vunpack.c.h.b16 %v55
  %v766 = vunpack.c.l.b16 %v56
  %v767 = vunpack.c.h.b16 %v56
  %v768 = vunpack.c.l.b16 %v57
  %v769 = vunpack.c.l.b16 %v58
  %v770 = vunpack.c.h.b16 %v58
  %v771 = vunpack.c.l.b16 %v59
  %v772 = vunpack.c.h.b16 %v59
  %v773 = vunpack.c.l.b16 %v60
  %v774 = vunpack.c.l.b16 %v61
  %v775 = vunpack.c.h.b16 %v61
  %v776 = vunpack.c.l.b16 %v62
  %v777 = vunpack.c.h.b16 %v62
  %v778 = vunpack.c.l.b16 %v63
  %v779 = vunpack.c.l.b16 %v64
  %v780 = vunpack.c.h.b16 %v64
  %v781 = vunpack.c.l.b16 %v65
  %v782 = vunpack.c.h.b16 %v65
  %v783 = vunpack.c.l.b16 %v66
  %v784 = vunpack.c.l.b16 %v67
  %v785 = vunpack.c.h.b16 %v67
  %v786 = vunpack.c.l.b16 %v68
  %v787 = vunpack.c.h.b16 %v68
  %v788 = vunpack.c.l.b16 %v69
  %v789 = vunpack.c.l.b16 %v70
  %v790 = vunpack.c.h.b16 %v70
  %v791 = vunpack.c.l.b16 %v71
  %v792 = vunpack.c.h.b16 %v71
  %v793 = vunpack.c.l.b16 %v72
  %v794 = vunpack.c.l.b16 %v73
  %v795 = vunpack.c.h.b16 %v73
  %v796 = vunpack.c.l.b16 %v74
  %v797 = vunpack.c.h.b16 %v74
  %v798 = vunpack.c.l.b16 %v75
  %v799 = vunpack.c.l.b16 %v76
  %v800 = vunpack.c.h.b16 %v76
  %v801 = vunpack.c.l.b16 %v77
  %v802 = vunpack.c.h.b16 %v77
  %v803 = vunpack.c.l.b16 %v78
  %v804 = vunpack.c.l.b16 %v79
  %v805 = vunpack.c.h.b16 %v79
  %v806 = vunpack.c.l.b16 %v80
  %v807 = vunpack.c.h.b16 %v80
  %v808 = vunpack.c.l.b16 %v81
  %v809 = vunpack.c.l.b16 %v82
  %v810 = vunpack.c.h.b16 %v82
  %v811 = vunpack.c.l.b16 %v83
  %v812 = vunpack.c.h.b16 %v83
  %v813 = vunpack.c.l.b16 %v84
  %v814 = vunpack.c.l.b16 %v85
  %v815 = vunpack.c.h.b16 %v85
  %v816 = vunpack.c.l.b16 %v86
  %v817 = vunpack.c.h.b16 %v86
  %v818 = vunpack.c.l.b16 %v87
  %v819 = vunpack.c.l.b16 %v88
  %v820 = vunpack.c.h.b16 %v88
  %v821 = vunpack.c.l.b16 %v89
  %v822 = vunpack.c.h.b16 %v89
  %v823 = vunpack.c.l.b16 %v90
  %v824 = vunpack.c.l.b16 %v91
  %v825 = vunpack.c.h.b16 %v91
  %v826 = vunpack.c.l.b16 %v92
  %v827 = vunpack.c.h.b16 %v92
  %v828 = vunpack.c.l.b16 %v93
  %v829 = vunpack.c.l.b16 %v94
  %v830 = vunpack.c.h.b16 %v94
  %v831 = vunpack.c.l.b16 %v95
  %v832 = vunpack.c.h.b16 %v95
  %v833 = vunpack.c.l.b16 %v96
  %v834 = vunpack.c.l.b16 %v97
  %v835 = vunpack.c.h.b16 %v97
  %v836 = vunpack.c.l.b16 %v98
  %v837 = vunpack.c.h.b16 %v98
  %v838 = vunpack.c.l.b16 %v99
  %v839 = vunpack.c.l.b16 %v100
  %v840 = vunpack.c.h.b16 %v100
  %v841 = vunpack.c.l.b16 %v101
  %v842 = vunpack.c.h.b16 %v101
  %v843 = vunpack.c.l.b16 %v102
  %v844 = vunpack.c.l.b16 %v103
  %v845 = vunpack.c.h.b16 %v103
  %v846 = vunpack.c.l.b16 %v104
  %v847 = vunpack.c.h.b16 %v104
  %v848 = vunpack.c.l.b16 %v105
  %v849 = vunpack.c.l.b16 %v106
  %v850 = vunpack.c.h.b16 %v106
  %v851 = vunpack.c.l.b16 %v107
  %v852 = vunpack.c.h.b16 %v107
  %v853 = vunpack.c.l.b16 %v108
  %v854 = vunpack.c.l.b16 %v109
  %v855 = vunpack.c.h.b16 %v109
  %v856 = vunpack.c.l.b16 %v110
  %v857 = vunpack.c.h.b16 %v110
  %v858 = vunpack.c.l.b16 %v111
  %v859 = vunpack.c.l.b16 %v112
  %v860 = vunpack.c.h.b16 %v112
  %v861 = vunpack.c.l.b16 %v113
  %v862 = vunpack.c.h.b16 %v113
  %v863 = vunpack.c.l.b16 %v114
  %v864 = vunpack.c.l.b16 %v115
  %v865 = vunpack.c.h.b16 %v115
  %v866 = vunpack.c.l.b16 %v116
  %v867 = vunpack.c.h.b16 %v116
  %v868 = vunpack.c.l.b16 %v117
  %v869 = vunpack.c.l.b16 %v118
  %v870 = vunpack.c.h.b16 %v118
  %v871 = vunpack.c.l.b16 %v119
  %v872 = vunpack.c.h.b16 %v119
  %v873 = vunpack.c.l.b16 %v120
  %v874 = vunpack.c.l.b16 %v121
  %v875 = vunpack.c.h.b16 %v121
  %v876 = vunpack.c.l.b16 %v122
  %v877 = vunpack.c.h.b16 %v122
  %v878 = vunpack.c.l.b16 %v123
  %v879 = vunpack.c.l.b16 %v124
  %v880 = vunpack.c.h.b16 %v124
  %v881 = vunpack.c.l.b16 %v125
  %v882 = vunpack.c.h.b16 %v125
  %v883 = vunpack.c.l.b16 %v126
  %v884 = vunpack.c.l.b16 %v127
  %v885 = vunpack.c.h.b16 %v127
  %v886 = vunpack.c.l.b16 %v128
  %v887 = vunpack.c.h.b16 %v128
  %v888 = vunpack.c.l.b16 %v129
  %v889 = vunpack.c.l.b16 %v130
  %v890 = vunpack.c.h.b16 %v130
  %v891 = vunpack.c.l.b16 %v131
  %v892 = vunpack.c.h.b16 %v131
  %v893 = vunpack.c.l.b16 %v132
  %v894 = vunpack.c.l.b16 %v133
  %v895 = vunpack.c.h.b16 %v133
  %v896 = vunpack.c.l.b16 %v134
  %v897 = vunpack.c.h.b16 %v134
  %v898 = vunpack.c.l.b16 %v135
  %v899 = vunpack.c.l.b16 %v136
  %v900 = vunpack.c.h.b16 %v136
  %v901 = vunpack.c.l.b16 %v137
  %v902 = vunpack.c.h.b16 %v137
  %v903 = vunpack.c.l.b16 %v138
  %v904 = vunpack.c.l.b16 %v139
  %v905 = vunpack.c.h.b16 %v139
  %v906 = vunpack.c.l.b16 %v140
  %v907 = vunpack.c.h.b16 %v140
  %v908 = vunpack.c.l.b16 %v141
  %v909 = vunpack.c.l.b16 %v142
  %v910 = vunpack.c.h.b16 %v142
  %v911 = vunpack.c.l.b16 %v143
  %v912 = vunpack.c.h.b16 %v143
  %v913 = vunpack.c.l.b16 %v144
  %v914 = vunpack.c.l.b16 %v145
  %v915 = vunpack.c.h.b16 %v145
  %v916 = vunpack.c.l.b16 %v146
  %v917 = vunpack.c.h.b16 %v146
  %v918 = vunpack.c.l.b16 %v147
  %v919 = vunpack.c.l.b16 %v148
  %v920 = vunpack.c.h.b16 %v148
  %v921 = vunpack.c.l.b16 %v149
  %v922 = vunpack.c.h.b16 %v149
  %v923 = vunpack.c.l.b16 %v150
  %v924 = vunpack.c.l.b16 %v151
  %v925 = vunpack.c.h.b16 %v151
  %v926 = vunpack.c.l.b16 %v152
  %v927 = vunpack.c.h.b16 %v152
  %v928 = vunpack.c.l.b16 %v153
  %v929 = vunpack.c.l.b16 %v154
  %v930 = vunpack.c.h.b16 %v154
  %v931 = vunpack.c.l.b16 %v155
  %v932 = vunpack.c.h.b16 %v155
  %v933 = vunpack.c.l.b16 %v156
  %v934 = vunpack.c.l.b16 %v157
  %v935 = vunpack.c.h.b16 %v157
  %v936 = vunpack.c.l.b16 %v158
  %v937 = vunpack.c.h.b16 %v158
  %v938 = vunpack.c.l.b16 %v159
  %v939 = vunpack.c.l.b16 %v160
  %v940 = vunpack.c.h.b16 %v160
  %v941 = vunpack.c.l.b16 %v161
  %v942 = vunpack.c.h.b16 %v161
  %v943 = vunpack.c.l.b16 %v162
  %v944 = vunpack.c.l.b16 %v163
  %v945 = vunpack.c.h.b16 %v163
  %v946 = vunpack.c.l.b16 %v164
  %v947 = vunpack.c.h.b16 %v164
  %v948 = vunpack.c.l.b16 %v165
  %v949 = vunpack.c.l.b16 %v166
  %v950 = vunpack.c.h.b16 %v166
  %v951 = vunpack.c.l.b16 %v167
  %v952 = vunpack.c.h.b16 %v167
  %v953 = vunpack.c.l.b16 %v168
  %v954 = vunpack.c.l.b16 %v169
  %v955 = vunpack.c.h.b16 %v169
  %v956 = vunpack.c.l.b16 %v170
  %v957 = vunpack.c.h.b16 %v170
  %v958 = vunpack.c.l.b16 %v171
  %v959 = vunpack.c.l.b16 %v172
  %v960 = vunpack.c.h.b16 %v172
  %v961 = vunpack.c.l.b16 %v173
  %v962 = vunpack.c.h.b16 %v173
  %v963 = vunpack.c.l.b16 %v174
  %v964 = vunpack.c.l.b16 %v175
  %v965 = vunpack.c.h.b16 %v175
  %v966 = vunpack.c.l.b16 %v176
  %v967 = vunpack.c.h.b16 %v176
  %v968 = vunpack.c.l.b16 %v177
  %v969 = vunpack.c.l.b16 %v178
  %v970 = vunpack.c.h.b16 %v178
  %v971 = vunpack.c.l.b16 %v179
  %v972 = vunpack.c.h.b16 %v179
  %v973 = vunpack.c.l.b16 %v180
  %v974 = vunpack.c.l.b16 %v181
  %v975 = vunpack.c.h.b16 %v181
  %v976 = vunpack.c.l.b16 %v182
  %v977 = vunpack.c.h.b16 %v182
  %v978 = vunpack.c.l.b16 %v183
  %v979 = vunpack.c.l.b16 %v184
  %v980 = vunpack.c.h.b16 %v184
  %v981 = vunpack.c.l.b16 %v185
  %v982 = vunpack.c.h.b16 %v185
  %v983 = vunpack.c.l.b16 %v186
  %v984 = vunpack.c.l.b16 %v187
  %v985 = vunpack.c.h.b16 %v187
  %v986 = vunpack.c.l.b16 %v188
  %v987 = vunpack.c.h.b16 %v188
  %v988 = vunpack.c.l.b16 %v189
  %v989 = vunpack.c.l.b16 %v190
  %v990 = vunpack.c.h.b16 %v190
  %v991 = vunpack.c.l.b16 %v191
  %v992 = vunpack.c.h.b16 %v191
  %v993 = vunpack.c.l.b16 %v192
  %v994 = vunpack.c.l.b16 %v193
  %v995 = vunpack.c.h.b16 %v193
  %v996 = vunpack.c.l.b16 %v194
  %v997 = vunpack.c.h.b16 %v194
  %v998 = vunpack.c.l.b16 %v195
  %v999 = vunpack.c.l.b16 %v196
  %v1000 = vunpack.c.h.b16 %v196
  %v1001 = vunpack.c.l.b16 %v197
  %v1002 = vunpack.c.h.b16 %v197
  %v1003 = vunpack.c.l.b16 %v198
  %v1004 = vunpack.c.l.b16 %v199
  %v1005 = vunpack.c.h.b16 %v199
  %v1006 = vunpack.c.l.b16 %v200
  %v1007 = vunpack.c.h.b16 %v200
  %v1008 = vunpack.c.l.b16 %v201
  %v1009 = vunpack.c.l.b16 %v202
  %v1010 = vunpack.c.h.b16 %v202
  %v1011 = vunpack.c.l.b16 %v203
  %v1012 = vunpack.c.h.b16 %v203
  %v1013 = vunpack.c.l.b16 %v204
  %v1014 = vunpack.c.l.b16 %v205
  %v1015 = vunpack.c.h.b16 %v205
  %v1016 = vunpack.c.l.b16 %v206
  %v1017 = vunpack.c.h.b16 %v206
  %v1018 = vunpack.c.l.b16 %v207
  %v1019 = vunpack.c.l.b16 %v208
  %v1020 = vunpack.c.h.b16 %v208
  %v1021 = vunpack.c.l.b16 %v209
  %v1022 = vunpack.c.h.b16 %v209
  %v1023 = vunpack.c.l.b16 %v210
  %v1024 = vunpack.c.l.b16 %v211
  %v1025 = vunpack.c.h.b16 %v211
  %v1026 = vunpack.c.l.b16 %v212
  %v1027 = vunpack.c.h.b16 %v212
  %v1028 = vunpack.c.l.b16 %v213
  %v1029 = vunpack.c.l.b16 %v214
  %v1030 = vunpack.c.h.b16 %v214
  %v1031 = vunpack.c.l.b16 %v215
  %v1032 = vunpack.c.h.b16 %v215
  %v1033 = vunpack.c.l.b16 %v216
  %v1034 = vunpack.c.l.b16 %v217
  %v1035 = vunpack.c.h.b16 %v217
  %v1036 = vunpack.c.l.b16 %v218
  %v1037 = vunpack.c.h.b16 %v218
  %v1038 = vunpack.c.l.b16 %v219
  %v1039 = vunpack.c.l.b16 %v220
  %v1040 = vunpack.c.h.b16 %v220
  %v1041 = vunpack.c.l.b16 %v221
  %v1042 = vunpack.c.h.b16 %v221
  %v1043 = vunpack.c.l.b16 %v222
  %v1044 = vunpack.c.l.b16 %v223
  %v1045 = vunpack.c.h.b16 %v223
  %v1046 = vunpack.c.l.b16 %v224
  %v1047 = vunpack.c.h.b16 %v224
  %v1048 = vunpack.c.l.b16 %v225
  %v1049 = vunpack.c.l.b16 %v226
  %v1050 = vunpack.c.h.b16 %v226
  %v1051 = vunpack.c.l.b16 %v227
  %v1052 = vunpack.c.h.b16 %v227
  %v1053 = vunpack.c.l.b16 %v228
  %v1054 = vunpack.c.l.b16 %v229
  %v1055 = vunpack.c.h.b16 %v229
  %v1056 = vunpack.c.l.b16 %v230
  %v1057 = vunpack.c.h.b16 %v230
  %v1058 = vunpack.c.l.b16 %v231
  %v1059 = vunpack.c.l.b16 %v232
  %v1060 = vunpack.c.h.b16 %v232
  %v1061 = vunpack.c.l.b16 %v233
  %v1062 = vunpack.c.h.b16 %v233
  %v1063 = vunpack.c.l.b16 %v234
  %v1064 = vunpack.c.l.b16 %v235
  %v1065 = vunpack.c.h.b16 %v235
  %v1066 = vunpack.c.l.b16 %v236
  %v1067 = vunpack.c.h.b16 %v236
  %v1068 = vunpack.c.l.b16 %v237
  %v1069 = vunpack.c.l.b16 %v238
  %v1070 = vunpack.c.h.b16 %v238
  %v1071 = vunpack.c.l.b16 %v239
  %v1072 = vunpack.c.h.b16 %v239
  %v1073 = vunpack.c.l.b16 %v240
  %v1074 = vunpack.c.l.b16 %v241
  %v1075 = vunpack.c.h.b16 %v241
  %v1076 = vunpack.c.l.b16 %v242
  %v1077 = vunpack.c.h.b16 %v242
  %v1078 = vunpack.c.l.b16 %v243
  %v1079 = vunpack.c.l.b16 %v244
  %v1080 = vunpack.c.h.b16 %v244
  %v1081 = vunpack.c.l.b16 %v245
  %v1082 = vunpack.c.h.b16 %v245
  %v1083 = vunpack.c.l.b16 %v246
  %v1084 = vunpack.c.l.b16 %v247
  %v1085 = vunpack.c.h.b16 %v247
  %v1086 = vunpack.c.l.b16 %v248
  %v1087 = vunpack.c.h.b16 %v248
  %v1088 = vunpack.c.l.b16 %v249
  %v1089 = vunpack.c.l.b16 %v250
  %v1090 = vunpack.c.h.b16 %v250
  %v1091 = vunpack.c.l.b16 %v251
  %v1092 = vunpack.c.h.b16 %v251
  %v1093 = vunpack.c.l.b16 %v252
  %v1094 = vunpack.c.l.b16 %v253
  %v1095 = vunpack.c.h.b16 %v253
  %v1096 = vunpack.c.l.b16 %v254
  %v1097 = vunpack.c.h.b16 %v254
  %v1098 = vunpack.c.l.b16 %v255
  %v1099 = vunpack.c.l.b16 %v256
  %v1100 = vunpack.c.h.b16 %v256
  %v1101 = vunpack.c.l.b16 %v257
  %v1102 = vunpack.c.h.b16 %v257
  %v1103 = vunpack.c.l.b16 %v258
  %v1104 = vunpack.c.l.b16 %v259
  %v1105 = vunpack.c.h.b16 %v259
  %v1106 = vunpack.c.l.b16 %v260
  %v1107 = vunpack.c.h.b16 %v260
  %v1108 = vunpack.c.l.b16 %v261
  %v1109 = vunpack.c.l.b16 %v262
  %v1110 = vunpack.c.h.b16 %v262
  %v1111 = vunpack.c.l.b16 %v263
  %v1112 = vunpack.c.h.b16 %v263
  %v1113 = vunpack.c.l.b16 %v264
  %v1114 = vunpack.c.l.b16 %v265
  %v1115 = vunpack.c.h.b16 %v265
  %v1116 = vunpack.c.l.b16 %v266
  %v1117 = vunpack.c.h.b16 %v266
  %v1118 = vunpack.c.l.b16 %v267
  %v1119 = vunpack.c.l.b16 %v268
  %v1120 = vunpack.c.h.b16 %v268
  %v1121 = vunpack.c.l.b16 %v269
  %v1122 = vunpack.c.h.b16 %v269
  %v1123 = vunpack.c.l.b16 %v270
  %v1124 = vunpack.c.l.b16 %v271
  %v1125 = vunpack.c.h.b16 %v271
  %v1126 = vunpack.c.l.b16 %v272
  %v1127 = vunpack.c.h.b16 %v272
  %v1128 = vunpack.c.l.b16 %v273
  %v1129 = vunpack.c.l.b16 %v274
  %v1130 = vunpack.c.h.b16 %v274
  %v1131 = vunpack.c.l.b16 %v275
  %v1132 = vunpack.c.h.b16 %v275
  %v1133 = vunpack.c.l.b16 %v276
  %v1134 = vunpack.c.l.b16 %v277
  %v1135 = vunpack.c.h.b16 %v277
  %v1136 = vunpack.c.l.b16 %v278
  %v1137 = vunpack.c.h.b16 %v278
  %v1138 = vunpack.c.l.b16 %v279
  %v1139 = vunpack.c.l.b16 %v280
  %v1140 = vunpack.c.h.b16 %v280
  %v1141 = vunpack.c.l.b16 %v281
  %v1142 = vunpack.c.h.b16 %v281
  %v1143 = vunpack.c.l.b16 %v282
  %v1144 = vunpack.c.l.b16 %v283
  %v1145 = vunpack.c.h.b16 %v283
  %v1146 = vunpack.c.l.b16 %v284
  %v1147 = vunpack.c.h.b16 %v284
  %v1148 = vunpack.c.l.b16 %v285
  %v1149 = vunpack.c.l.b16 %v286
  %v1150 = vunpack.c.h.b16 %v286
  %v1151 = vunpack.c.l.b16 %v287
  %v1152 = vunpack.c.h.b16 %v287
  %v1153 = vunpack.c.l.b16 %v288
  %v1154 = vunpack.c.l.b16 %v289
  %v1155 = vunpack.c.h.b16 %v289
  %v1156 = vunpack.c.l.b16 %v290
  %v1157 = vunpack.c.h.b16 %v290
  %v1158 = vunpack.c.l.b16 %v291
  %v1159 = vunpack.c.l.b16 %v292
  %v1160 = vunpack.c.h.b16 %v292
  %v1161 = vunpack.c.l.b16 %v293
  %v1162 = vunpack.c.h.b16 %v293
  %v1163 = vunpack.c.l.b16 %v294
  %v1164 = vunpack.c.l.b16 %v295
  %v1165 = vunpack.c.h.b16 %v295
  %v1166 = vunpack.c.l.b16 %v296
  %v1167 = vunpack.c.h.b16 %v296
  %v1168 = vunpack.c.l.b16 %v297
  %v1169 = vunpack.c.l.b16 %v298
  %v1170 = vunpack.c.h.b16 %v298
  %v1171 = vunpack.c.l.b16 %v299
  %v1172 = vunpack.c.h.b16 %v299
  %v1173 = vunpack.c.l.b16 %v300
  %v1174 = vunpack.c.l.b16 %v301
  %v1175 = vunpack.c.h.b16 %v301
  %v1176 = vunpack.c.l.b16 %v302
  %v1177 = vunpack.c.h.b16 %v302
  %v1178 = vunpack.c.l.b16 %v303
  %v1179 = vunpack.c.l.b16 %v304
  %v1180 = vunpack.c.h.b16 %v304
  %v1181 = vunpack.c.l.b16 %v305
  %v1182 = vunpack.c.h.b16 %v305
  %v1183 = vunpack.c.l.b16 %v306
  %v1184 = vunpack.c.l.b16 %v307
  %v1185 = vunpack.c.h.b16 %v307
  %v1186 = vunpack.c.l.b16 %v308
  %v1187 = vunpack.c.h.b16 %v308
  %v1188 = vunpack.c.l.b16 %v309
  %v1189 = vunpack.c.l.b16 %v310
  %v1190 = vunpack.c.h.b16 %v310
  %v1191 = vunpack.c.l.b16 %v311
  %v1192 = vunpack.c.h.b16 %v311
  %v1193 = vunpack.c.l.b16 %v312
  %v1194 = vunpack.c.l.b16 %v313
  %v1195 = vunpack.c.h.b16 %v313
  %v1196 = vunpack.c.l.b16 %v314
  %v1197 = vunpack.c.h.b16 %v314
  %v1198 = vunpack.c.l.b16 %v315
  %v1199 = vunpack.c.l.b16 %v316
  %v1200 = vunpack.c.h.b16 %v316
  %v1201 = vunpack.c.l.b16 %v317
  %v1202 = vunpack.c.h.b16 %v317
  %v1203 = vunpack.c.l.b16 %v318
  %v1204 = vunpack.c.l.b16 %v319
  %v1205 = vunpack.c.h.b16 %v319
  %v1206 = vunpack.c.l.b16 %v320
  %v1207 = vunpack.c.h.b16 %v320
  %v1208 = vunpack.c.l.b16 %v321
  %v1209 = vunpack.c.l.b16 %v322
  %v1210 = vunpack.c.h.b16 %v322
  %v1211 = vunpack.c.l.b16 %v323
  %v1212 = vunpack.c.h.b16 %v323
  %v1213 = vunpack.c.l.b16 %v324
  %v1214 = vunpack.c.l.b16 %v325
  %v1215 = vunpack.c.h.b16 %v325
  %v1216 = vunpack.c.l.b16 %v326
  %v1217 = vunpack.c.h.b16 %v326
  %v1218 = vunpack.c.l.b16 %v327
  %v1219 = vunpack.c.l.b16 %v328
  %v1220 = vunpack.c.h.b16 %v328
  %v1221 = vunpack.c.l.b16 %v329
  %v1222 = vunpack.c.h.b16 %v329
  %v1223 = vunpack.c.l.b16 %v330
  %v1224 = vunpack.c.l.b16 %v331
  %v1225 = vunpack.c.h.b16 %v331
  %v1226 = vunpack.c.l.b16 %v332
  %v1227 = vunpack.c.h.b16 %v332
  %v1228 = vunpack.c.l.b16 %v333
  %v1229 = vunpack.c.l.b16 %v334
  %v1230 = vunpack.c.h.b16 %v334
  %v1231 = vunpack.c.l.b16 %v335
  %v1232 = vunpack.c.h.b16 %v335
  %v1233 = vunpack.c.l.b16 %v336
  %v1234 = vunpack.c.l.b16 %v337
  %v1235 = vunpack.c.h.b16 %v337
  %v1236 = vunpack.c.l.b16 %v338
  %v1237 = vunpack.c.h.b16 %v338
  %v1238 = vunpack.c.l.b16 %v339
  %v1239 = vunpack.c.l.b16 %v340
  %v1240 = vunpack.c.h.b16 %v340
  %v1241 = vunpack.c.l.b16 %v341
  %v1242 = vunpack.c.h.b16 %v341
  %v1243 = vunpack.c.l.b16 %v342
  %v1244 = vunpack.c.l.b16 %v343
  %v1245 = vunpack.c.h.b16 %v343
  %v1246 = vunpack.c.l.b16 %v344
  %v1247 = vunpack.c.h.b16 %v344
  %v1248 = vunpack.c.l.b16 %v345
  %v1249 = vunpack.c.l.b16 %v346
  %v1250 = vunpack.c.h.b16 %v346
  %v1251 = vunpack.c.l.b16 %v347
  %v1252 = vunpack.c.h.b16 %v347
  %v1253 = vunpack.c.l.b16 %v348
  %v1254 = vunpack.c.l.b16 %v349
  %v1255 = vunpack.c.h.b16 %v349
  %v1256 = vunpack.c.l.b16 %v350
  %v1257 = vunpack.c.h.b16 %v350
  %v1258 = vunpack.c.l.b16 %v351
  %v1259 = vunpack.c.l.b16 %v352
  %v1260 = vunpack.c.h.b16 %v352
  %v1261 = vunpack.c.l.b16 %v353
  %v1262 = vunpack.c.h.b16 %v353
  %v1263 = vunpack.c.l.b16 %v354
  %v1264 = vunpack.c.l.b16 %v355
  %v1265 = vunpack.c.h.b16 %v355
  %v1266 = vunpack.c.l.b16 %v356
  %v1267 = vunpack.c.h.b16 %v356
  %v1268 = vunpack.c.l.b16 %v357
  %v1269 = vunpack.c.l.b16 %v358
  %v1270 = vunpack.c.h.b16 %v358
  %v1271 = vunpack.c.l.b16 %v359
  %v1272 = vunpack.c.h.b16 %v359
  %v1273 = vunpack.c.l.b16 %v360
  %v1274 = vunpack.c.l.b16 %v361
  %v1275 = vunpack.c.h.b16 %v361
  %v1276 = vunpack.c.l.b16 %v362
  %v1277 = vunpack.c.h.b16 %v362
  %v1278 = vunpack.c.l.b16 %v363
  %v1279 = vunpack.c.l.b16 %v364
  %v1280 = vunpack.c.h.b16 %v364
  %v1281 = vunpack.c.l.b16 %v365
  %v1282 = vunpack.c.h.b16 %v365
  %v1283 = vunpack.c.l.b16 %v366
  %v1284 = vunpack.c.l.b16 %v367
  %v1285 = vunpack.c.h.b16 %v367
  %v1286 = vunpack.c.l.b16 %v368
  %v1287 = vunpack.c.h.b16 %v368
  %v1288 = vunpack.c.l.b16 %v369
  %v1289 = vunpack.c.l.b16 %v370
  %v1290 = vunpack.c.h.b16 %v370
  %v1291 = vunpack.c.l.b16 %v371
  %v1292 = vunpack.c.h.b16 %v371
  %v1293 = vunpack.c.l.b16 %v372
  %v1294 = vpack.c.b16 %v739, %v734
  %v1295 = vpack.c.b16 %v740, %v735
  %v1296 = vpack.c.b16 %v741, %v736
  %v1297 = vpack.c.b16 %v742, %v737
  %v1298 = vpack.c.b16 %v743, %v738
  %v1299 = vpack.c.b16 %v749, %v744
  %v1300 = vpack.c.b16 %v750, %v745
  %v1301 = vpack.c.b16 %v751, %v746
  %v1302 = vpack.c.b16 %v752, %v747
  %v1303 = vpack.c.b16 %v753, %v748
  %v1304 = vpack.c.b16 %v759, %v754
  %v1305 = vpack.c.b16 %v760, %v755
  %v1306 = vpack.c.b16 %v761, %v756
  %v1307 = vpack.c.b16 %v762, %v757
  %v1308 = vpack.c.b16 %v763, %v758
  %v1309 = vpack.c.b16 %v769, %v764
  %v1310 = vpack.c.b16 %v770, %v765
  %v1311 = vpack.c.b16 %v771, %v766
  %v1312 = vpack.c.b16 %v772, %v767
  %v1313 = vpack.c.b16 %v773, %v768
  %v1314 = vpack.c.b16 %v779, %v774
  %v1315 = vpack.c.b16 %v780, %v775
  %v1316 = vpack.c.b16 %v781, %v776
  %v1317 = vpack.c.b16 %v782, %v777
  %v1318 = vpack.c.b16 %v783, %v778
  %v1319 = vpack.c.b16 %v789, %v784
  %v1320 = vpack.c.b16 %v790, %v785
  %v1321 = vpack.c.b16 %v791, %v786
  %v1322 = vpack.c.b16 %v792, %v787
  %v1323 = vpack.c.b16 %v793, %v788
  %v1324 = vpack.c.b16 %v799, %v794
  %v1325 = vpack.c.b16 %v800, %v795
  %v1326 = vpack.c.b16 %v801, %v796
  %v1327 = vpack.c.b16 %v802, %v797
  %v1328 = vpack.c.b16 %v803, %v798
  %v1329 = vpack.c.b16 %v809, %v804
  %v1330 = vpack.c.b16 %v810, %v805
  %v1331 = vpack.c.b16 %v811, %v806
  %v1332 = vpack.c.b16 %v812, %v807
  %v1333 = vpack.c.b16 %v813, %v808
  %v1334 = vpack.c.b16 %v819, %v814
  %v1335 = vpack.c.b16 %v820, %v815
  %v1336 = vpack.c.b16 %v821, %v816
  %v1337 = vpack.c.b16 %v822, %v817
  %v1338 = vpack.c.b16 %v823, %v818
  %v1339 = vpack.c.b16 %v829, %v824
  %v1340 = vpack.c.b16 %v830, %v825
  %v1341 = vpack.c.b16 %v831, %v826
  %v1342 = vpack.c.b16 %v832, %v827
  %v1343 = vpack.c.b16 %v833, %v828
  %v1344 = vpack.c.b16 %v839, %v834
  %v1345 = vpack.c.b16 %v840, %v835
  %v1346 = vpack.c.b16 %v841, %v836
  %v1347 = vpack.c.b16 %v842, %v837
  %v1348 = vpack.c.b16 %v843, %v838
  %v1349 = vpack.c.b16 %v849, %v844
  %v1350 = vpack.c.b16 %v850, %v845
  %v1351 = vpack.c.b16 %v851, %v846
  %v1352 = vpack.c.b16 %v852, %v847
  %v1353 = vpack.c.b16 %v853, %v848
  %v1354 = vpack.c.b16 %v859, %v854
  %v1355 = vpack.c.b16 %v860, %v855
  %v1356 = vpack.c.b16 %v861, %v856
  %v1357 = vpack.c.b16 %v862, %v857
  %v1358 = vpack.c.b16 %v863, %v858
  %v1359 = vpack.c.b16 %v869, %v864
  %v1360 = vpack.c.b16 %v870, %v865
  %v1361 = vpack.c.b16 %v871, %v866
  %v1362 = vpack.c.b16 %v872, %v867
  %v1363 = vpack.c.b16 %v873, %v868
  %v1364 = vpack.c.b16 %v879, %v874
  %v1365 = vpack.c.b16 %v880, %v875
  %v1366 = vpack.c.b16 %v881, %v876
  %v1367 = vpack.c.b16 %v882, %v877
  %v1368 = vpack.c.b16 %v883, %v878
  %v1369 = vpack.c.b16 %v889, %v884
  %v1370 = vpack.c.b16 %v890, %v885
  %v1371 = vpack.c.b16 %v891, %v886
  %v1372 = vpack.c.b16 %v892, %v887
  %v1373 = vpack.c.b16 %v893, %v888
  %v1374 = vpack.c.b16 %v899, %v894
  %v1375 = vpack.c.b16 %v900, %v895
  %v1376 = vpack.c.b16 %v901, %v896
  %v1377 = vpack.c.b16 %v902, %v897
  %v1378 = vpack.c.b16 %v903, %v898
  %v1379 = vpack.c.b16 %v909, %v904
  %v1380 = vpack.c.b16 %v910, %v905
  %v1381 = vpack.c.b16 %v911, %v906
  %v1382 = vpack.c.b16 %v912, %v907
  %v1383 = vpack.c.b16 %v913, %v908
  %v1384 = vpack.c.b16 %v919, %v914
  %v1385 = vpack.c.b16 %v920, %v915
  %v1386 = vpack.c.b16 %v921, %v916
  %v1387 = vpack.c.b16 %v922, %v917
  %v1388 = vpack.c.b16 %v923, %v918
  %v1389 = vpack.c.b16 %v929, %v924
  %v1390 = vpack.c.b16 %v930, %v925
  %v1391 = vpack.c.b16 %v931, %v926
  %v1392 = vpack.c.b16 %v932, %v927
  %v1393 = vpack.c.b16 %v933, %v928
  %v1394 = vpack.c.b16 %v939, %v934
  %v1395 = vpack.c.b16 %v940, %v935
  %v1396 = vpack.c.b16 %v941, %v936
  %v1397 = vpack.c.b16 %v942, %v937
  %v1398 = vpack.c.b16 %v943, %v938
  %v1399 = vpack.c.b16 %v949, %v944
  %v1400 = vpack.c.b16 %v950, %v945
  %v1401 = vpack.c.b16 %v951, %v946
  %v1402 = vpack.c.b16 %v952, %v947
  %v1403 = vpack.c.b16 %v953, %v948
  %v1404 = vpack.c.b16 %v959, %v954
  %v1405 = vpack.c.b16 %v960, %v955
  %v1406 = vpack.c.b16 %v961, %v956
  %v1407 = vpack.c.b16 %v962, %v957
  %v1408 = vpack.c.b16 %v963, %v958
  %v1409 = vpack.c.b16 %v969, %v964
  %v1410 = vpack.c.b16 %v970, %v965
  %v1411 = vpack.c.b16 %v971, %v966
  %v1412 = vpack.c.b16 %v972, %v967
  %v1413 = vpack.c.b16 %v973, %v968
  %v1414 = vpack.c.b16 %v979, %v974
  %v1415 = vpack.c.b16 %v980, %v975
  %v1416 = vpack.c.b16 %v981, %v976
  %v1417 = vpack.c.b16 %v982, %v977
  %v1418 = vpack.c.b16 %v983, %v978
  %v1419 = vpack.c.b16 %v989, %v984
  %v1420 = vpack.c.b16 %v990, %v985
  %v1421 = vpack.c.b16 %v991, %v986
  %v1422 = vpack.c.b16 %v992, %v987
  %v1423 = vpack.c.b16 %v993, %v988
  %v1424 = vpack.c.b16 %v999, %v994
  %v1425 = vpack.c.b16 %v1000, %v995
  %v1426 = vpack.c.b16 %v1001, %v996
  %v1427 = vpack.c.b16 %v1002, %v997
  %v1428 = vpack.c.b16 %v1003, %v998
  %v1429 = vpack.c.b16 %v1009, %v1004
  %v1430 = vpack.c.b16 %v1010, %v1005
  %v1431 = vpack.c.b16 %v1011, %v1006
  %v1432 = vpack.c.b16 %v1012, %v1007
  %v1433 = vpack.c.b16 %v1013, %v1008
  %v1434 = vpack.c.b16 %v1019, %v1014
  %v1435 = vpack.c.b16 %v1020, %v1015
  %v1436 = vpack.c.b16 %v1021, %v1016
  %v1437 = vpack.c.b16 %v1022, %v1017
  %v1438 = vpack.c.b16 %v1023, %v1018
  %v1439 = vpack.c.b16 %v1029, %v1024
  %v1440 = vpack.c.b16 %v1030, %v1025
  %v1441 = vpack.c.b16 %v1031, %v1026
  %v1442 = vpack.c.b16 %v1032, %v1027
  %v1443 = vpack.c.b16 %v1033, %v1028
  %v1444 = vpack.c.b16 %v1039, %v1034
  %v1445 = vpack.c.b16 %v1040, %v1035
  %v1446 = vpack.c.b16 %v1041, %v1036
  %v1447 = vpack.c.b16 %v1042, %v1037
  %v1448 = vpack.c.b16 %v1043, %v1038
  %v1449 = vpack.c.b16 %v1049, %v1044
  %v1450 = vpack.c.b16 %v1050, %v1045
  %v1451 = vpack.c.b16 %v1051, %v1046
  %v1452 = vpack.c.b16 %v1052, %v1047
  %v1453 = vpack.c.b16 %v1053, %v1048
  %v1454 = vpack.c.b16 %v1059, %v1054
  %v1455 = vpack.c.b16 %v1060, %v1055
  %v1456 = vpack.c.b16 %v1061, %v1056
  %v1457 = vpack.c.b16 %v1062, %v1057
  %v1458 = vpack.c.b16 %v1063, %v1058
  %v1459 = vpack.c.b16 %v1069, %v1064
  %v1460 = vpack.c.b16 %v1070, %v1065
  %v1461 = vpack.c.b16 %v1071, %v1066
  %v1462 = vpack.c.b16 %v1072, %v1067
  %v1463 = vpack.c.b16 %v1073, %v1068
  %v1464 = vpack.c.b16 %v1079, %v1074
  %v1465 = vpack.c.b16 %v1080, %v1075
  %v1466 = vpack.c.b16 %v1081, %v1076
  %v1467 = vpack.c.b16 %v1082, %v1077
  %v1468 = vpack.c.b16 %v1083, %v1078
  %v1469 = vpack.c.b16 %v1089, %v1084
  %v1470 = vpack.c.b16 %v1090, %v1085
  %v1471 = vpack.c.b16 %v1091, %v1086
  %v1472 = vpack.c.b16 %v1092, %v1087
  %v1473 = vpack.c.b16 %v1093, %v1088
  %v1474 = vpack.c.b16 %v1099, %v1094
  %v1475 = vpack.c.b16 %v1100, %v1095
  %v1476 = vpack.c.b16 %v1101, %v1096
  %v1477 = vpack.c.b16 %v1102, %v1097
  %v1478 = vpack.c.b16 %v1103, %v1098
  %v1479 = vpack.c.b16 %v1109, %v1104
  %v1480 = vpack.c.b16 %v1110, %v1105
  %v1481 = vpack.c.b16 %v1111, %v1106
  %v1482 = vpack.c.b16 %v1112, %v1107
  %v1483 = vpack.c.b16 %v1113, %v1108
  %v1484 = vpack.c.b16 %v1119, %v1114
  %v1485 = vpack.c.b16 %v1120, %v1115
  %v1486 = vpack.c.b16 %v1121, %v1116
  %v1487 = vpack.c.b16 %v1122, %v1117
  %v1488 = vpack.c.b16 %v1123, %v1118
  %v1489 = vpack.c.b16 %v1129, %v1124
  %v1490 = vpack.c.b16 %v1130, %v1125
  %v1491 = vpack.c.b16 %v1131, %v1126
  %v1492 = vpack.c.b16 %v1132, %v1127
  %v1493 = vpack.c.b16 %v1133, %v1128
  %v1494 = vpack.c.b16 %v1139, %v1134
  %v1495 = vpack.c.b16 %v1140, %v1135
  %v1496 = vpack.c.b16 %v1141, %v1136
  %v1497 = vpack.c.b16 %v1142, %v1137
  %v1498 = vpack.c.b16 %v1143, %v1138
  %v1499 = vpack.c.b16 %v1149, %v1144
  %v1500 = vpack.c.b16 %v1150, %v1145
  %v1501 = vpack.c.b16 %v1151, %v1146
  %v1502 = vpack.c.b16 %v1152, %v1147
  %v1503 = vpack.c.b16 %v1153, %v1148
  %v1504 = vpack.c.b16 %v1159, %v1154
  %v1505 = vpack.c.b16 %v1160, %v1155
  %v1506 = vpack.c.b16 %v1161, %v1156
  %v1507 = vpack.c.b16 %v1162, %v1157
  %v1508 = vpack.c.b16 %v1163, %v1158
  %v1509 = vpack.c.b16 %v1169, %v1164
  %v1510 = vpack.c.b16 %v1170, %v1165
  %v1511 = vpack.c.b16 %v1171, %v1166
  %v1512 = vpack.c.b16 %v1172, %v1167
  %v1513 = vpack.c.b16 %v1173, %v1168
  %v1514 = vpack.c.b16 %v1179, %v1174
  %v1515 = vpack.c.b16 %v1180, %v1175
  %v1516 = vpack.c.b16 %v1181, %v1176
  %v1517 = vpack.c.b16 %v1182, %v1177
  %v1518 = vpack.c.b16 %v1183, %v1178
  %v1519 = vpack.c.b16 %v1189, %v1184
  %v1520 = vpack.c.b16 %v1190, %v1185
  %v1521 = vpack.c.b16 %v1191, %v1186
  %v1522 = vpack.c.b16 %v1192, %v1187
  %v1523 = vpack.c.b16 %v1193, %v1188
  %v1524 = vpack.c.b16 %v1199, %v1194
  %v1525 = vpack.c.b16 %v1200, %v1195
  %v1526 = vpack.c.b16 %v1201, %v1196
  %v1527 = vpack.c.b16 %v1202, %v1197
  %v1528 = vpack.c.b16 %v1203, %v1198
  %v1529 = vpack.c.b16 %v1209, %v1204
  %v1530 = vpack.c.b16 %v1210, %v1205
  %v1531 = vpack.c.b16 %v1211, %v1206
  %v1532 = vpack.c.b16 %v1212, %v1207
  %v1533 = vpack.c.b16 %v1213, %v1208
  %v1534 = vpack.c.b16 %v1219, %v1214
  %v1535 = vpack.c.b16 %v1220, %v1215
  %v1536 = vpack.c.b16 %v1221, %v1216
  %v1537 = vpack.c.b16 %v1222, %v1217
  %v1538 = vpack.c.b16 %v1223, %v1218
  %v1539 = vpack.c.b16 %v1229, %v1224
  %v1540 = vpack.c.b16 %v1230, %v1225
  %v1541 = vpack.c.b16 %v1231, %v1226
  %v1542 = vpack.c.b16 %v1232, %v1227
  %v1543 = vpack.c.b16 %v1233, %v1228
  %v1544 = vpack.c.b16 %v1239, %v1234
  %v1545 = vpack.c.b16 %v1240, %v1235
  %v1546 = vpack.c.b16 %v1241, %v1236
  %v1547 = vpack.c.b16 %v1242, %v1237
  %v1548 = vpack.c.b16 %v1243, %v1238
  %v1549 = vpack.c.b16 %v1249, %v1244
  %v1550 = vpack.c.b16 %v1250, %v1245
  %v1551 = vpack.c.b16 %v1251, %v1246
  %v1552 = vpack.c.b16 %v1252, %v1247
  %v1553 = vpack.c.b16 %v1253, %v1248
  %v1554 = vpack.c.b16 %v1259, %v1254
  %v1555 = vpack.c.b16 %v1260, %v1255
  %v1556 = vpack.c.b16 %v1261, %v1256
  %v1557 = vpack.c.b16 %v1262, %v1257
  %v1558 = vpack.c.b16 %v1263, %v1258
  %v1559 = vpack.c.b16 %v1269, %v1264
  %v1560 = vpack.c.b16 %v1270, %v1265
  %v1561 = vpack.c.b16 %v1271, %v1266
  %v1562 = vpack.c.b16 %v1272, %v1267
  %v1563 = vpack.c.b16 %v1273, %v1268
  %v1564 = vpack.c.b16 %v1279, %v1274
  %v1565 = vpack.c.b16 %v1280, %v1275
  %v1566 = vpack.c.b16 %v1281, %v1276
  %v1567 = vpack.c.b16 %v1282, %v1277
  %v1568 = vpack.c.b16 %v1283, %v1278
  %v1569 = vpack.c.b16 %v1289, %v1284
  %v1570 = vpack.c.b16 %v1290, %v1285
  %v1571 = vpack.c.b16 %v1291, %v1286
  %v1572 = vpack.c.b16 %v1292, %v1287
  %v1573 = vpack.c.b16 %v1293, %v1288
  %1854 = vmatprep.subr.bf16.mxu0 %v1295
  %1855 = vmatpush1.bf16.msra.mxu0 %v1294
  %1856 = vmatprep.subr.bf16.mxu0 %v1300
  %1857 = vmatpush1.bf16.msra.mxu0 %v1299
  %1858 = vmatprep.subr.bf16.mxu0 %v1305
  %1859 = vmatpush1.bf16.msra.mxu0 %v1304
  %1860 = vmatprep.subr.bf16.mxu0 %v1310
  %1861 = vmatpush1.bf16.msra.mxu0 %v1309
  %1862 = vmatprep.subr.bf16.mxu0 %v1315
  %1863 = vmatpush1.bf16.msra.mxu0 %v1314
  %1864 = vmatprep.subr.bf16.mxu0 %v1320
  %1865 = vmatpush1.bf16.msra.mxu0 %v1319
  %1866 = vmatprep.subr.bf16.mxu0 %v1325
  %1867 = vmatpush1.bf16.msra.mxu0 %v1324
  %1868 = vmatprep.subr.bf16.mxu0 %v1330
  %1869 = vmatpush1.bf16.msra.mxu0 %v1329
  %1870 = vmatprep.subr.bf16.mxu0 %v1335
  %1871 = vmatpush1.bf16.msra.mxu0 %v1334
  %1872 = vmatprep.subr.bf16.mxu0 %v1340
  %1873 = vmatpush1.bf16.msra.mxu0 %v1339
  %1874 = vmatprep.subr.bf16.mxu0 %v1345
  %1875 = vmatpush1.bf16.msra.mxu0 %v1344
  %1876 = vmatprep.subr.bf16.mxu0 %v1350
  %1877 = vmatpush1.bf16.msra.mxu0 %v1349
  %1878 = vmatprep.subr.bf16.mxu0 %v1355
  %1879 = vmatpush1.bf16.msra.mxu0 %v1354
  %1880 = vmatprep.subr.bf16.mxu0 %v1360
  %1881 = vmatpush1.bf16.msra.mxu0 %v1359
  %1882 = vmatprep.subr.bf16.mxu0 %v1365
  %1883 = vmatpush1.bf16.msra.mxu0 %v1364
  %1884 = vmatprep.subr.bf16.mxu0 %v1370
  %1885 = vmatpush1.bf16.msra.mxu0 %v1369
  %1886 = vmatprep.mubr.bf16.mxu0 %v385
  %1887 = vmatmul.mubr.bf16.gmra.mrb[0].mxu0 %v384
  %v1888 = vpop.f32.mrb[0].mxu0
  %v1889 = vadd.f32 0.0, %v1888
  %v1890 = vpop.f32.mrb[0].mxu0
  %v1891 = vadd.f32 0.0, %v1890
  %v1892 = vpop.f32.mrb[0].mxu0
  %v1893 = vpop.f32.mrb[0].mxu0
  %1894 = vdwg.mxu0
  %1895 = vmatprep.subr.bf16.mxu0 %v1375
  %1896 = vmatpush1.bf16.msra.mxu0 %v1374
  %1897 = vmatprep.subr.bf16.mxu0 %v1380
  %1898 = vmatpush1.bf16.msra.mxu0 %v1379
  %1899 = vmatprep.subr.bf16.mxu0 %v1385
  %1900 = vmatpush1.bf16.msra.mxu0 %v1384
  %1901 = vmatprep.subr.bf16.mxu0 %v1390
  %1902 = vmatpush1.bf16.msra.mxu0 %v1389
  %1903 = vmatprep.subr.bf16.mxu0 %v1395
  %1904 = vmatpush1.bf16.msra.mxu0 %v1394
  %1905 = vmatprep.subr.bf16.mxu0 %v1400
  %1906 = vmatpush1.bf16.msra.mxu0 %v1399
  %1907 = vmatprep.subr.bf16.mxu0 %v1405
  %1908 = vmatpush1.bf16.msra.mxu0 %v1404
  %1909 = vmatprep.subr.bf16.mxu0 %v1410
  %1910 = vmatpush1.bf16.msra.mxu0 %v1409
  %1911 = vmatprep.subr.bf16.mxu0 %v1415
  %1912 = vmatpush1.bf16.msra.mxu0 %v1414
  %1913 = vmatprep.subr.bf16.mxu0 %v1420
  %1914 = vmatpush1.bf16.msra.mxu0 %v1419
  %1915 = vmatprep.subr.bf16.mxu0 %v1425
  %1916 = vmatpush1.bf16.msra.mxu0 %v1424
  %1917 = vmatprep.subr.bf16.mxu0 %v1430
  %1918 = vmatpush1.bf16.msra.mxu0 %v1429
  %1919 = vmatprep.subr.bf16.mxu0 %v1435
  %1920 = vmatpush1.bf16.msra.mxu0 %v1434
  %1921 = vmatprep.subr.bf16.mxu0 %v1440
  %1922 = vmatpush1.bf16.msra.mxu0 %v1439
  %1923 = vmatprep.subr.bf16.mxu0 %v1445
  %1924 = vmatpush1.bf16.msra.mxu0 %v1444
  %1925 = vmatprep.subr.bf16.mxu0 %v1450
  %1926 = vmatpush1.bf16.msra.mxu0 %v1449
  %1927 = vmatprep.mubr.bf16.mxu0 %v387
  %1928 = vmatmul.mubr.bf16.gmra.mrb[0].mxu0 %v386
  %v1929 = vpop.f32.mrb[0].mxu0
  %v1930 = vadd.f32 %v1889, %v1929
  %v1931 = vpop.f32.mrb[0].mxu0
  %v1932 = vadd.f32 %v1891, %v1931
  %v1933 = vpop.f32.mrb[0].mxu0
  %v1934 = vpop.f32.mrb[0].mxu0
  %1935 = vdwg.mxu0
  %1936 = vmatprep.subr.bf16.mxu0 %v1455
  %1937 = vmatpush1.bf16.msra.mxu0 %v1454
  %1938 = vmatprep.subr.bf16.mxu0 %v1460
  %1939 = vmatpush1.bf16.msra.mxu0 %v1459
  %1940 = vmatprep.subr.bf16.mxu0 %v1465
  %1941 = vmatpush1.bf16.msra.mxu0 %v1464
  %1942 = vmatprep.subr.bf16.mxu0 %v1470
  %1943 = vmatpush1.bf16.msra.mxu0 %v1469
  %1944 = vmatprep.subr.bf16.mxu0 %v1475
  %1945 = vmatpush1.bf16.msra.mxu0 %v1474
  %1946 = vmatprep.subr.bf16.mxu0 %v1480
  %1947 = vmatpush1.bf16.msra.mxu0 %v1479
  %1948 = vmatprep.subr.bf16.mxu0 %v1485
  %1949 = vmatpush1.bf16.msra.mxu0 %v1484
  %1950 = vmatprep.subr.bf16.mxu0 %v1490
  %1951 = vmatpush1.bf16.msra.mxu0 %v1489
  %1952 = vmatprep.subr.bf16.mxu0 %v1495
  %1953 = vmatpush1.bf16.msra.mxu0 %v1494
  %1954 = vmatprep.subr.bf16.mxu0 %v1500
  %1955 = vmatpush1.bf16.msra.mxu0 %v1499
  %1956 = vmatprep.subr.bf16.mxu0 %v1505
  %1957 = vmatpush1.bf16.msra.mxu0 %v1504
  %1958 = vmatprep.subr.bf16.mxu0 %v1510
  %1959 = vmatpush1.bf16.msra.mxu0 %v1509
  %1960 = vmatprep.subr.bf16.mxu0 %v1515
  %1961 = vmatpush1.bf16.msra.mxu0 %v1514
  %1962 = vmatprep.subr.bf16.mxu0 %v1520
  %1963 = vmatpush1.bf16.msra.mxu0 %v1519
  %1964 = vmatprep.subr.bf16.mxu0 %v1525
  %1965 = vmatpush1.bf16.msra.mxu0 %v1524
  %1966 = vmatprep.subr.bf16.mxu0 %v1530
  %1967 = vmatpush1.bf16.msra.mxu0 %v1529
  %1968 = vmatprep.mubr.bf16.mxu0 %v389
  %1969 = vmatmul.mubr.bf16.gmra.mrb[0].mxu0 %v388
  %v1970 = vpop.f32.mrb[0].mxu0
  %v1971 = vadd.f32 %v1930, %v1970
  %v1972 = vpop.f32.mrb[0].mxu0
  %v1973 = vadd.f32 %v1932, %v1972
  %v1974 = vpop.f32.mrb[0].mxu0
  %v1975 = vpop.f32.mrb[0].mxu0
  %1976 = vdwg.mxu0
  %1977 = vmatprep.subr.bf16.mxu0 %v1535
  %1978 = vmatpush1.bf16.msra.mxu0 %v1534
  %1979 = vmatprep.subr.bf16.mxu0 %v1540
  %1980 = vmatpush1.bf16.msra.mxu0 %v1539
  %1981 = vmatprep.subr.bf16.mxu0 %v1545
  %1982 = vmatpush1.bf16.msra.mxu0 %v1544
  %1983 = vmatprep.subr.bf16.mxu0 %v1550
  %1984 = vmatpush1.bf16.msra.mxu0 %v1549
  %1985 = vmatprep.subr.bf16.mxu0 %v1555
  %1986 = vmatpush1.bf16.msra.mxu0 %v1554
  %1987 = vmatprep.subr.bf16.mxu0 %v1560
  %1988 = vmatpush1.bf16.msra.mxu0 %v1559
  %1989 = vmatprep.subr.bf16.mxu0 %v1565
  %1990 = vmatpush1.bf16.msra.mxu0 %v1564
  %1991 = vmatprep.subr.bf16.mxu0 %v1570
  %1992 = vmatpush1.bf16.msra.mxu0 %v1569
  %1993 = vmatprep.subr.bf16.mxu0 0
  %1994 = vmatpush1.bf16.msra.mxu0 0
  %1995 = vmatprep.subr.bf16.mxu0 0
  %1996 = vmatpush1.bf16.msra.mxu0 0
  %1997 = vmatprep.subr.bf16.mxu0 0
  %1998 = vmatpush1.bf16.msra.mxu0 0
  %1999 = vmatprep.subr.bf16.mxu0 0
  %2000 = vmatpush1.bf16.msra.mxu0 0
  %2001 = vmatprep.subr.bf16.mxu0 0
  %2002 = vmatpush1.bf16.msra.mxu0 0
  %2003 = vmatprep.subr.bf16.mxu0 0
  %2004 = vmatpush1.bf16.msra.mxu0 0
  %2005 = vmatprep.subr.bf16.mxu0 0
  %2006 = vmatpush1.bf16.msra.mxu0 0
  %2007 = vmatprep.subr.bf16.mxu0 0
  %2008 = vmatpush1.bf16.msra.mxu0 0
  %2009 = vmatprep.mubr.bf16.mxu0 0
  %2010 = vmatmul.mubr.bf16.gmra.mrb[0].mxu0 %v390
  %v2011 = vpop.f32.mrb[0].mxu0
  %v2012 = vadd.f32 %v1971, %v2011
  %v2013 = vpop.f32.mrb[0].mxu0
  %v2014 = vadd.f32 %v1973, %v2013
  %v2015 = vpop.f32.mrb[0].mxu0
  %v2016 = vpop.f32.mrb[0].mxu0
  %2017 = vdwg.mxu0
  %2018 = vmatprep.subr.bf16.mxu0 %v1297
  %2019 = vmatpush1.bf16.msra.mxu0 %v1296
  %2020 = vmatprep.subr.bf16.mxu0 %v1302
  %2021 = vmatpush1.bf16.msra.mxu0 %v1301
  %2022 = vmatprep.subr.bf16.mxu0 %v1307
  %2023 = vmatpush1.bf16.msra.mxu0 %v1306
  %2024 = vmatprep.subr.bf16.mxu0 %v1312
  %2025 = vmatpush1.bf16.msra.mxu0 %v1311
  %2026 = vmatprep.subr.bf16.mxu0 %v1317
  %2027 = vmatpush1.bf16.msra.mxu0 %v1316
  %2028 = vmatprep.subr.bf16.mxu0 %v1322
  %2029 = vmatpush1.bf16.msra.mxu0 %v1321
  %2030 = vmatprep.subr.bf16.mxu0 %v1327
  %2031 = vmatpush1.bf16.msra.mxu0 %v1326
  %2032 = vmatprep.subr.bf16.mxu0 %v1332
  %2033 = vmatpush1.bf16.msra.mxu0 %v1331
  %2034 = vmatprep.subr.bf16.mxu0 %v1337
  %2035 = vmatpush1.bf16.msra.mxu0 %v1336
  %2036 = vmatprep.subr.bf16.mxu0 %v1342
  %2037 = vmatpush1.bf16.msra.mxu0 %v1341
  %2038 = vmatprep.subr.bf16.mxu0 %v1347
  %2039 = vmatpush1.bf16.msra.mxu0 %v1346
  %2040 = vmatprep.subr.bf16.mxu0 %v1352
  %2041 = vmatpush1.bf16.msra.mxu0 %v1351
  %2042 = vmatprep.subr.bf16.mxu0 %v1357
  %2043 = vmatpush1.bf16.msra.mxu0 %v1356
  %2044 = vmatprep.subr.bf16.mxu0 %v1362
  %2045 = vmatpush1.bf16.msra.mxu0 %v1361
  %2046 = vmatprep.subr.bf16.mxu0 %v1367
  %2047 = vmatpush1.bf16.msra.mxu0 %v1366
  %2048 = vmatprep.subr.bf16.mxu0 %v1372
  %2049 = vmatpush1.bf16.msra.mxu0 %v1371
  %2050 = vmatprep.mubr.bf16.mxu0 %v385
  %2051 = vmatmul.mubr.bf16.gmra.mrb[0].mxu0 %v384
  %v2052 = vpop.f32.mrb[0].mxu0
  %v2053 = vadd.f32 0.0, %v2052
  %v2054 = vpop.f32.mrb[0].mxu0
  %v2055 = vadd.f32 0.0, %v2054
  %v2056 = vpop.f32.mrb[0].mxu0
  %v2057 = vpop.f32.mrb[0].mxu0
  %2058 = vdwg.mxu0
  %2059 = vmatprep.subr.bf16.mxu0 %v1377
  %2060 = vmatpush1.bf16.msra.mxu0 %v1376
  %2061 = vmatprep.subr.bf16.mxu0 %v1382
  %2062 = vmatpush1.bf16.msra.mxu0 %v1381
  %2063 = vmatprep.subr.bf16.mxu0 %v1387
  %2064 = vmatpush1.bf16.msra.mxu0 %v1386
  %2065 = vmatprep.subr.bf16.mxu0 %v1392
  %2066 = vmatpush1.bf16.msra.mxu0 %v1391
  %2067 = vmatprep.subr.bf16.mxu0 %v1397
  %2068 = vmatpush1.bf16.msra.mxu0 %v1396
  %2069 = vmatprep.subr.bf16.mxu0 %v1402
  %2070 = vmatpush1.bf16.msra.mxu0 %v1401
  %2071 = vmatprep.subr.bf16.mxu0 %v1407
  %2072 = vmatpush1.bf16.msra.mxu0 %v1406
  %2073 = vmatprep.subr.bf16.mxu0 %v1412
  %2074 = vmatpush1.bf16.msra.mxu0 %v1411
  %2075 = vmatprep.subr.bf16.mxu0 %v1417
  %2076 = vmatpush1.bf16.msra.mxu0 %v1416
  %2077 = vmatprep.subr.bf16.mxu0 %v1422
  %2078 = vmatpush1.bf16.msra.mxu0 %v1421
  %2079 = vmatprep.subr.bf16.mxu0 %v1427
  %2080 = vmatpush1.bf16.msra.mxu0 %v1426
  %2081 = vmatprep.subr.bf16.mxu0 %v1432
  %2082 = vmatpush1.bf16.msra.mxu0 %v1431
  %2083 = vmatprep.subr.bf16.mxu0 %v1437
  %2084 = vmatpush1.bf16.msra.mxu0 %v1436
  %2085 = vmatprep.subr.bf16.mxu0 %v1442
  %2086 = vmatpush1.bf16.msra.mxu0 %v1441
  %2087 = vmatprep.subr.bf16.mxu0 %v1447
  %2088 = vmatpush1.bf16.msra.mxu0 %v1446
  %2089 = vmatprep.subr.bf16.mxu0 %v1452
  %2090 = vmatpush1.bf16.msra.mxu0 %v1451
  %2091 = vmatprep.mubr.bf16.mxu0 %v387
  %2092 = vmatmul.mubr.bf16.gmra.mrb[0].mxu0 %v386
  %v2093 = vpop.f32.mrb[0].mxu0
  %v2094 = vadd.f32 %v2053, %v2093
  %v2095 = vpop.f32.mrb[0].mxu0
  %v2096 = vadd.f32 %v2055, %v2095
  %v2097 = vpop.f32.mrb[0].mxu0
  %v2098 = vpop.f32.mrb[0].mxu0
  %2099 = vdwg.mxu0
  %2100 = vmatprep.subr.bf16.mxu0 %v1457
  %2101 = vmatpush1.bf16.msra.mxu0 %v1456
  %2102 = vmatprep.subr.bf16.mxu0 %v1462
  %2103 = vmatpush1.bf16.msra.mxu0 %v1461
  %2104 = vmatprep.subr.bf16.mxu0 %v1467
  %2105 = vmatpush1.bf16.msra.mxu0 %v1466
  %2106 = vmatprep.subr.bf16.mxu0 %v1472
  %2107 = vmatpush1.bf16.msra.mxu0 %v1471
  %2108 = vmatprep.subr.bf16.mxu0 %v1477
  %2109 = vmatpush1.bf16.msra.mxu0 %v1476
  %2110 = vmatprep.subr.bf16.mxu0 %v1482
  %2111 = vmatpush1.bf16.msra.mxu0 %v1481
  %2112 = vmatprep.subr.bf16.mxu0 %v1487
  %2113 = vmatpush1.bf16.msra.mxu0 %v1486
  %2114 = vmatprep.subr.bf16.mxu0 %v1492
  %2115 = vmatpush1.bf16.msra.mxu0 %v1491
  %2116 = vmatprep.subr.bf16.mxu0 %v1497
  %2117 = vmatpush1.bf16.msra.mxu0 %v1496
  %2118 = vmatprep.subr.bf16.mxu0 %v1502
  %2119 = vmatpush1.bf16.msra.mxu0 %v1501
  %2120 = vmatprep.subr.bf16.mxu0 %v1507
  %2121 = vmatpush1.bf16.msra.mxu0 %v1506
  %2122 = vmatprep.subr.bf16.mxu0 %v1512
  %2123 = vmatpush1.bf16.msra.mxu0 %v1511
  %2124 = vmatprep.subr.bf16.mxu0 %v1517
  %2125 = vmatpush1.bf16.msra.mxu0 %v1516
  %2126 = vmatprep.subr.bf16.mxu0 %v1522
  %2127 = vmatpush1.bf16.msra.mxu0 %v1521
  %2128 = vmatprep.subr.bf16.mxu0 %v1527
  %2129 = vmatpush1.bf16.msra.mxu0 %v1526
  %2130 = vmatprep.subr.bf16.mxu0 %v1532
  %2131 = vmatpush1.bf16.msra.mxu0 %v1531
  %2132 = vmatprep.mubr.bf16.mxu0 %v389
  %2133 = vmatmul.mubr.bf16.gmra.mrb[0].mxu0 %v388
  %v2134 = vpop.f32.mrb[0].mxu0
  %v2135 = vadd.f32 %v2094, %v2134
  %v2136 = vpop.f32.mrb[0].mxu0
  %v2137 = vadd.f32 %v2096, %v2136
  %v2138 = vpop.f32.mrb[0].mxu0
  %v2139 = vpop.f32.mrb[0].mxu0
  %2140 = vdwg.mxu0
  %2141 = vmatprep.subr.bf16.mxu0 %v1537
  %2142 = vmatpush1.bf16.msra.mxu0 %v1536
  %2143 = vmatprep.subr.bf16.mxu0 %v1542
  %2144 = vmatpush1.bf16.msra.mxu0 %v1541
  %2145 = vmatprep.subr.bf16.mxu0 %v1547
  %2146 = vmatpush1.bf16.msra.mxu0 %v1546
  %2147 = vmatprep.subr.bf16.mxu0 %v1552
  %2148 = vmatpush1.bf16.msra.mxu0 %v1551
  %2149 = vmatprep.subr.bf16.mxu0 %v1557
  %2150 = vmatpush1.bf16.msra.mxu0 %v1556
  %2151 = vmatprep.subr.bf16.mxu0 %v1562
  %2152 = vmatpush1.bf16.msra.mxu0 %v1561
  %2153 = vmatprep.subr.bf16.mxu0 %v1567
  %2154 = vmatpush1.bf16.msra.mxu0 %v1566
  %2155 = vmatprep.subr.bf16.mxu0 %v1572
  %2156 = vmatpush1.bf16.msra.mxu0 %v1571
  %2157 = vmatprep.subr.bf16.mxu0 0
  %2158 = vmatpush1.bf16.msra.mxu0 0
  %2159 = vmatprep.subr.bf16.mxu0 0
  %2160 = vmatpush1.bf16.msra.mxu0 0
  %2161 = vmatprep.subr.bf16.mxu0 0
  %2162 = vmatpush1.bf16.msra.mxu0 0
  %2163 = vmatprep.subr.bf16.mxu0 0
  %2164 = vmatpush1.bf16.msra.mxu0 0
  %2165 = vmatprep.subr.bf16.mxu0 0
  %2166 = vmatpush1.bf16.msra.mxu0 0
  %2167 = vmatprep.subr.bf16.mxu0 0
  %2168 = vmatpush1.bf16.msra.mxu0 0
  %2169 = vmatprep.subr.bf16.mxu0 0
  %2170 = vmatpush1.bf16.msra.mxu0 0
  %2171 = vmatprep.subr.bf16.mxu0 0
  %2172 = vmatpush1.bf16.msra.mxu0 0
  %2173 = vmatprep.mubr.bf16.mxu0 0
  %2174 = vmatmul.mubr.bf16.gmra.mrb[0].mxu0 %v390
  %v2175 = vpop.f32.mrb[0].mxu0
  %v2176 = vadd.f32 %v2135, %v2175
  %v2177 = vpop.f32.mrb[0].mxu0
  %v2178 = vadd.f32 %v2137, %v2177
  %v2179 = vpop.f32.mrb[0].mxu0
  %v2180 = vpop.f32.mrb[0].mxu0
  %2181 = vdwg.mxu0
  %2182 = vmatprep.subr.bf16.mxu0 0
  %2183 = vmatpush1.bf16.msra.mxu0 %v1298
  %2184 = vmatprep.subr.bf16.mxu0 0
  %2185 = vmatpush1.bf16.msra.mxu0 %v1303
  %2186 = vmatprep.subr.bf16.mxu0 0
  %2187 = vmatpush1.bf16.msra.mxu0 %v1308
  %2188 = vmatprep.subr.bf16.mxu0 0
  %2189 = vmatpush1.bf16.msra.mxu0 %v1313
  %2190 = vmatprep.subr.bf16.mxu0 0
  %2191 = vmatpush1.bf16.msra.mxu0 %v1318
  %2192 = vmatprep.subr.bf16.mxu0 0
  %2193 = vmatpush1.bf16.msra.mxu0 %v1323
  %2194 = vmatprep.subr.bf16.mxu0 0
  %2195 = vmatpush1.bf16.msra.mxu0 %v1328
  %2196 = vmatprep.subr.bf16.mxu0 0
  %2197 = vmatpush1.bf16.msra.mxu0 %v1333
  %2198 = vmatprep.subr.bf16.mxu0 0
  %2199 = vmatpush1.bf16.msra.mxu0 %v1338
  %2200 = vmatprep.subr.bf16.mxu0 0
  %2201 = vmatpush1.bf16.msra.mxu0 %v1343
  %2202 = vmatprep.subr.bf16.mxu0 0
  %2203 = vmatpush1.bf16.msra.mxu0 %v1348
  %2204 = vmatprep.subr.bf16.mxu0 0
  %2205 = vmatpush1.bf16.msra.mxu0 %v1353
  %2206 = vmatprep.subr.bf16.mxu0 0
  %2207 = vmatpush1.bf16.msra.mxu0 %v1358
  %2208 = vmatprep.subr.bf16.mxu0 0
  %2209 = vmatpush1.bf16.msra.mxu0 %v1363
  %2210 = vmatprep.subr.bf16.mxu0 0
  %2211 = vmatpush1.bf16.msra.mxu0 %v1368
  %2212 = vmatprep.subr.bf16.mxu0 0
  %2213 = vmatpush1.bf16.msra.mxu0 %v1373
  %2214 = vmatprep.mubr.bf16.mxu0 %v385
  %2215 = vmatmul.mubr.bf16.gmra.mrb[0].mxu0 %v384
  %v2216 = vpop.f32.mrb[0].mxu0
  %v2217 = vadd.f32 0.0, %v2216
  %v2218 = vpop.f32.mrb[0].mxu0
  %v2219 = vpop.f32.mrb[0].mxu0
  %v2220 = vpop.f32.mrb[0].mxu0
  %2221 = vdwg.mxu0
  %2222 = vmatprep.subr.bf16.mxu0 0
  %2223 = vmatpush1.bf16.msra.mxu0 %v1378
  %2224 = vmatprep.subr.bf16.mxu0 0
  %2225 = vmatpush1.bf16.msra.mxu0 %v1383
  %2226 = vmatprep.subr.bf16.mxu0 0
  %2227 = vmatpush1.bf16.msra.mxu0 %v1388
  %2228 = vmatprep.subr.bf16.mxu0 0
  %2229 = vmatpush1.bf16.msra.mxu0 %v1393
  %2230 = vmatprep.subr.bf16.mxu0 0
  %2231 = vmatpush1.bf16.msra.mxu0 %v1398
  %2232 = vmatprep.subr.bf16.mxu0 0
  %2233 = vmatpush1.bf16.msra.mxu0 %v1403
  %2234 = vmatprep.subr.bf16.mxu0 0
  %2235 = vmatpush1.bf16.msra.mxu0 %v1408
  %2236 = vmatprep.subr.bf16.mxu0 0
  %2237 = vmatpush1.bf16.msra.mxu0 %v1413
  %2238 = vmatprep.subr.bf16.mxu0 0
  %2239 = vmatpush1.bf16.msra.mxu0 %v1418
  %2240 = vmatprep.subr.bf16.mxu0 0
  %2241 = vmatpush1.bf16.msra.mxu0 %v1423
  %2242 = vmatprep.subr.bf16.mxu0 0
  %2243 = vmatpush1.bf16.msra.mxu0 %v1428
  %2244 = vmatprep.subr.bf16.mxu0 0
  %2245 = vmatpush1.bf16.msra.mxu0 %v1433
  %2246 = vmatprep.subr.bf16.mxu0 0
  %2247 = vmatpush1.bf16.msra.mxu0 %v1438
  %2248 = vmatprep.subr.bf16.mxu0 0
  %2249 = vmatpush1.bf16.msra.mxu0 %v1443
  %2250 = vmatprep.subr.bf16.mxu0 0
  %2251 = vmatpush1.bf16.msra.mxu0 %v1448
  %2252 = vmatprep.subr.bf16.mxu0 0
  %2253 = vmatpush1.bf16.msra.mxu0 %v1453
  %2254 = vmatprep.mubr.bf16.mxu0 %v387
  %2255 = vmatmul.mubr.bf16.gmra.mrb[0].mxu0 %v386
  %v2256 = vpop.f32.mrb[0].mxu0
  %v2257 = vadd.f32 %v2217, %v2256
  %v2258 = vpop.f32.mrb[0].mxu0
  %v2259 = vpop.f32.mrb[0].mxu0
  %v2260 = vpop.f32.mrb[0].mxu0
  %2261 = vdwg.mxu0
  %2262 = vmatprep.subr.bf16.mxu0 0
  %2263 = vmatpush1.bf16.msra.mxu0 %v1458
  %2264 = vmatprep.subr.bf16.mxu0 0
  %2265 = vmatpush1.bf16.msra.mxu0 %v1463
  %2266 = vmatprep.subr.bf16.mxu0 0
  %2267 = vmatpush1.bf16.msra.mxu0 %v1468
  %2268 = vmatprep.subr.bf16.mxu0 0
  %2269 = vmatpush1.bf16.msra.mxu0 %v1473
  %2270 = vmatprep.subr.bf16.mxu0 0
  %2271 = vmatpush1.bf16.msra.mxu0 %v1478
  %2272 = vmatprep.subr.bf16.mxu0 0
  %2273 = vmatpush1.bf16.msra.mxu0 %v1483
  %2274 = vmatprep.subr.bf16.mxu0 0
  %2275 = vmatpush1.bf16.msra.mxu0 %v1488
  %2276 = vmatprep.subr.bf16.mxu0 0
  %2277 = vmatpush1.bf16.msra.mxu0 %v1493
  %2278 = vmatprep.subr.bf16.mxu0 0
  %2279 = vmatpush1.bf16.msra.mxu0 %v1498
  %2280 = vmatprep.subr.bf16.mxu0 0
  %2281 = vmatpush1.bf16.msra.mxu0 %v1503
  %2282 = vmatprep.subr.bf16.mxu0 0
  %2283 = vmatpush1.bf16.msra.mxu0 %v1508
  %2284 = vmatprep.subr.bf16.mxu0 0
  %2285 = vmatpush1.bf16.msra.mxu0 %v1513
  %2286 = vmatprep.subr.bf16.mxu0 0
  %2287 = vmatpush1.bf16.msra.mxu0 %v1518
  %2288 = vmatprep.subr.bf16.mxu0 0
  %2289 = vmatpush1.bf16.msra.mxu0 %v1523
  %2290 = vmatprep.subr.bf16.mxu0 0
  %2291 = vmatpush1.bf16.msra.mxu0 %v1528
  %2292 = vmatprep.subr.bf16.mxu0 0
  %2293 = vmatpush1.bf16.msra.mxu0 %v1533
  %2294 = vmatprep.mubr.bf16.mxu0 %v389
  %2295 = vmatmul.mubr.bf16.gmra.mrb[0].mxu0 %v388
  %v2296 = vpop.f32.mrb[0].mxu0
  %v2297 = vadd.f32 %v2257, %v2296
  %v2298 = vpop.f32.mrb[0].mxu0
  %v2299 = vpop.f32.mrb[0].mxu0
  %v2300 = vpop.f32.mrb[0].mxu0
  %2301 = vdwg.mxu0
  %2302 = vmatprep.subr.bf16.mxu0 0
  %2303 = vmatpush1.bf16.msra.mxu0 %v1538
  %2304 = vmatprep.subr.bf16.mxu0 0
  %2305 = vmatpush1.bf16.msra.mxu0 %v1543
  %2306 = vmatprep.subr.bf16.mxu0 0
  %2307 = vmatpush1.bf16.msra.mxu0 %v1548
  %2308 = vmatprep.subr.bf16.mxu0 0
  %2309 = vmatpush1.bf16.msra.mxu0 %v1553
  %2310 = vmatprep.subr.bf16.mxu0 0
  %2311 = vmatpush1.bf16.msra.mxu0 %v1558
  %2312 = vmatprep.subr.bf16.mxu0 0
  %2313 = vmatpush1.bf16.msra.mxu0 %v1563
  %2314 = vmatprep.subr.bf16.mxu0 0
  %2315 = vmatpush1.bf16.msra.mxu0 %v1568
  %2316 = vmatprep.subr.bf16.mxu0 0
  %2317 = vmatpush1.bf16.msra.mxu0 %v1573
  %2318 = vmatprep.subr.bf16.mxu0 0
  %2319 = vmatpush1.bf16.msra.mxu0 0
  %2320 = vmatprep.subr.bf16.mxu0 0
  %2321 = vmatpush1.bf16.msra.mxu0 0
  %2322 = vmatprep.subr.bf16.mxu0 0
  %2323 = vmatpush1.bf16.msra.mxu0 0
  %2324 = vmatprep.subr.bf16.mxu0 0
  %2325 = vmatpush1.bf16.msra.mxu0 0
  %2326 = vmatprep.subr.bf16.mxu0 0
  %2327 = vmatpush1.bf16.msra.mxu0 0
  %2328 = vmatprep.subr.bf16.mxu0 0
  %2329 = vmatpush1.bf16.msra.mxu0 0
  %2330 = vmatprep.subr.bf16.mxu0 0
  %2331 = vmatpush1.bf16.msra.mxu0 0
  %2332 = vmatprep.subr.bf16.mxu0 0
  %2333 = vmatpush1.bf16.msra.mxu0 0
  %2334 = vmatprep.mubr.bf16.mxu0 0
  %2335 = vmatmul.mubr.bf16.gmra.mrb[0].mxu0 %v390
  %v2336 = vpop.f32.mrb[0].mxu0
  %v2337 = vadd.f32 %v2297, %v2336
  %v2338 = vpop.f32.mrb[0].mxu0
  %v2339 = vpop.f32.mrb[0].mxu0
  %v2340 = vpop.f32.mrb[0].mxu0
  %2341 = vdwg.mxu0
  %v2342 = vld [vmem:[%s2] sm:$0x1f]
  %v2344 = vlaneseq
  %v2345 = vshrl.u32 %v2344, 7
  %v2346 = vsub.s32 0, %v2345
  %v2347 = vrot.slane %v2342, %v2346
  %v2348 = vlaneseq
  %v2349 = vshrl.u32 %v2348, 7
  %v2350 = vsub.s32 1, %v2349
  %v2351 = vrot.slane %v2342, %v2350
  %v2352 = vlaneseq
  %v2353 = vshrl.u32 %v2352, 7
  %v2354 = vsub.s32 2, %v2353
  %v2355 = vrot.slane %v2342, %v2354
  %v2356 = vlaneseq
  %v2357 = vshrl.u32 %v2356, 7
  %v2358 = vsub.s32 3, %v2357
  %v2359 = vrot.slane %v2342, %v2358
  %v2360 = vlaneseq
  %v2361 = vshrl.u32 %v2360, 7
  %v2362 = vsub.s32 4, %v2361
  %v2363 = vrot.slane %v2342, %v2362
  %vm2369 = vcmp.gt.f32.partialorder %v2012, %v2347
  %vm2370 = vcmp.gt.f32.partialorder %v2014, %v2351
  %vm2371 = vcmp.gt.f32.partialorder %v2176, %v2355
  %vm2372 = vcmp.gt.f32.partialorder %v2178, %v2359
  %vm2373 = vcmp.gt.f32.partialorder %v2337, %v2363
  %v2374 = vsel %vm2369, 1, 0
  %v2375 = vsel %vm2370, 1, 0
  %v2376 = vsel %vm2371, 1, 0
  %v2377 = vsel %vm2372, 1, 0
  %v2378 = vsel %vm2373, 1, 0
  %v2379 = vcvt.s32.f32 %v2374
  %v2380 = vcvt.s32.f32 %v2375
  %v2381 = vcvt.s32.f32 %v2376
  %v2382 = vcvt.s32.f32 %v2377
  %v2383 = vcvt.s32.f32 %v2378
  %v2384 = vpack.c.bf16 %v2379, %v2379
  %v2385 = vpack.c.bf16 %v2380, %v2380
  %v2386 = vpack.c.bf16 %v2381, %v2381
  %v2387 = vpack.c.bf16 %v2382, %v2382
  %v2388 = vpack.c.bf16 %v2383, %v2383
  %v2389 = vld [vmem:[%s3] sm:$0xff]
  %v2390 = vld [vmem:[%s3 + $0x8] sm:$0xff]
  %v2391 = vld [vmem:[%s3 + $0x10] sm:$0xf]
  %v2392 = vld [vmem:[%s3 + $0x14] sm:$0xff]
  %v2393 = vld [vmem:[%s3 + $0x1c] sm:$0xff]
  %v2394 = vld [vmem:[%s3 + $0x24] sm:$0xf]
  %v2395 = vld [vmem:[%s3 + $0x28] sm:$0xff]
  %v2396 = vld [vmem:[%s3 + $0x30] sm:$0xff]
  %v2397 = vld [vmem:[%s3 + $0x38] sm:$0xf]
  %v2398 = vld [vmem:[%s3 + $0x3c] sm:$0xff]
  %v2399 = vld [vmem:[%s3 + $0x44] sm:$0xff]
  %v2400 = vld [vmem:[%s3 + $0x4c] sm:$0xf]
  %v2401 = vld [vmem:[%s3 + $0x50] sm:$0xff]
  %v2402 = vld [vmem:[%s3 + $0x58] sm:$0xff]
  %v2403 = vld [vmem:[%s3 + $0x60] sm:$0xf]
  %v2404 = vld [vmem:[%s3 + $0x64] sm:$0xff]
  %v2405 = vld [vmem:[%s3 + $0x6c] sm:$0xff]
  %v2406 = vld [vmem:[%s3 + $0x74] sm:$0xf]
  %v2407 = vld [vmem:[%s3 + $0x78] sm:$0xff]
  %v2408 = vld [vmem:[%s3 + $0x80] sm:$0xff]
  %v2409 = vld [vmem:[%s3 + $0x88] sm:$0xf]
  %v2410 = vld [vmem:[%s3 + $0x8c] sm:$0xff]
  %v2411 = vld [vmem:[%s3 + $0x94] sm:$0xff]
  %v2412 = vld [vmem:[%s3 + $0x9c] sm:$0xf]
  %v2413 = vld [vmem:[%s3 + $0xa0] sm:$0xff]
  %v2414 = vld [vmem:[%s3 + $0xa8] sm:$0xff]
  %v2415 = vld [vmem:[%s3 + $0xb0] sm:$0xf]
  %v2416 = vld [vmem:[%s3 + $0xb4] sm:$0xff]
  %v2417 = vld [vmem:[%s3 + $0xbc] sm:$0xff]
  %v2418 = vld [vmem:[%s3 + $0xc4] sm:$0xf]
  %v2419 = vld [vmem:[%s3 + $0xc8] sm:$0xff]
  %v2420 = vld [vmem:[%s3 + $0xd0] sm:$0xff]
  %v2421 = vld [vmem:[%s3 + $0xd8] sm:$0xf]
  %v2422 = vld [vmem:[%s3 + $0xdc] sm:$0xff]
  %v2423 = vld [vmem:[%s3 + $0xe4] sm:$0xff]
  %v2424 = vld [vmem:[%s3 + $0xec] sm:$0xf]
  %v2425 = vld [vmem:[%s3 + $0xf0] sm:$0xff]
  %v2426 = vld [vmem:[%s3 + $0xf8] sm:$0xff]
  %v2427 = vld [vmem:[%s3 + $0x100] sm:$0xf]
  %v2428 = vld [vmem:[%s3 + $0x104] sm:$0xff]
  %v2429 = vld [vmem:[%s3 + $0x10c] sm:$0xff]
  %v2430 = vld [vmem:[%s3 + $0x114] sm:$0xf]
  %v2431 = vld [vmem:[%s3 + $0x118] sm:$0xff]
  %v2432 = vld [vmem:[%s3 + $0x120] sm:$0xff]
  %v2433 = vld [vmem:[%s3 + $0x128] sm:$0xf]
  %v2434 = vld [vmem:[%s3 + $0x12c] sm:$0xff]
  %v2435 = vld [vmem:[%s3 + $0x134] sm:$0xff]
  %v2436 = vld [vmem:[%s3 + $0x13c] sm:$0xf]
  %v2437 = vld [vmem:[%s3 + $0x140] sm:$0xff]
  %v2438 = vld [vmem:[%s3 + $0x148] sm:$0xff]
  %v2439 = vld [vmem:[%s3 + $0x150] sm:$0xf]
  %v2440 = vld [vmem:[%s3 + $0x154] sm:$0xff]
  %v2441 = vld [vmem:[%s3 + $0x15c] sm:$0xff]
  %v2442 = vld [vmem:[%s3 + $0x164] sm:$0xf]
  %v2443 = vld [vmem:[%s3 + $0x168] sm:$0xff]
  %v2444 = vld [vmem:[%s3 + $0x170] sm:$0xff]
  %v2445 = vld [vmem:[%s3 + $0x178] sm:$0xf]
  %v2446 = vld [vmem:[%s3 + $0x17c] sm:$0xff]
  %v2447 = vld [vmem:[%s3 + $0x184] sm:$0xff]
  %v2448 = vld [vmem:[%s3 + $0x18c] sm:$0xf]
  %v2449 = vld [vmem:[%s3 + $0x190] sm:$0xff]
  %v2450 = vld [vmem:[%s3 + $0x198] sm:$0xff]
  %v2451 = vld [vmem:[%s3 + $0x1a0] sm:$0xf]
  %v2452 = vld [vmem:[%s3 + $0x1a4] sm:$0xff]
  %v2453 = vld [vmem:[%s3 + $0x1ac] sm:$0xff]
  %v2454 = vld [vmem:[%s3 + $0x1b4] sm:$0xf]
  %v2455 = vld [vmem:[%s3 + $0x1b8] sm:$0xff]
  %v2456 = vld [vmem:[%s3 + $0x1c0] sm:$0xff]
  %v2457 = vld [vmem:[%s3 + $0x1c8] sm:$0xf]
  %v2458 = vld [vmem:[%s3 + $0x1cc] sm:$0xff]
  %v2459 = vld [vmem:[%s3 + $0x1d4] sm:$0xff]
  %v2460 = vld [vmem:[%s3 + $0x1dc] sm:$0xf]
  %v2461 = vld [vmem:[%s3 + $0x1e0] sm:$0xff]
  %v2462 = vld [vmem:[%s3 + $0x1e8] sm:$0xff]
  %v2463 = vld [vmem:[%s3 + $0x1f0] sm:$0xf]
  %v2464 = vld [vmem:[%s3 + $0x1f4] sm:$0xff]
  %v2465 = vld [vmem:[%s3 + $0x1fc] sm:$0xff]
  %v2466 = vld [vmem:[%s3 + $0x204] sm:$0xf]
  %v2467 = vld [vmem:[%s3 + $0x208] sm:$0xff]
  %v2468 = vld [vmem:[%s3 + $0x210] sm:$0xff]
  %v2469 = vld [vmem:[%s3 + $0x218] sm:$0xf]
  %v2470 = vld [vmem:[%s3 + $0x21c] sm:$0xff]
  %v2471 = vld [vmem:[%s3 + $0x224] sm:$0xff]
  %v2472 = vld [vmem:[%s3 + $0x22c] sm:$0xf]
  %v2473 = vld [vmem:[%s3 + $0x230] sm:$0xff]
  %v2474 = vld [vmem:[%s3 + $0x238] sm:$0xff]
  %v2475 = vld [vmem:[%s3 + $0x240] sm:$0xf]
  %v2476 = vld [vmem:[%s3 + $0x244] sm:$0xff]
  %v2477 = vld [vmem:[%s3 + $0x24c] sm:$0xff]
  %v2478 = vld [vmem:[%s3 + $0x254] sm:$0xf]
  %v2479 = vld [vmem:[%s3 + $0x258] sm:$0xff]
  %v2480 = vld [vmem:[%s3 + $0x260] sm:$0xff]
  %v2481 = vld [vmem:[%s3 + $0x268] sm:$0xf]
  %v2482 = vld [vmem:[%s3 + $0x26c] sm:$0xff]
  %v2483 = vld [vmem:[%s3 + $0x274] sm:$0xff]
  %v2484 = vld [vmem:[%s3 + $0x27c] sm:$0xf]
  %v2485 = vld [vmem:[%s3 + $0x280] sm:$0xff]
  %v2486 = vld [vmem:[%s3 + $0x288] sm:$0xff]
  %v2487 = vld [vmem:[%s3 + $0x290] sm:$0xf]
  %v2488 = vld [vmem:[%s3 + $0x294] sm:$0xff]
  %v2489 = vld [vmem:[%s3 + $0x29c] sm:$0xff]
  %v2490 = vld [vmem:[%s3 + $0x2a4] sm:$0xf]
  %v2491 = vld [vmem:[%s3 + $0x2a8] sm:$0xff]
  %v2492 = vld [vmem:[%s3 + $0x2b0] sm:$0xff]
  %v2493 = vld [vmem:[%s3 + $0x2b8] sm:$0xf]
  %v2494 = vld [vmem:[%s3 + $0x2bc] sm:$0xff]
  %v2495 = vld [vmem:[%s3 + $0x2c4] sm:$0xff]
  %v2496 = vld [vmem:[%s3 + $0x2cc] sm:$0xf]
  %v2497 = vld [vmem:[%s3 + $0x2d0] sm:$0xff]
  %v2498 = vld [vmem:[%s3 + $0x2d8] sm:$0xff]
  %v2499 = vld [vmem:[%s3 + $0x2e0] sm:$0xf]
  %v2500 = vld [vmem:[%s3 + $0x2e4] sm:$0xff]
  %v2501 = vld [vmem:[%s3 + $0x2ec] sm:$0xff]
  %v2502 = vld [vmem:[%s3 + $0x2f4] sm:$0xf]
  %v2503 = vld [vmem:[%s3 + $0x2f8] sm:$0xff]
  %v2504 = vld [vmem:[%s3 + $0x300] sm:$0xff]
  %v2505 = vld [vmem:[%s3 + $0x308] sm:$0xf]
  %v2506 = vld [vmem:[%s3 + $0x30c] sm:$0xff]
  %v2507 = vld [vmem:[%s3 + $0x314] sm:$0xff]
  %v2508 = vld [vmem:[%s3 + $0x31c] sm:$0xf]
  %v2509 = vld [vmem:[%s3 + $0x320] sm:$0xff]
  %v2510 = vld [vmem:[%s3 + $0x328] sm:$0xff]
  %v2511 = vld [vmem:[%s3 + $0x330] sm:$0xf]
  %v2512 = vld [vmem:[%s3 + $0x334] sm:$0xff]
  %v2513 = vld [vmem:[%s3 + $0x33c] sm:$0xff]
  %v2514 = vld [vmem:[%s3 + $0x344] sm:$0xf]
  %v2515 = vld [vmem:[%s3 + $0x348] sm:$0xff]
  %v2516 = vld [vmem:[%s3 + $0x350] sm:$0xff]
  %v2517 = vld [vmem:[%s3 + $0x358] sm:$0xf]
  %v2518 = vld [vmem:[%s3 + $0x35c] sm:$0xff]
  %v2519 = vld [vmem:[%s3 + $0x364] sm:$0xff]
  %v2520 = vld [vmem:[%s3 + $0x36c] sm:$0xf]
  %v2521 = vld [vmem:[%s3 + $0x370] sm:$0xff]
  %v2522 = vld [vmem:[%s3 + $0x378] sm:$0xff]
  %v2523 = vld [vmem:[%s3 + $0x380] sm:$0xf]
  %v2524 = vld [vmem:[%s3 + $0x384] sm:$0xff]
  %v2525 = vld [vmem:[%s3 + $0x38c] sm:$0xff]
  %v2526 = vld [vmem:[%s3 + $0x394] sm:$0xf]
  %v2527 = vld [vmem:[%s3 + $0x398] sm:$0xff]
  %v2528 = vld [vmem:[%s3 + $0x3a0] sm:$0xff]
  %v2529 = vld [vmem:[%s3 + $0x3a8] sm:$0xf]
  %v2530 = vld [vmem:[%s3 + $0x3ac] sm:$0xff]
  %v2531 = vld [vmem:[%s3 + $0x3b4] sm:$0xff]
  %v2532 = vld [vmem:[%s3 + $0x3bc] sm:$0xf]
  %v2533 = vld [vmem:[%s3 + $0x3c0] sm:$0xff]
  %v2534 = vld [vmem:[%s3 + $0x3c8] sm:$0xff]
  %v2535 = vld [vmem:[%s3 + $0x3d0] sm:$0xf]
  %v2536 = vld [vmem:[%s3 + $0x3d4] sm:$0xff]
  %v2537 = vld [vmem:[%s3 + $0x3dc] sm:$0xff]
  %v2538 = vld [vmem:[%s3 + $0x3e4] sm:$0xf]
  %v2539 = vld [vmem:[%s3 + $0x3e8] sm:$0xff]
  %v2540 = vld [vmem:[%s3 + $0x3f0] sm:$0xff]
  %v2541 = vld [vmem:[%s3 + $0x3f8] sm:$0xf]
  %v2542 = vld [vmem:[%s3 + $0x3fc] sm:$0xff]
  %v2543 = vld [vmem:[%s3 + $0x404] sm:$0xff]
  %v2544 = vld [vmem:[%s3 + $0x40c] sm:$0xf]
  %v2545 = vld [vmem:[%s3 + $0x410] sm:$0xff]
  %v2546 = vld [vmem:[%s3 + $0x418] sm:$0xff]
  %v2547 = vld [vmem:[%s3 + $0x420] sm:$0xf]
  %v2548 = vld [vmem:[%s3 + $0x424] sm:$0xff]
  %v2549 = vld [vmem:[%s3 + $0x42c] sm:$0xff]
  %v2550 = vld [vmem:[%s3 + $0x434] sm:$0xf]
  %v2551 = vld [vmem:[%s3 + $0x438] sm:$0xff]
  %v2552 = vld [vmem:[%s3 + $0x440] sm:$0xff]
  %v2553 = vld [vmem:[%s3 + $0x448] sm:$0xf]
  %v2554 = vld [vmem:[%s3 + $0x44c] sm:$0xff]
  %v2555 = vld [vmem:[%s3 + $0x454] sm:$0xff]
  %v2556 = vld [vmem:[%s3 + $0x45c] sm:$0xf]
  %v2557 = vld [vmem:[%s3 + $0x460] sm:$0xff]
  %v2558 = vld [vmem:[%s3 + $0x468] sm:$0xff]
  %v2559 = vld [vmem:[%s3 + $0x470] sm:$0xf]
  %v2560 = vld [vmem:[%s3 + $0x474] sm:$0xff]
  %v2561 = vld [vmem:[%s3 + $0x47c] sm:$0xff]
  %v2562 = vld [vmem:[%s3 + $0x484] sm:$0xf]
  %v2563 = vld [vmem:[%s3 + $0x488] sm:$0xff]
  %v2564 = vld [vmem:[%s3 + $0x490] sm:$0xff]
  %v2565 = vld [vmem:[%s3 + $0x498] sm:$0xf]
  %v2566 = vld [vmem:[%s3 + $0x49c] sm:$0xff]
  %v2567 = vld [vmem:[%s3 + $0x4a4] sm:$0xff]
  %v2568 = vld [vmem:[%s3 + $0x4ac] sm:$0xf]
  %v2569 = vld [vmem:[%s3 + $0x4b0] sm:$0xff]
  %v2570 = vld [vmem:[%s3 + $0x4b8] sm:$0xff]
  %v2571 = vld [vmem:[%s3 + $0x4c0] sm:$0xf]
  %v2572 = vld [vmem:[%s3 + $0x4c4] sm:$0xff]
  %v2573 = vld [vmem:[%s3 + $0x4cc] sm:$0xff]
  %v2574 = vld [vmem:[%s3 + $0x4d4] sm:$0xf]
  %v2575 = vld [vmem:[%s3 + $0x4d8] sm:$0xff]
  %v2576 = vld [vmem:[%s3 + $0x4e0] sm:$0xff]
  %v2577 = vld [vmem:[%s3 + $0x4e8] sm:$0xf]
  %v2578 = vld [vmem:[%s3 + $0x4ec] sm:$0xff]
  %v2579 = vld [vmem:[%s3 + $0x4f4] sm:$0xff]
  %v2580 = vld [vmem:[%s3 + $0x4fc] sm:$0xf]
  %v2581 = vld [vmem:[%s3 + $0x500] sm:$0xff]
  %v2582 = vld [vmem:[%s3 + $0x508] sm:$0xff]
  %v2583 = vld [vmem:[%s3 + $0x510] sm:$0xf]
  %v2584 = vld [vmem:[%s3 + $0x514] sm:$0xff]
  %v2585 = vld [vmem:[%s3 + $0x51c] sm:$0xff]
  %v2586 = vld [vmem:[%s3 + $0x524] sm:$0xf]
  %v2587 = vld [vmem:[%s3 + $0x528] sm:$0xff]
  %v2588 = vld [vmem:[%s3 + $0x530] sm:$0xff]
  %v2589 = vld [vmem:[%s3 + $0x538] sm:$0xf]
  %v2590 = vld [vmem:[%s3 + $0x53c] sm:$0xff]
  %v2591 = vld [vmem:[%s3 + $0x544] sm:$0xff]
  %v2592 = vld [vmem:[%s3 + $0x54c] sm:$0xf]
  %v2593 = vld [vmem:[%s3 + $0x550] sm:$0xff]
  %v2594 = vld [vmem:[%s3 + $0x558] sm:$0xff]
  %v2595 = vld [vmem:[%s3 + $0x560] sm:$0xf]
  %v2596 = vld [vmem:[%s3 + $0x564] sm:$0xff]
  %v2597 = vld [vmem:[%s3 + $0x56c] sm:$0xff]
  %v2598 = vld [vmem:[%s3 + $0x574] sm:$0xf]
  %v2599 = vld [vmem:[%s3 + $0x578] sm:$0xff]
  %v2600 = vld [vmem:[%s3 + $0x580] sm:$0xff]
  %v2601 = vld [vmem:[%s3 + $0x588] sm:$0xf]
  %v2602 = vld [vmem:[%s3 + $0x58c] sm:$0xff]
  %v2603 = vld [vmem:[%s3 + $0x594] sm:$0xff]
  %v2604 = vld [vmem:[%s3 + $0x59c] sm:$0xf]
  %v2605 = vld [vmem:[%s3 + $0x5a0] sm:$0xff]
  %v2606 = vld [vmem:[%s3 + $0x5a8] sm:$0xff]
  %v2607 = vld [vmem:[%s3 + $0x5b0] sm:$0xf]
  %v2608 = vld [vmem:[%s3 + $0x5b4] sm:$0xff]
  %v2609 = vld [vmem:[%s3 + $0x5bc] sm:$0xff]
  %v2610 = vld [vmem:[%s3 + $0x5c4] sm:$0xf]
  %v2611 = vld [vmem:[%s3 + $0x5c8] sm:$0xff]
  %v2612 = vld [vmem:[%s3 + $0x5d0] sm:$0xff]
  %v2613 = vld [vmem:[%s3 + $0x5d8] sm:$0xf]
  %v2614 = vld [vmem:[%s3 + $0x5dc] sm:$0xff]
  %v2615 = vld [vmem:[%s3 + $0x5e4] sm:$0xff]
  %v2616 = vld [vmem:[%s3 + $0x5ec] sm:$0xf]
  %v2617 = vld [vmem:[%s3 + $0x5f0] sm:$0xff]
  %v2618 = vld [vmem:[%s3 + $0x5f8] sm:$0xff]
  %v2619 = vld [vmem:[%s3 + $0x600] sm:$0xf]
  %v2620 = vld [vmem:[%s3 + $0x604] sm:$0xff]
  %v2621 = vld [vmem:[%s3 + $0x60c] sm:$0xff]
  %v2622 = vld [vmem:[%s3 + $0x614] sm:$0xf]
  %v2623 = vld [vmem:[%s3 + $0x618] sm:$0xff]
  %v2624 = vld [vmem:[%s3 + $0x620] sm:$0xff]
  %v2625 = vld [vmem:[%s3 + $0x628] sm:$0xf]
  %v2626 = vld [vmem:[%s3 + $0x62c] sm:$0xff]
  %v2627 = vld [vmem:[%s3 + $0x634] sm:$0xff]
  %v2628 = vld [vmem:[%s3 + $0x63c] sm:$0xf]
  %v2869 = vunpack.c.l.b16 %v2389
  %v2870 = vunpack.c.h.b16 %v2389
  %v2871 = vunpack.c.l.b16 %v2390
  %v2872 = vunpack.c.h.b16 %v2390
  %v2873 = vunpack.c.l.b16 %v2391
  %v2874 = vunpack.c.l.b16 %v2392
  %v2875 = vunpack.c.h.b16 %v2392
  %v2876 = vunpack.c.l.b16 %v2393
  %v2877 = vunpack.c.h.b16 %v2393
  %v2878 = vunpack.c.l.b16 %v2394
  %v2879 = vunpack.c.l.b16 %v2395
  %v2880 = vunpack.c.h.b16 %v2395
  %v2881 = vunpack.c.l.b16 %v2396
  %v2882 = vunpack.c.h.b16 %v2396
  %v2883 = vunpack.c.l.b16 %v2397
  %v2884 = vunpack.c.l.b16 %v2398
  %v2885 = vunpack.c.h.b16 %v2398
  %v2886 = vunpack.c.l.b16 %v2399
  %v2887 = vunpack.c.h.b16 %v2399
  %v2888 = vunpack.c.l.b16 %v2400
  %v2889 = vunpack.c.l.b16 %v2401
  %v2890 = vunpack.c.h.b16 %v2401
  %v2891 = vunpack.c.l.b16 %v2402
  %v2892 = vunpack.c.h.b16 %v2402
  %v2893 = vunpack.c.l.b16 %v2403
  %v2894 = vunpack.c.l.b16 %v2404
  %v2895 = vunpack.c.h.b16 %v2404
  %v2896 = vunpack.c.l.b16 %v2405
  %v2897 = vunpack.c.h.b16 %v2405
  %v2898 = vunpack.c.l.b16 %v2406
  %v2899 = vunpack.c.l.b16 %v2407
  %v2900 = vunpack.c.h.b16 %v2407
  %v2901 = vunpack.c.l.b16 %v2408
  %v2902 = vunpack.c.h.b16 %v2408
  %v2903 = vunpack.c.l.b16 %v2409
  %v2904 = vunpack.c.l.b16 %v2410
  %v2905 = vunpack.c.h.b16 %v2410
  %v2906 = vunpack.c.l.b16 %v2411
  %v2907 = vunpack.c.h.b16 %v2411
  %v2908 = vunpack.c.l.b16 %v2412
  %v2909 = vunpack.c.l.b16 %v2413
  %v2910 = vunpack.c.h.b16 %v2413
  %v2911 = vunpack.c.l.b16 %v2414
  %v2912 = vunpack.c.h.b16 %v2414
  %v2913 = vunpack.c.l.b16 %v2415
  %v2914 = vunpack.c.l.b16 %v2416
  %v2915 = vunpack.c.h.b16 %v2416
  %v2916 = vunpack.c.l.b16 %v2417
  %v2917 = vunpack.c.h.b16 %v2417
  %v2918 = vunpack.c.l.b16 %v2418
  %v2919 = vunpack.c.l.b16 %v2419
  %v2920 = vunpack.c.h.b16 %v2419
  %v2921 = vunpack.c.l.b16 %v2420
  %v2922 = vunpack.c.h.b16 %v2420
  %v2923 = vunpack.c.l.b16 %v2421
  %v2924 = vunpack.c.l.b16 %v2422
  %v2925 = vunpack.c.h.b16 %v2422
  %v2926 = vunpack.c.l.b16 %v2423
  %v2927 = vunpack.c.h.b16 %v2423
  %v2928 = vunpack.c.l.b16 %v2424
  %v2929 = vunpack.c.l.b16 %v2425
  %v2930 = vunpack.c.h.b16 %v2425
  %v2931 = vunpack.c.l.b16 %v2426
  %v2932 = vunpack.c.h.b16 %v2426
  %v2933 = vunpack.c.l.b16 %v2427
  %v2934 = vunpack.c.l.b16 %v2428
  %v2935 = vunpack.c.h.b16 %v2428
  %v2936 = vunpack.c.l.b16 %v2429
  %v2937 = vunpack.c.h.b16 %v2429
  %v2938 = vunpack.c.l.b16 %v2430
  %v2939 = vunpack.c.l.b16 %v2431
  %v2940 = vunpack.c.h.b16 %v2431
  %v2941 = vunpack.c.l.b16 %v2432
  %v2942 = vunpack.c.h.b16 %v2432
  %v2943 = vunpack.c.l.b16 %v2433
  %v2944 = vunpack.c.l.b16 %v2434
  %v2945 = vunpack.c.h.b16 %v2434
  %v2946 = vunpack.c.l.b16 %v2435
  %v2947 = vunpack.c.h.b16 %v2435
  %v2948 = vunpack.c.l.b16 %v2436
  %v2949 = vunpack.c.l.b16 %v2437
  %v2950 = vunpack.c.h.b16 %v2437
  %v2951 = vunpack.c.l.b16 %v2438
  %v2952 = vunpack.c.h.b16 %v2438
  %v2953 = vunpack.c.l.b16 %v2439
  %v2954 = vunpack.c.l.b16 %v2440
  %v2955 = vunpack.c.h.b16 %v2440
  %v2956 = vunpack.c.l.b16 %v2441
  %v2957 = vunpack.c.h.b16 %v2441
  %v2958 = vunpack.c.l.b16 %v2442
  %v2959 = vunpack.c.l.b16 %v2443
  %v2960 = vunpack.c.h.b16 %v2443
  %v2961 = vunpack.c.l.b16 %v2444
  %v2962 = vunpack.c.h.b16 %v2444
  %v2963 = vunpack.c.l.b16 %v2445
  %v2964 = vunpack.c.l.b16 %v2446
  %v2965 = vunpack.c.h.b16 %v2446
  %v2966 = vunpack.c.l.b16 %v2447
  %v2967 = vunpack.c.h.b16 %v2447
  %v2968 = vunpack.c.l.b16 %v2448
  %v2969 = vunpack.c.l.b16 %v2449
  %v2970 = vunpack.c.h.b16 %v2449
  %v2971 = vunpack.c.l.b16 %v2450
  %v2972 = vunpack.c.h.b16 %v2450
  %v2973 = vunpack.c.l.b16 %v2451
  %v2974 = vunpack.c.l.b16 %v2452
  %v2975 = vunpack.c.h.b16 %v2452
  %v2976 = vunpack.c.l.b16 %v2453
  %v2977 = vunpack.c.h.b16 %v2453
  %v2978 = vunpack.c.l.b16 %v2454
  %v2979 = vunpack.c.l.b16 %v2455
  %v2980 = vunpack.c.h.b16 %v2455
  %v2981 = vunpack.c.l.b16 %v2456
  %v2982 = vunpack.c.h.b16 %v2456
  %v2983 = vunpack.c.l.b16 %v2457
  %v2984 = vunpack.c.l.b16 %v2458
  %v2985 = vunpack.c.h.b16 %v2458
  %v2986 = vunpack.c.l.b16 %v2459
  %v2987 = vunpack.c.h.b16 %v2459
  %v2988 = vunpack.c.l.b16 %v2460
  %v2989 = vunpack.c.l.b16 %v2461
  %v2990 = vunpack.c.h.b16 %v2461
  %v2991 = vunpack.c.l.b16 %v2462
  %v2992 = vunpack.c.h.b16 %v2462
  %v2993 = vunpack.c.l.b16 %v2463
  %v2994 = vunpack.c.l.b16 %v2464
  %v2995 = vunpack.c.h.b16 %v2464
  %v2996 = vunpack.c.l.b16 %v2465
  %v2997 = vunpack.c.h.b16 %v2465
  %v2998 = vunpack.c.l.b16 %v2466
  %v2999 = vunpack.c.l.b16 %v2467
  %v3000 = vunpack.c.h.b16 %v2467
  %v3001 = vunpack.c.l.b16 %v2468
  %v3002 = vunpack.c.h.b16 %v2468
  %v3003 = vunpack.c.l.b16 %v2469
  %v3004 = vunpack.c.l.b16 %v2470
  %v3005 = vunpack.c.h.b16 %v2470
  %v3006 = vunpack.c.l.b16 %v2471
  %v3007 = vunpack.c.h.b16 %v2471
  %v3008 = vunpack.c.l.b16 %v2472
  %v3009 = vunpack.c.l.b16 %v2473
  %v3010 = vunpack.c.h.b16 %v2473
  %v3011 = vunpack.c.l.b16 %v2474
  %v3012 = vunpack.c.h.b16 %v2474
  %v3013 = vunpack.c.l.b16 %v2475
  %v3014 = vunpack.c.l.b16 %v2476
  %v3015 = vunpack.c.h.b16 %v2476
  %v3016 = vunpack.c.l.b16 %v2477
  %v3017 = vunpack.c.h.b16 %v2477
  %v3018 = vunpack.c.l.b16 %v2478
  %v3019 = vunpack.c.l.b16 %v2479
  %v3020 = vunpack.c.h.b16 %v2479
  %v3021 = vunpack.c.l.b16 %v2480
  %v3022 = vunpack.c.h.b16 %v2480
  %v3023 = vunpack.c.l.b16 %v2481
  %v3024 = vunpack.c.l.b16 %v2482
  %v3025 = vunpack.c.h.b16 %v2482
  %v3026 = vunpack.c.l.b16 %v2483
  %v3027 = vunpack.c.h.b16 %v2483
  %v3028 = vunpack.c.l.b16 %v2484
  %v3029 = vunpack.c.l.b16 %v2485
  %v3030 = vunpack.c.h.b16 %v2485
  %v3031 = vunpack.c.l.b16 %v2486
  %v3032 = vunpack.c.h.b16 %v2486
  %v3033 = vunpack.c.l.b16 %v2487
  %v3034 = vunpack.c.l.b16 %v2488
  %v3035 = vunpack.c.h.b16 %v2488
  %v3036 = vunpack.c.l.b16 %v2489
  %v3037 = vunpack.c.h.b16 %v2489
  %v3038 = vunpack.c.l.b16 %v2490
  %v3039 = vunpack.c.l.b16 %v2491
  %v3040 = vunpack.c.h.b16 %v2491
  %v3041 = vunpack.c.l.b16 %v2492
  %v3042 = vunpack.c.h.b16 %v2492
  %v3043 = vunpack.c.l.b16 %v2493
  %v3044 = vunpack.c.l.b16 %v2494
  %v3045 = vunpack.c.h.b16 %v2494
  %v3046 = vunpack.c.l.b16 %v2495
  %v3047 = vunpack.c.h.b16 %v2495
  %v3048 = vunpack.c.l.b16 %v2496
  %v3049 = vunpack.c.l.b16 %v2497
  %v3050 = vunpack.c.h.b16 %v2497
  %v3051 = vunpack.c.l.b16 %v2498
  %v3052 = vunpack.c.h.b16 %v2498
  %v3053 = vunpack.c.l.b16 %v2499
  %v3054 = vunpack.c.l.b16 %v2500
  %v3055 = vunpack.c.h.b16 %v2500
  %v3056 = vunpack.c.l.b16 %v2501
  %v3057 = vunpack.c.h.b16 %v2501
  %v3058 = vunpack.c.l.b16 %v2502
  %v3059 = vunpack.c.l.b16 %v2503
  %v3060 = vunpack.c.h.b16 %v2503
  %v3061 = vunpack.c.l.b16 %v2504
  %v3062 = vunpack.c.h.b16 %v2504
  %v3063 = vunpack.c.l.b16 %v2505
  %v3064 = vunpack.c.l.b16 %v2506
  %v3065 = vunpack.c.h.b16 %v2506
  %v3066 = vunpack.c.l.b16 %v2507
  %v3067 = vunpack.c.h.b16 %v2507
  %v3068 = vunpack.c.l.b16 %v2508
  %v3069 = vunpack.c.l.b16 %v2509
  %v3070 = vunpack.c.h.b16 %v2509
  %v3071 = vunpack.c.l.b16 %v2510
  %v3072 = vunpack.c.h.b16 %v2510
  %v3073 = vunpack.c.l.b16 %v2511
  %v3074 = vunpack.c.l.b16 %v2512
  %v3075 = vunpack.c.h.b16 %v2512
  %v3076 = vunpack.c.l.b16 %v2513
  %v3077 = vunpack.c.h.b16 %v2513
  %v3078 = vunpack.c.l.b16 %v2514
  %v3079 = vunpack.c.l.b16 %v2515
  %v3080 = vunpack.c.h.b16 %v2515
  %v3081 = vunpack.c.l.b16 %v2516
  %v3082 = vunpack.c.h.b16 %v2516
  %v3083 = vunpack.c.l.b16 %v2517
  %v3084 = vunpack.c.l.b16 %v2518
  %v3085 = vunpack.c.h.b16 %v2518
  %v3086 = vunpack.c.l.b16 %v2519
  %v3087 = vunpack.c.h.b16 %v2519
  %v3088 = vunpack.c.l.b16 %v2520
  %v3089 = vunpack.c.l.b16 %v2521
  %v3090 = vunpack.c.h.b16 %v2521
  %v3091 = vunpack.c.l.b16 %v2522
  %v3092 = vunpack.c.h.b16 %v2522
  %v3093 = vunpack.c.l.b16 %v2523
  %v3094 = vunpack.c.l.b16 %v2524
  %v3095 = vunpack.c.h.b16 %v2524
  %v3096 = vunpack.c.l.b16 %v2525
  %v3097 = vunpack.c.h.b16 %v2525
  %v3098 = vunpack.c.l.b16 %v2526
  %v3099 = vunpack.c.l.b16 %v2527
  %v3100 = vunpack.c.h.b16 %v2527
  %v3101 = vunpack.c.l.b16 %v2528
  %v3102 = vunpack.c.h.b16 %v2528
  %v3103 = vunpack.c.l.b16 %v2529
  %v3104 = vunpack.c.l.b16 %v2530
  %v3105 = vunpack.c.h.b16 %v2530
  %v3106 = vunpack.c.l.b16 %v2531
  %v3107 = vunpack.c.h.b16 %v2531
  %v3108 = vunpack.c.l.b16 %v2532
  %v3109 = vunpack.c.l.b16 %v2533
  %v3110 = vunpack.c.h.b16 %v2533
  %v3111 = vunpack.c.l.b16 %v2534
  %v3112 = vunpack.c.h.b16 %v2534
  %v3113 = vunpack.c.l.b16 %v2535
  %v3114 = vunpack.c.l.b16 %v2536
  %v3115 = vunpack.c.h.b16 %v2536
  %v3116 = vunpack.c.l.b16 %v2537
  %v3117 = vunpack.c.h.b16 %v2537
  %v3118 = vunpack.c.l.b16 %v2538
  %v3119 = vunpack.c.l.b16 %v2539
  %v3120 = vunpack.c.h.b16 %v2539
  %v3121 = vunpack.c.l.b16 %v2540
  %v3122 = vunpack.c.h.b16 %v2540
  %v3123 = vunpack.c.l.b16 %v2541
  %v3124 = vunpack.c.l.b16 %v2542
  %v3125 = vunpack.c.h.b16 %v2542
  %v3126 = vunpack.c.l.b16 %v2543
  %v3127 = vunpack.c.h.b16 %v2543
  %v3128 = vunpack.c.l.b16 %v2544
  %v3129 = vunpack.c.l.b16 %v2545
  %v3130 = vunpack.c.h.b16 %v2545
  %v3131 = vunpack.c.l.b16 %v2546
  %v3132 = vunpack.c.h.b16 %v2546
  %v3133 = vunpack.c.l.b16 %v2547
  %v3134 = vunpack.c.l.b16 %v2548
  %v3135 = vunpack.c.h.b16 %v2548
  %v3136 = vunpack.c.l.b16 %v2549
  %v3137 = vunpack.c.h.b16 %v2549
  %v3138 = vunpack.c.l.b16 %v2550
  %v3139 = vunpack.c.l.b16 %v2551
  %v3140 = vunpack.c.h.b16 %v2551
  %v3141 = vunpack.c.l.b16 %v2552
  %v3142 = vunpack.c.h.b16 %v2552
  %v3143 = vunpack.c.l.b16 %v2553
  %v3144 = vunpack.c.l.b16 %v2554
  %v3145 = vunpack.c.h.b16 %v2554
  %v3146 = vunpack.c.l.b16 %v2555
  %v3147 = vunpack.c.h.b16 %v2555
  %v3148 = vunpack.c.l.b16 %v2556
  %v3149 = vunpack.c.l.b16 %v2557
  %v3150 = vunpack.c.h.b16 %v2557
  %v3151 = vunpack.c.l.b16 %v2558
  %v3152 = vunpack.c.h.b16 %v2558
  %v3153 = vunpack.c.l.b16 %v2559
  %v3154 = vunpack.c.l.b16 %v2560
  %v3155 = vunpack.c.h.b16 %v2560
  %v3156 = vunpack.c.l.b16 %v2561
  %v3157 = vunpack.c.h.b16 %v2561
  %v3158 = vunpack.c.l.b16 %v2562
  %v3159 = vunpack.c.l.b16 %v2563
  %v3160 = vunpack.c.h.b16 %v2563
  %v3161 = vunpack.c.l.b16 %v2564
  %v3162 = vunpack.c.h.b16 %v2564
  %v3163 = vunpack.c.l.b16 %v2565
  %v3164 = vunpack.c.l.b16 %v2566
  %v3165 = vunpack.c.h.b16 %v2566
  %v3166 = vunpack.c.l.b16 %v2567
  %v3167 = vunpack.c.h.b16 %v2567
  %v3168 = vunpack.c.l.b16 %v2568
  %v3169 = vunpack.c.l.b16 %v2569
  %v3170 = vunpack.c.h.b16 %v2569
  %v3171 = vunpack.c.l.b16 %v2570
  %v3172 = vunpack.c.h.b16 %v2570
  %v3173 = vunpack.c.l.b16 %v2571
  %v3174 = vunpack.c.l.b16 %v2572
  %v3175 = vunpack.c.h.b16 %v2572
  %v3176 = vunpack.c.l.b16 %v2573
  %v3177 = vunpack.c.h.b16 %v2573
  %v3178 = vunpack.c.l.b16 %v2574
  %v3179 = vunpack.c.l.b16 %v2575
  %v3180 = vunpack.c.h.b16 %v2575
  %v3181 = vunpack.c.l.b16 %v2576
  %v3182 = vunpack.c.h.b16 %v2576
  %v3183 = vunpack.c.l.b16 %v2577
  %v3184 = vunpack.c.l.b16 %v2578
  %v3185 = vunpack.c.h.b16 %v2578
  %v3186 = vunpack.c.l.b16 %v2579
  %v3187 = vunpack.c.h.b16 %v2579
  %v3188 = vunpack.c.l.b16 %v2580
  %v3189 = vunpack.c.l.b16 %v2581
  %v3190 = vunpack.c.h.b16 %v2581
  %v3191 = vunpack.c.l.b16 %v2582
  %v3192 = vunpack.c.h.b16 %v2582
  %v3193 = vunpack.c.l.b16 %v2583
  %v3194 = vunpack.c.l.b16 %v2584
  %v3195 = vunpack.c.h.b16 %v2584
  %v3196 = vunpack.c.l.b16 %v2585
  %v3197 = vunpack.c.h.b16 %v2585
  %v3198 = vunpack.c.l.b16 %v2586
  %v3199 = vunpack.c.l.b16 %v2587
  %v3200 = vunpack.c.h.b16 %v2587
  %v3201 = vunpack.c.l.b16 %v2588
  %v3202 = vunpack.c.h.b16 %v2588
  %v3203 = vunpack.c.l.b16 %v2589
  %v3204 = vunpack.c.l.b16 %v2590
  %v3205 = vunpack.c.h.b16 %v2590
  %v3206 = vunpack.c.l.b16 %v2591
  %v3207 = vunpack.c.h.b16 %v2591
  %v3208 = vunpack.c.l.b16 %v2592
  %v3209 = vunpack.c.l.b16 %v2593
  %v3210 = vunpack.c.h.b16 %v2593
  %v3211 = vunpack.c.l.b16 %v2594
  %v3212 = vunpack.c.h.b16 %v2594
  %v3213 = vunpack.c.l.b16 %v2595
  %v3214 = vunpack.c.l.b16 %v2596
  %v3215 = vunpack.c.h.b16 %v2596
  %v3216 = vunpack.c.l.b16 %v2597
  %v3217 = vunpack.c.h.b16 %v2597
  %v3218 = vunpack.c.l.b16 %v2598
  %v3219 = vunpack.c.l.b16 %v2599
  %v3220 = vunpack.c.h.b16 %v2599
  %v3221 = vunpack.c.l.b16 %v2600
  %v3222 = vunpack.c.h.b16 %v2600
  %v3223 = vunpack.c.l.b16 %v2601
  %v3224 = vunpack.c.l.b16 %v2602
  %v3225 = vunpack.c.h.b16 %v2602
  %v3226 = vunpack.c.l.b16 %v2603
  %v3227 = vunpack.c.h.b16 %v2603
  %v3228 = vunpack.c.l.b16 %v2604
  %v3229 = vunpack.c.l.b16 %v2605
  %v3230 = vunpack.c.h.b16 %v2605
  %v3231 = vunpack.c.l.b16 %v2606
  %v3232 = vunpack.c.h.b16 %v2606
  %v3233 = vunpack.c.l.b16 %v2607
  %v3234 = vunpack.c.l.b16 %v2608
  %v3235 = vunpack.c.h.b16 %v2608
  %v3236 = vunpack.c.l.b16 %v2609
  %v3237 = vunpack.c.h.b16 %v2609
  %v3238 = vunpack.c.l.b16 %v2610
  %v3239 = vunpack.c.l.b16 %v2611
  %v3240 = vunpack.c.h.b16 %v2611
  %v3241 = vunpack.c.l.b16 %v2612
  %v3242 = vunpack.c.h.b16 %v2612
  %v3243 = vunpack.c.l.b16 %v2613
  %v3244 = vunpack.c.l.b16 %v2614
  %v3245 = vunpack.c.h.b16 %v2614
  %v3246 = vunpack.c.l.b16 %v2615
  %v3247 = vunpack.c.h.b16 %v2615
  %v3248 = vunpack.c.l.b16 %v2616
  %v3249 = vunpack.c.l.b16 %v2617
  %v3250 = vunpack.c.h.b16 %v2617
  %v3251 = vunpack.c.l.b16 %v2618
  %v3252 = vunpack.c.h.b16 %v2618
  %v3253 = vunpack.c.l.b16 %v2619
  %v3254 = vunpack.c.l.b16 %v2620
  %v3255 = vunpack.c.h.b16 %v2620
  %v3256 = vunpack.c.l.b16 %v2621
  %v3257 = vunpack.c.h.b16 %v2621
  %v3258 = vunpack.c.l.b16 %v2622
  %v3259 = vunpack.c.l.b16 %v2623
  %v3260 = vunpack.c.h.b16 %v2623
  %v3261 = vunpack.c.l.b16 %v2624
  %v3262 = vunpack.c.h.b16 %v2624
  %v3263 = vunpack.c.l.b16 %v2625
  %v3264 = vunpack.c.l.b16 %v2626
  %v3265 = vunpack.c.h.b16 %v2626
  %v3266 = vunpack.c.l.b16 %v2627
  %v3267 = vunpack.c.h.b16 %v2627
  %v3268 = vunpack.c.l.b16 %v2628
  %v3269 = vpack.c.b16 %v2874, %v2869
  %v3270 = vpack.c.b16 %v2875, %v2870
  %v3271 = vpack.c.b16 %v2876, %v2871
  %v3272 = vpack.c.b16 %v2877, %v2872
  %v3273 = vpack.c.b16 %v2878, %v2873
  %v3274 = vpack.c.b16 %v2884, %v2879
  %v3275 = vpack.c.b16 %v2885, %v2880
  %v3276 = vpack.c.b16 %v2886, %v2881
  %v3277 = vpack.c.b16 %v2887, %v2882
  %v3278 = vpack.c.b16 %v2888, %v2883
  %v3279 = vpack.c.b16 %v2894, %v2889
  %v3280 = vpack.c.b16 %v2895, %v2890
  %v3281 = vpack.c.b16 %v2896, %v2891
  %v3282 = vpack.c.b16 %v2897, %v2892
  %v3283 = vpack.c.b16 %v2898, %v2893
  %v3284 = vpack.c.b16 %v2904, %v2899
  %v3285 = vpack.c.b16 %v2905, %v2900
  %v3286 = vpack.c.b16 %v2906, %v2901
  %v3287 = vpack.c.b16 %v2907, %v2902
  %v3288 = vpack.c.b16 %v2908, %v2903
  %v3289 = vpack.c.b16 %v2914, %v2909
  %v3290 = vpack.c.b16 %v2915, %v2910
  %v3291 = vpack.c.b16 %v2916, %v2911
  %v3292 = vpack.c.b16 %v2917, %v2912
  %v3293 = vpack.c.b16 %v2918, %v2913
  %v3294 = vpack.c.b16 %v2924, %v2919
  %v3295 = vpack.c.b16 %v2925, %v2920
  %v3296 = vpack.c.b16 %v2926, %v2921
  %v3297 = vpack.c.b16 %v2927, %v2922
  %v3298 = vpack.c.b16 %v2928, %v2923
  %v3299 = vpack.c.b16 %v2934, %v2929
  %v3300 = vpack.c.b16 %v2935, %v2930
  %v3301 = vpack.c.b16 %v2936, %v2931
  %v3302 = vpack.c.b16 %v2937, %v2932
  %v3303 = vpack.c.b16 %v2938, %v2933
  %v3304 = vpack.c.b16 %v2944, %v2939
  %v3305 = vpack.c.b16 %v2945, %v2940
  %v3306 = vpack.c.b16 %v2946, %v2941
  %v3307 = vpack.c.b16 %v2947, %v2942
  %v3308 = vpack.c.b16 %v2948, %v2943
  %v3309 = vpack.c.b16 %v2954, %v2949
  %v3310 = vpack.c.b16 %v2955, %v2950
  %v3311 = vpack.c.b16 %v2956, %v2951
  %v3312 = vpack.c.b16 %v2957, %v2952
  %v3313 = vpack.c.b16 %v2958, %v2953
  %v3314 = vpack.c.b16 %v2964, %v2959
  %v3315 = vpack.c.b16 %v2965, %v2960
  %v3316 = vpack.c.b16 %v2966, %v2961
  %v3317 = vpack.c.b16 %v2967, %v2962
  %v3318 = vpack.c.b16 %v2968, %v2963
  %v3319 = vpack.c.b16 %v2974, %v2969
  %v3320 = vpack.c.b16 %v2975, %v2970
  %v3321 = vpack.c.b16 %v2976, %v2971
  %v3322 = vpack.c.b16 %v2977, %v2972
  %v3323 = vpack.c.b16 %v2978, %v2973
  %v3324 = vpack.c.b16 %v2984, %v2979
  %v3325 = vpack.c.b16 %v2985, %v2980
  %v3326 = vpack.c.b16 %v2986, %v2981
  %v3327 = vpack.c.b16 %v2987, %v2982
  %v3328 = vpack.c.b16 %v2988, %v2983
  %v3329 = vpack.c.b16 %v2994, %v2989
  %v3330 = vpack.c.b16 %v2995, %v2990
  %v3331 = vpack.c.b16 %v2996, %v2991
  %v3332 = vpack.c.b16 %v2997, %v2992
  %v3333 = vpack.c.b16 %v2998, %v2993
  %v3334 = vpack.c.b16 %v3004, %v2999
  %v3335 = vpack.c.b16 %v3005, %v3000
  %v3336 = vpack.c.b16 %v3006, %v3001
  %v3337 = vpack.c.b16 %v3007, %v3002
  %v3338 = vpack.c.b16 %v3008, %v3003
  %v3339 = vpack.c.b16 %v3014, %v3009
  %v3340 = vpack.c.b16 %v3015, %v3010
  %v3341 = vpack.c.b16 %v3016, %v3011
  %v3342 = vpack.c.b16 %v3017, %v3012
  %v3343 = vpack.c.b16 %v3018, %v3013
  %v3344 = vpack.c.b16 %v3024, %v3019
  %v3345 = vpack.c.b16 %v3025, %v3020
  %v3346 = vpack.c.b16 %v3026, %v3021
  %v3347 = vpack.c.b16 %v3027, %v3022
  %v3348 = vpack.c.b16 %v3028, %v3023
  %v3349 = vpack.c.b16 %v3034, %v3029
  %v3350 = vpack.c.b16 %v3035, %v3030
  %v3351 = vpack.c.b16 %v3036, %v3031
  %v3352 = vpack.c.b16 %v3037, %v3032
  %v3353 = vpack.c.b16 %v3038, %v3033
  %v3354 = vpack.c.b16 %v3044, %v3039
  %v3355 = vpack.c.b16 %v3045, %v3040
  %v3356 = vpack.c.b16 %v3046, %v3041
  %v3357 = vpack.c.b16 %v3047, %v3042
  %v3358 = vpack.c.b16 %v3048, %v3043
  %v3359 = vpack.c.b16 %v3054, %v3049
  %v3360 = vpack.c.b16 %v3055, %v3050
  %v3361 = vpack.c.b16 %v3056, %v3051
  %v3362 = vpack.c.b16 %v3057, %v3052
  %v3363 = vpack.c.b16 %v3058, %v3053
  %v3364 = vpack.c.b16 %v3064, %v3059
  %v3365 = vpack.c.b16 %v3065, %v3060
  %v3366 = vpack.c.b16 %v3066, %v3061
  %v3367 = vpack.c.b16 %v3067, %v3062
  %v3368 = vpack.c.b16 %v3068, %v3063
  %v3369 = vpack.c.b16 %v3074, %v3069
  %v3370 = vpack.c.b16 %v3075, %v3070
  %v3371 = vpack.c.b16 %v3076, %v3071
  %v3372 = vpack.c.b16 %v3077, %v3072
  %v3373 = vpack.c.b16 %v3078, %v3073
  %v3374 = vpack.c.b16 %v3084, %v3079
  %v3375 = vpack.c.b16 %v3085, %v3080
  %v3376 = vpack.c.b16 %v3086, %v3081
  %v3377 = vpack.c.b16 %v3087, %v3082
  %v3378 = vpack.c.b16 %v3088, %v3083
  %v3379 = vpack.c.b16 %v3094, %v3089
  %v3380 = vpack.c.b16 %v3095, %v3090
  %v3381 = vpack.c.b16 %v3096, %v3091
  %v3382 = vpack.c.b16 %v3097, %v3092
  %v3383 = vpack.c.b16 %v3098, %v3093
  %v3384 = vpack.c.b16 %v3104, %v3099
  %v3385 = vpack.c.b16 %v3105, %v3100
  %v3386 = vpack.c.b16 %v3106, %v3101
  %v3387 = vpack.c.b16 %v3107, %v3102
  %v3388 = vpack.c.b16 %v3108, %v3103
  %v3389 = vpack.c.b16 %v3114, %v3109
  %v3390 = vpack.c.b16 %v3115, %v3110
  %v3391 = vpack.c.b16 %v3116, %v3111
  %v3392 = vpack.c.b16 %v3117, %v3112
  %v3393 = vpack.c.b16 %v3118, %v3113
  %v3394 = vpack.c.b16 %v3124, %v3119
  %v3395 = vpack.c.b16 %v3125, %v3120
  %v3396 = vpack.c.b16 %v3126, %v3121
  %v3397 = vpack.c.b16 %v3127, %v3122
  %v3398 = vpack.c.b16 %v3128, %v3123
  %v3399 = vpack.c.b16 %v3134, %v3129
  %v3400 = vpack.c.b16 %v3135, %v3130
  %v3401 = vpack.c.b16 %v3136, %v3131
  %v3402 = vpack.c.b16 %v3137, %v3132
  %v3403 = vpack.c.b16 %v3138, %v3133
  %v3404 = vpack.c.b16 %v3144, %v3139
  %v3405 = vpack.c.b16 %v3145, %v3140
  %v3406 = vpack.c.b16 %v3146, %v3141
  %v3407 = vpack.c.b16 %v3147, %v3142
  %v3408 = vpack.c.b16 %v3148, %v3143
  %v3409 = vpack.c.b16 %v3154, %v3149
  %v3410 = vpack.c.b16 %v3155, %v3150
  %v3411 = vpack.c.b16 %v3156, %v3151
  %v3412 = vpack.c.b16 %v3157, %v3152
  %v3413 = vpack.c.b16 %v3158, %v3153
  %v3414 = vpack.c.b16 %v3164, %v3159
  %v3415 = vpack.c.b16 %v3165, %v3160
  %v3416 = vpack.c.b16 %v3166, %v3161
  %v3417 = vpack.c.b16 %v3167, %v3162
  %v3418 = vpack.c.b16 %v3168, %v3163
  %v3419 = vpack.c.b16 %v3174, %v3169
  %v3420 = vpack.c.b16 %v3175, %v3170
  %v3421 = vpack.c.b16 %v3176, %v3171
  %v3422 = vpack.c.b16 %v3177, %v3172
  %v3423 = vpack.c.b16 %v3178, %v3173
  %v3424 = vpack.c.b16 %v3184, %v3179
  %v3425 = vpack.c.b16 %v3185, %v3180
  %v3426 = vpack.c.b16 %v3186, %v3181
  %v3427 = vpack.c.b16 %v3187, %v3182
  %v3428 = vpack.c.b16 %v3188, %v3183
  %v3429 = vpack.c.b16 %v3194, %v3189
  %v3430 = vpack.c.b16 %v3195, %v3190
  %v3431 = vpack.c.b16 %v3196, %v3191
  %v3432 = vpack.c.b16 %v3197, %v3192
  %v3433 = vpack.c.b16 %v3198, %v3193
  %v3434 = vpack.c.b16 %v3204, %v3199
  %v3435 = vpack.c.b16 %v3205, %v3200
  %v3436 = vpack.c.b16 %v3206, %v3201
  %v3437 = vpack.c.b16 %v3207, %v3202
  %v3438 = vpack.c.b16 %v3208, %v3203
  %v3439 = vpack.c.b16 %v3214, %v3209
  %v3440 = vpack.c.b16 %v3215, %v3210
  %v3441 = vpack.c.b16 %v3216, %v3211
  %v3442 = vpack.c.b16 %v3217, %v3212
  %v3443 = vpack.c.b16 %v3218, %v3213
  %v3444 = vpack.c.b16 %v3224, %v3219
  %v3445 = vpack.c.b16 %v3225, %v3220
  %v3446 = vpack.c.b16 %v3226, %v3221
  %v3447 = vpack.c.b16 %v3227, %v3222
  %v3448 = vpack.c.b16 %v3228, %v3223
  %v3449 = vpack.c.b16 %v3234, %v3229
  %v3450 = vpack.c.b16 %v3235, %v3230
  %v3451 = vpack.c.b16 %v3236, %v3231
  %v3452 = vpack.c.b16 %v3237, %v3232
  %v3453 = vpack.c.b16 %v3238, %v3233
  %v3454 = vpack.c.b16 %v3244, %v3239
  %v3455 = vpack.c.b16 %v3245, %v3240
  %v3456 = vpack.c.b16 %v3246, %v3241
  %v3457 = vpack.c.b16 %v3247, %v3242
  %v3458 = vpack.c.b16 %v3248, %v3243
  %v3459 = vpack.c.b16 %v3254, %v3249
  %v3460 = vpack.c.b16 %v3255, %v3250
  %v3461 = vpack.c.b16 %v3256, %v3251
  %v3462 = vpack.c.b16 %v3257, %v3252
  %v3463 = vpack.c.b16 %v3258, %v3253
  %v3464 = vpack.c.b16 %v3264, %v3259
  %v3465 = vpack.c.b16 %v3265, %v3260
  %v3466 = vpack.c.b16 %v3266, %v3261
  %v3467 = vpack.c.b16 %v3267, %v3262
  %v3468 = vpack.c.b16 %v3268, %v3263
  %3669 = vmatprep.subr.bf16.mxu0 %v3270
  %3670 = vmatpush1.bf16.msra.mxu0 %v3269
  %3671 = vmatprep.subr.bf16.mxu0 %v3275
  %3672 = vmatpush1.bf16.msra.mxu0 %v3274
  %3673 = vmatprep.subr.bf16.mxu0 %v3280
  %3674 = vmatpush1.bf16.msra.mxu0 %v3279
  %3675 = vmatprep.subr.bf16.mxu0 %v3285
  %3676 = vmatpush1.bf16.msra.mxu0 %v3284
  %3677 = vmatprep.subr.bf16.mxu0 %v3290
  %3678 = vmatpush1.bf16.msra.mxu0 %v3289
  %3679 = vmatprep.subr.bf16.mxu0 %v3295
  %3680 = vmatpush1.bf16.msra.mxu0 %v3294
  %3681 = vmatprep.subr.bf16.mxu0 %v3300
  %3682 = vmatpush1.bf16.msra.mxu0 %v3299
  %3683 = vmatprep.subr.bf16.mxu0 %v3305
  %3684 = vmatpush1.bf16.msra.mxu0 %v3304
  %3685 = vmatprep.subr.bf16.mxu0 %v3310
  %3686 = vmatpush1.bf16.msra.mxu0 %v3309
  %3687 = vmatprep.subr.bf16.mxu0 %v3315
  %3688 = vmatpush1.bf16.msra.mxu0 %v3314
  %3689 = vmatprep.subr.bf16.mxu0 %v3320
  %3690 = vmatpush1.bf16.msra.mxu0 %v3319
  %3691 = vmatprep.subr.bf16.mxu0 %v3325
  %3692 = vmatpush1.bf16.msra.mxu0 %v3324
  %3693 = vmatprep.subr.bf16.mxu0 %v3330
  %3694 = vmatpush1.bf16.msra.mxu0 %v3329
  %3695 = vmatprep.subr.bf16.mxu0 %v3335
  %3696 = vmatpush1.bf16.msra.mxu0 %v3334
  %3697 = vmatprep.subr.bf16.mxu0 %v3340
  %3698 = vmatpush1.bf16.msra.mxu0 %v3339
  %3699 = vmatprep.subr.bf16.mxu0 %v3345
  %3700 = vmatpush1.bf16.msra.mxu0 %v3344
  %3701 = vmatprep.mubr.bf16.mxu0 %v2385
  %3702 = vmatmul.mubr.bf16.gmra.mrb[0].mxu0 %v2384
  %v3703 = vpop.f32.mrb[0].mxu0
  %v3704 = vadd.f32 0.0, %v3703
  %v3705 = vpop.f32.mrb[0].mxu0
  %v3706 = vadd.f32 0.0, %v3705
  %v3707 = vpop.f32.mrb[0].mxu0
  %v3708 = vpop.f32.mrb[0].mxu0
  %3709 = vdwg.mxu0
  %3710 = vmatprep.subr.bf16.mxu0 %v3350
  %3711 = vmatpush1.bf16.msra.mxu0 %v3349
  %3712 = vmatprep.subr.bf16.mxu0 %v3355
  %3713 = vmatpush1.bf16.msra.mxu0 %v3354
  %3714 = vmatprep.subr.bf16.mxu0 %v3360
  %3715 = vmatpush1.bf16.msra.mxu0 %v3359
  %3716 = vmatprep.subr.bf16.mxu0 %v3365
  %3717 = vmatpush1.bf16.msra.mxu0 %v3364
  %3718 = vmatprep.subr.bf16.mxu0 %v3370
  %3719 = vmatpush1.bf16.msra.mxu0 %v3369
  %3720 = vmatprep.subr.bf16.mxu0 %v3375
  %3721 = vmatpush1.bf16.msra.mxu0 %v3374
  %3722 = vmatprep.subr.bf16.mxu0 %v3380
  %3723 = vmatpush1.bf16.msra.mxu0 %v3379
  %3724 = vmatprep.subr.bf16.mxu0 %v3385
  %3725 = vmatpush1.bf16.msra.mxu0 %v3384
  %3726 = vmatprep.subr.bf16.mxu0 %v3390
  %3727 = vmatpush1.bf16.msra.mxu0 %v3389
  %3728 = vmatprep.subr.bf16.mxu0 %v3395
  %3729 = vmatpush1.bf16.msra.mxu0 %v3394
  %3730 = vmatprep.subr.bf16.mxu0 %v3400
  %3731 = vmatpush1.bf16.msra.mxu0 %v3399
  %3732 = vmatprep.subr.bf16.mxu0 %v3405
  %3733 = vmatpush1.bf16.msra.mxu0 %v3404
  %3734 = vmatprep.subr.bf16.mxu0 %v3410
  %3735 = vmatpush1.bf16.msra.mxu0 %v3409
  %3736 = vmatprep.subr.bf16.mxu0 %v3415
  %3737 = vmatpush1.bf16.msra.mxu0 %v3414
  %3738 = vmatprep.subr.bf16.mxu0 %v3420
  %3739 = vmatpush1.bf16.msra.mxu0 %v3419
  %3740 = vmatprep.subr.bf16.mxu0 %v3425
  %3741 = vmatpush1.bf16.msra.mxu0 %v3424
  %3742 = vmatprep.mubr.bf16.mxu0 %v2387
  %3743 = vmatmul.mubr.bf16.gmra.mrb[0].mxu0 %v2386
  %v3744 = vpop.f32.mrb[0].mxu0
  %v3745 = vadd.f32 %v3704, %v3744
  %v3746 = vpop.f32.mrb[0].mxu0
  %v3747 = vadd.f32 %v3706, %v3746
  %v3748 = vpop.f32.mrb[0].mxu0
  %v3749 = vpop.f32.mrb[0].mxu0
  %3750 = vdwg.mxu0
  %3751 = vmatprep.subr.bf16.mxu0 %v3430
  %3752 = vmatpush1.bf16.msra.mxu0 %v3429
  %3753 = vmatprep.subr.bf16.mxu0 %v3435
  %3754 = vmatpush1.bf16.msra.mxu0 %v3434
  %3755 = vmatprep.subr.bf16.mxu0 %v3440
  %3756 = vmatpush1.bf16.msra.mxu0 %v3439
  %3757 = vmatprep.subr.bf16.mxu0 %v3445
  %3758 = vmatpush1.bf16.msra.mxu0 %v3444
  %3759 = vmatprep.subr.bf16.mxu0 %v3450
  %3760 = vmatpush1.bf16.msra.mxu0 %v3449
  %3761 = vmatprep.subr.bf16.mxu0 %v3455
  %3762 = vmatpush1.bf16.msra.mxu0 %v3454
  %3763 = vmatprep.subr.bf16.mxu0 %v3460
  %3764 = vmatpush1.bf16.msra.mxu0 %v3459
  %3765 = vmatprep.subr.bf16.mxu0 %v3465
  %3766 = vmatpush1.bf16.msra.mxu0 %v3464
  %3767 = vmatprep.subr.bf16.mxu0 0
  %3768 = vmatpush1.bf16.msra.mxu0 0
  %3769 = vmatprep.subr.bf16.mxu0 0
  %3770 = vmatpush1.bf16.msra.mxu0 0
  %3771 = vmatprep.subr.bf16.mxu0 0
  %3772 = vmatpush1.bf16.msra.mxu0 0
  %3773 = vmatprep.subr.bf16.mxu0 0
  %3774 = vmatpush1.bf16.msra.mxu0 0
  %3775 = vmatprep.subr.bf16.mxu0 0
  %3776 = vmatpush1.bf16.msra.mxu0 0
  %3777 = vmatprep.subr.bf16.mxu0 0
  %3778 = vmatpush1.bf16.msra.mxu0 0
  %3779 = vmatprep.subr.bf16.mxu0 0
  %3780 = vmatpush1.bf16.msra.mxu0 0
  %3781 = vmatprep.subr.bf16.mxu0 0
  %3782 = vmatpush1.bf16.msra.mxu0 0
  %3783 = vmatprep.mubr.bf16.mxu0 0
  %3784 = vmatmul.mubr.bf16.gmra.mrb[0].mxu0 %v2388
  %v3785 = vpop.f32.mrb[0].mxu0
  %v3786 = vadd.f32 %v3745, %v3785
  %v3787 = vpop.f32.mrb[0].mxu0
  %v3788 = vadd.f32 %v3747, %v3787
  %v3789 = vpop.f32.mrb[0].mxu0
  %v3790 = vpop.f32.mrb[0].mxu0
  %3791 = vdwg.mxu0
  %3792 = vmatprep.subr.bf16.mxu0 %v3272
  %3793 = vmatpush1.bf16.msra.mxu0 %v3271
  %3794 = vmatprep.subr.bf16.mxu0 %v3277
  %3795 = vmatpush1.bf16.msra.mxu0 %v3276
  %3796 = vmatprep.subr.bf16.mxu0 %v3282
  %3797 = vmatpush1.bf16.msra.mxu0 %v3281
  %3798 = vmatprep.subr.bf16.mxu0 %v3287
  %3799 = vmatpush1.bf16.msra.mxu0 %v3286
  %3800 = vmatprep.subr.bf16.mxu0 %v3292
  %3801 = vmatpush1.bf16.msra.mxu0 %v3291
  %3802 = vmatprep.subr.bf16.mxu0 %v3297
  %3803 = vmatpush1.bf16.msra.mxu0 %v3296
  %3804 = vmatprep.subr.bf16.mxu0 %v3302
  %3805 = vmatpush1.bf16.msra.mxu0 %v3301
  %3806 = vmatprep.subr.bf16.mxu0 %v3307
  %3807 = vmatpush1.bf16.msra.mxu0 %v3306
  %3808 = vmatprep.subr.bf16.mxu0 %v3312
  %3809 = vmatpush1.bf16.msra.mxu0 %v3311
  %3810 = vmatprep.subr.bf16.mxu0 %v3317
  %3811 = vmatpush1.bf16.msra.mxu0 %v3316
  %3812 = vmatprep.subr.bf16.mxu0 %v3322
  %3813 = vmatpush1.bf16.msra.mxu0 %v3321
  %3814 = vmatprep.subr.bf16.mxu0 %v3327
  %3815 = vmatpush1.bf16.msra.mxu0 %v3326
  %3816 = vmatprep.subr.bf16.mxu0 %v3332
  %3817 = vmatpush1.bf16.msra.mxu0 %v3331
  %3818 = vmatprep.subr.bf16.mxu0 %v3337
  %3819 = vmatpush1.bf16.msra.mxu0 %v3336
  %3820 = vmatprep.subr.bf16.mxu0 %v3342
  %3821 = vmatpush1.bf16.msra.mxu0 %v3341
  %3822 = vmatprep.subr.bf16.mxu0 %v3347
  %3823 = vmatpush1.bf16.msra.mxu0 %v3346
  %3824 = vmatprep.mubr.bf16.mxu0 %v2385
  %3825 = vmatmul.mubr.bf16.gmra.mrb[0].mxu0 %v2384
  %v3826 = vpop.f32.mrb[0].mxu0
  %v3827 = vadd.f32 0.0, %v3826
  %v3828 = vpop.f32.mrb[0].mxu0
  %v3829 = vadd.f32 0.0, %v3828
  %v3830 = vpop.f32.mrb[0].mxu0
  %v3831 = vpop.f32.mrb[0].mxu0
  %3832 = vdwg.mxu0
  %3833 = vmatprep.subr.bf16.mxu0 %v3352
  %3834 = vmatpush1.bf16.msra.mxu0 %v3351
  %3835 = vmatprep.subr.bf16.mxu0 %v3357
  %3836 = vmatpush1.bf16.msra.mxu0 %v3356
  %3837 = vmatprep.subr.bf16.mxu0 %v3362
  %3838 = vmatpush1.bf16.msra.mxu0 %v3361
  %3839 = vmatprep.subr.bf16.mxu0 %v3367
  %3840 = vmatpush1.bf16.msra.mxu0 %v3366
  %3841 = vmatprep.subr.bf16.mxu0 %v3372
  %3842 = vmatpush1.bf16.msra.mxu0 %v3371
  %3843 = vmatprep.subr.bf16.mxu0 %v3377
  %3844 = vmatpush1.bf16.msra.mxu0 %v3376
  %3845 = vmatprep.subr.bf16.mxu0 %v3382
  %3846 = vmatpush1.bf16.msra.mxu0 %v3381
  %3847 = vmatprep.subr.bf16.mxu0 %v3387
  %3848 = vmatpush1.bf16.msra.mxu0 %v3386
  %3849 = vmatprep.subr.bf16.mxu0 %v3392
  %3850 = vmatpush1.bf16.msra.mxu0 %v3391
  %3851 = vmatprep.subr.bf16.mxu0 %v3397
  %3852 = vmatpush1.bf16.msra.mxu0 %v3396
  %3853 = vmatprep.subr.bf16.mxu0 %v3402
  %3854 = vmatpush1.bf16.msra.mxu0 %v3401
  %3855 = vmatprep.subr.bf16.mxu0 %v3407
  %3856 = vmatpush1.bf16.msra.mxu0 %v3406
  %3857 = vmatprep.subr.bf16.mxu0 %v3412
  %3858 = vmatpush1.bf16.msra.mxu0 %v3411
  %3859 = vmatprep.subr.bf16.mxu0 %v3417
  %3860 = vmatpush1.bf16.msra.mxu0 %v3416
  %3861 = vmatprep.subr.bf16.mxu0 %v3422
  %3862 = vmatpush1.bf16.msra.mxu0 %v3421
  %3863 = vmatprep.subr.bf16.mxu0 %v3427
  %3864 = vmatpush1.bf16.msra.mxu0 %v3426
  %3865 = vmatprep.mubr.bf16.mxu0 %v2387
  %3866 = vmatmul.mubr.bf16.gmra.mrb[0].mxu0 %v2386
  %v3867 = vpop.f32.mrb[0].mxu0
  %v3868 = vadd.f32 %v3827, %v3867
  %v3869 = vpop.f32.mrb[0].mxu0
  %v3870 = vadd.f32 %v3829, %v3869
  %v3871 = vpop.f32.mrb[0].mxu0
  %v3872 = vpop.f32.mrb[0].mxu0
  %3873 = vdwg.mxu0
  %3874 = vmatprep.subr.bf16.mxu0 %v3432
  %3875 = vmatpush1.bf16.msra.mxu0 %v3431
  %3876 = vmatprep.subr.bf16.mxu0 %v3437
  %3877 = vmatpush1.bf16.msra.mxu0 %v3436
  %3878 = vmatprep.subr.bf16.mxu0 %v3442
  %3879 = vmatpush1.bf16.msra.mxu0 %v3441
  %3880 = vmatprep.subr.bf16.mxu0 %v3447
  %3881 = vmatpush1.bf16.msra.mxu0 %v3446
  %3882 = vmatprep.subr.bf16.mxu0 %v3452
  %3883 = vmatpush1.bf16.msra.mxu0 %v3451
  %3884 = vmatprep.subr.bf16.mxu0 %v3457
  %3885 = vmatpush1.bf16.msra.mxu0 %v3456
  %3886 = vmatprep.subr.bf16.mxu0 %v3462
  %3887 = vmatpush1.bf16.msra.mxu0 %v3461
  %3888 = vmatprep.subr.bf16.mxu0 %v3467
  %3889 = vmatpush1.bf16.msra.mxu0 %v3466
  %3890 = vmatprep.subr.bf16.mxu0 0
  %3891 = vmatpush1.bf16.msra.mxu0 0
  %3892 = vmatprep.subr.bf16.mxu0 0
  %3893 = vmatpush1.bf16.msra.mxu0 0
  %3894 = vmatprep.subr.bf16.mxu0 0
  %3895 = vmatpush1.bf16.msra.mxu0 0
  %3896 = vmatprep.subr.bf16.mxu0 0
  %3897 = vmatpush1.bf16.msra.mxu0 0
  %3898 = vmatprep.subr.bf16.mxu0 0
  %3899 = vmatpush1.bf16.msra.mxu0 0
  %3900 = vmatprep.subr.bf16.mxu0 0
  %3901 = vmatpush1.bf16.msra.mxu0 0
  %3902 = vmatprep.subr.bf16.mxu0 0
  %3903 = vmatpush1.bf16.msra.mxu0 0
  %3904 = vmatprep.subr.bf16.mxu0 0
  %3905 = vmatpush1.bf16.msra.mxu0 0
  %3906 = vmatprep.mubr.bf16.mxu0 0
  %3907 = vmatmul.mubr.bf16.gmra.mrb[0].mxu0 %v2388
  %v3908 = vpop.f32.mrb[0].mxu0
  %v3909 = vadd.f32 %v3868, %v3908
  %v3910 = vpop.f32.mrb[0].mxu0
  %v3911 = vadd.f32 %v3870, %v3910
  %v3912 = vpop.f32.mrb[0].mxu0
  %v3913 = vpop.f32.mrb[0].mxu0
  %3914 = vdwg.mxu0
  %3915 = vmatprep.subr.bf16.mxu0 0
  %3916 = vmatpush1.bf16.msra.mxu0 %v3273
  %3917 = vmatprep.subr.bf16.mxu0 0
  %3918 = vmatpush1.bf16.msra.mxu0 %v3278
  %3919 = vmatprep.subr.bf16.mxu0 0
  %3920 = vmatpush1.bf16.msra.mxu0 %v3283
  %3921 = vmatprep.subr.bf16.mxu0 0
  %3922 = vmatpush1.bf16.msra.mxu0 %v3288
  %3923 = vmatprep.subr.bf16.mxu0 0
  %3924 = vmatpush1.bf16.msra.mxu0 %v3293
  %3925 = vmatprep.subr.bf16.mxu0 0
  %3926 = vmatpush1.bf16.msra.mxu0 %v3298
  %3927 = vmatprep.subr.bf16.mxu0 0
  %3928 = vmatpush1.bf16.msra.mxu0 %v3303
  %3929 = vmatprep.subr.bf16.mxu0 0
  %3930 = vmatpush1.bf16.msra.mxu0 %v3308
  %3931 = vmatprep.subr.bf16.mxu0 0
  %3932 = vmatpush1.bf16.msra.mxu0 %v3313
  %3933 = vmatprep.subr.bf16.mxu0 0
  %3934 = vmatpush1.bf16.msra.mxu0 %v3318
  %3935 = vmatprep.subr.bf16.mxu0 0
  %3936 = vmatpush1.bf16.msra.mxu0 %v3323
  %3937 = vmatprep.subr.bf16.mxu0 0
  %3938 = vmatpush1.bf16.msra.mxu0 %v3328
  %3939 = vmatprep.subr.bf16.mxu0 0
  %3940 = vmatpush1.bf16.msra.mxu0 %v3333
  %3941 = vmatprep.subr.bf16.mxu0 0
  %3942 = vmatpush1.bf16.msra.mxu0 %v3338
  %3943 = vmatprep.subr.bf16.mxu0 0
  %3944 = vmatpush1.bf16.msra.mxu0 %v3343
  %3945 = vmatprep.subr.bf16.mxu0 0
  %3946 = vmatpush1.bf16.msra.mxu0 %v3348
  %3947 = vmatprep.mubr.bf16.mxu0 %v2385
  %3948 = vmatmul.mubr.bf16.gmra.mrb[0].mxu0 %v2384
  %v3949 = vpop.f32.mrb[0].mxu0
  %v3950 = vadd.f32 0.0, %v3949
  %v3951 = vpop.f32.mrb[0].mxu0
  %v3952 = vpop.f32.mrb[0].mxu0
  %v3953 = vpop.f32.mrb[0].mxu0
  %3954 = vdwg.mxu0
  %3955 = vmatprep.subr.bf16.mxu0 0
  %3956 = vmatpush1.bf16.msra.mxu0 %v3353
  %3957 = vmatprep.subr.bf16.mxu0 0
  %3958 = vmatpush1.bf16.msra.mxu0 %v3358
  %3959 = vmatprep.subr.bf16.mxu0 0
  %3960 = vmatpush1.bf16.msra.mxu0 %v3363
  %3961 = vmatprep.subr.bf16.mxu0 0
  %3962 = vmatpush1.bf16.msra.mxu0 %v3368
  %3963 = vmatprep.subr.bf16.mxu0 0
  %3964 = vmatpush1.bf16.msra.mxu0 %v3373
  %3965 = vmatprep.subr.bf16.mxu0 0
  %3966 = vmatpush1.bf16.msra.mxu0 %v3378
  %3967 = vmatprep.subr.bf16.mxu0 0
  %3968 = vmatpush1.bf16.msra.mxu0 %v3383
  %3969 = vmatprep.subr.bf16.mxu0 0
  %3970 = vmatpush1.bf16.msra.mxu0 %v3388
  %3971 = vmatprep.subr.bf16.mxu0 0
  %3972 = vmatpush1.bf16.msra.mxu0 %v3393
  %3973 = vmatprep.subr.bf16.mxu0 0
  %3974 = vmatpush1.bf16.msra.mxu0 %v3398
  %3975 = vmatprep.subr.bf16.mxu0 0
  %3976 = vmatpush1.bf16.msra.mxu0 %v3403
  %3977 = vmatprep.subr.bf16.mxu0 0
  %3978 = vmatpush1.bf16.msra.mxu0 %v3408
  %3979 = vmatprep.subr.bf16.mxu0 0
  %3980 = vmatpush1.bf16.msra.mxu0 %v3413
  %3981 = vmatprep.subr.bf16.mxu0 0
  %3982 = vmatpush1.bf16.msra.mxu0 %v3418
  %3983 = vmatprep.subr.bf16.mxu0 0
  %3984 = vmatpush1.bf16.msra.mxu0 %v3423
  %3985 = vmatprep.subr.bf16.mxu0 0
  %3986 = vmatpush1.bf16.msra.mxu0 %v3428
  %3987 = vmatprep.mubr.bf16.mxu0 %v2387
  %3988 = vmatmul.mubr.bf16.gmra.mrb[0].mxu0 %v2386
  %v3989 = vpop.f32.mrb[0].mxu0
  %v3990 = vadd.f32 %v3950, %v3989
  %v3991 = vpop.f32.mrb[0].mxu0
  %v3992 = vpop.f32.mrb[0].mxu0
  %v3993 = vpop.f32.mrb[0].mxu0
  %3994 = vdwg.mxu0
  %3995 = vmatprep.subr.bf16.mxu0 0
  %3996 = vmatpush1.bf16.msra.mxu0 %v3433
  %3997 = vmatprep.subr.bf16.mxu0 0
  %3998 = vmatpush1.bf16.msra.mxu0 %v3438
  %3999 = vmatprep.subr.bf16.mxu0 0
  %4000 = vmatpush1.bf16.msra.mxu0 %v3443
  %4001 = vmatprep.subr.bf16.mxu0 0
  %4002 = vmatpush1.bf16.msra.mxu0 %v3448
  %4003 = vmatprep.subr.bf16.mxu0 0
  %4004 = vmatpush1.bf16.msra.mxu0 %v3453
  %4005 = vmatprep.subr.bf16.mxu0 0
  %4006 = vmatpush1.bf16.msra.mxu0 %v3458
  %4007 = vmatprep.subr.bf16.mxu0 0
  %4008 = vmatpush1.bf16.msra.mxu0 %v3463
  %4009 = vmatprep.subr.bf16.mxu0 0
  %4010 = vmatpush1.bf16.msra.mxu0 %v3468
  %4011 = vmatprep.subr.bf16.mxu0 0
  %4012 = vmatpush1.bf16.msra.mxu0 0
  %4013 = vmatprep.subr.bf16.mxu0 0
  %4014 = vmatpush1.bf16.msra.mxu0 0
  %4015 = vmatprep.subr.bf16.mxu0 0
  %4016 = vmatpush1.bf16.msra.mxu0 0
  %4017 = vmatprep.subr.bf16.mxu0 0
  %4018 = vmatpush1.bf16.msra.mxu0 0
  %4019 = vmatprep.subr.bf16.mxu0 0
  %4020 = vmatpush1.bf16.msra.mxu0 0
  %4021 = vmatprep.subr.bf16.mxu0 0
  %4022 = vmatpush1.bf16.msra.mxu0 0
  %4023 = vmatprep.subr.bf16.mxu0 0
  %4024 = vmatpush1.bf16.msra.mxu0 0
  %4025 = vmatprep.subr.bf16.mxu0 0
  %4026 = vmatpush1.bf16.msra.mxu0 0
  %4027 = vmatprep.mubr.bf16.mxu0 0
  %4028 = vmatmul.mubr.bf16.gmra.mrb[0].mxu0 %v2388
  %v4029 = vpop.f32.mrb[0].mxu0
  %v4030 = vadd.f32 %v3990, %v4029
  %v4031 = vpop.f32.mrb[0].mxu0
  %v4032 = vpop.f32.mrb[0].mxu0
  %v4033 = vpop.f32.mrb[0].mxu0
  %4034 = vdwg.mxu0
  %v4035 = vld [vmem:[%s4] sm:$0x1f]
  %v4037 = vlaneseq
  %v4038 = vshrl.u32 %v4037, 7
  %v4039 = vsub.s32 0, %v4038
  %v4040 = vrot.slane %v4035, %v4039
  %v4041 = vlaneseq
  %v4042 = vshrl.u32 %v4041, 7
  %v4043 = vsub.s32 1, %v4042
  %v4044 = vrot.slane %v4035, %v4043
  %v4045 = vlaneseq
  %v4046 = vshrl.u32 %v4045, 7
  %v4047 = vsub.s32 2, %v4046
  %v4048 = vrot.slane %v4035, %v4047
  %v4049 = vlaneseq
  %v4050 = vshrl.u32 %v4049, 7
  %v4051 = vsub.s32 3, %v4050
  %v4052 = vrot.slane %v4035, %v4051
  %v4053 = vlaneseq
  %v4054 = vshrl.u32 %v4053, 7
  %v4055 = vsub.s32 4, %v4054
  %v4056 = vrot.slane %v4035, %v4055
  %vm4062 = vcmp.gt.f32.partialorder %v3786, %v4040
  %vm4063 = vcmp.gt.f32.partialorder %v3788, %v4044
  %vm4064 = vcmp.gt.f32.partialorder %v3909, %v4048
  %vm4065 = vcmp.gt.f32.partialorder %v3911, %v4052
  %vm4066 = vcmp.gt.f32.partialorder %v4030, %v4056
  %v4067 = vsel %vm4062, 1, 0
  %v4068 = vsel %vm4063, 1, 0
  %v4069 = vsel %vm4064, 1, 0
  %v4070 = vsel %vm4065, 1, 0
  %v4071 = vsel %vm4066, 1, 0
  %v4072 = vcvt.s32.f32 %v4067
  %v4073 = vcvt.s32.f32 %v4068
  %v4074 = vcvt.s32.f32 %v4069
  %v4075 = vcvt.s32.f32 %v4070
  %v4076 = vcvt.s32.f32 %v4071
  %v4077 = vpack.c.bf16 %v4072, %v4072
  %v4078 = vpack.c.bf16 %v4073, %v4073
  %v4079 = vpack.c.bf16 %v4074, %v4074
  %v4080 = vpack.c.bf16 %v4075, %v4075
  %v4081 = vpack.c.bf16 %v4076, %v4076
  %v4082 = vadd.bf16 %v4077, %v2384
  %v4083 = vadd.bf16 %v4078, %v2385
  %v4084 = vadd.bf16 %v4079, %v2386
  %v4085 = vadd.bf16 %v4080, %v2387
  %v4086 = vadd.bf16 %v4081, %v2388
  %v4087 = vld [vmem:[%s5] sm:$0xff]
  %v4088 = vld [vmem:[%s5 + $0x8] sm:$0xff]
  %v4089 = vld [vmem:[%s5 + $0x10] sm:$0xff]
  %v4090 = vld [vmem:[%s5 + $0x18] sm:$0xff]
  %v4091 = vld [vmem:[%s5 + $0x20] sm:$0xff]
  %v4092 = vld [vmem:[%s5 + $0x28] sm:$0xff]
  %v4093 = vld [vmem:[%s5 + $0x30] sm:$0xff]
  %v4094 = vld [vmem:[%s5 + $0x38] sm:$0xff]
  %v4095 = vld [vmem:[%s5 + $0x40] sm:$0xff]
  %v4096 = vld [vmem:[%s5 + $0x48] sm:$0xff]
  %v4097 = vld [vmem:[%s5 + $0x50] sm:$0xff]
  %v4098 = vld [vmem:[%s5 + $0x58] sm:$0xff]
  %v4099 = vld [vmem:[%s5 + $0x60] sm:$0xff]
  %v4100 = vld [vmem:[%s5 + $0x68] sm:$0xff]
  %v4101 = vld [vmem:[%s5 + $0x70] sm:$0xff]
  %v4102 = vld [vmem:[%s5 + $0x78] sm:$0xff]
  %v4103 = vld [vmem:[%s5 + $0x80] sm:$0xff]
  %v4104 = vld [vmem:[%s5 + $0x88] sm:$0xff]
  %v4105 = vld [vmem:[%s5 + $0x90] sm:$0xff]
  %v4106 = vld [vmem:[%s5 + $0x98] sm:$0xff]
  %v4107 = vld [vmem:[%s5 + $0xa0] sm:$0xff]
  %v4108 = vld [vmem:[%s5 + $0xa8] sm:$0xff]
  %v4109 = vld [vmem:[%s5 + $0xb0] sm:$0xff]
  %v4110 = vld [vmem:[%s5 + $0xb8] sm:$0xff]
  %v4111 = vld [vmem:[%s5 + $0xc0] sm:$0xff]
  %v4112 = vld [vmem:[%s5 + $0xc8] sm:$0xff]
  %v4113 = vld [vmem:[%s5 + $0xd0] sm:$0xff]
  %v4114 = vld [vmem:[%s5 + $0xd8] sm:$0xff]
  %v4115 = vld [vmem:[%s5 + $0xe0] sm:$0xff]
  %v4116 = vld [vmem:[%s5 + $0xe8] sm:$0xff]
  %v4117 = vld [vmem:[%s5 + $0xf0] sm:$0xff]
  %v4118 = vld [vmem:[%s5 + $0xf8] sm:$0xff]
  %v4119 = vld [vmem:[%s5 + $0x100] sm:$0xff]
  %v4120 = vld [vmem:[%s5 + $0x108] sm:$0xff]
  %v4121 = vld [vmem:[%s5 + $0x110] sm:$0xff]
  %v4122 = vld [vmem:[%s5 + $0x118] sm:$0xff]
  %v4123 = vld [vmem:[%s5 + $0x120] sm:$0xff]
  %v4124 = vld [vmem:[%s5 + $0x128] sm:$0xff]
  %v4125 = vld [vmem:[%s5 + $0x130] sm:$0xff]
  %v4126 = vld [vmem:[%s5 + $0x138] sm:$0xff]
  %v4127 = vld [vmem:[%s5 + $0x140] sm:$0xff]
  %v4128 = vld [vmem:[%s5 + $0x148] sm:$0xff]
  %v4129 = vld [vmem:[%s5 + $0x150] sm:$0xff]
  %v4130 = vld [vmem:[%s5 + $0x158] sm:$0xff]
  %v4131 = vld [vmem:[%s5 + $0x160] sm:$0xff]
  %v4132 = vld [vmem:[%s5 + $0x168] sm:$0xff]
  %v4133 = vld [vmem:[%s5 + $0x170] sm:$0xff]
  %v4134 = vld [vmem:[%s5 + $0x178] sm:$0xff]
  %v4135 = vld [vmem:[%s5 + $0x180] sm:$0xff]
  %v4136 = vld [vmem:[%s5 + $0x188] sm:$0xff]
  %v4137 = vld [vmem:[%s5 + $0x190] sm:$0xff]
  %v4138 = vld [vmem:[%s5 + $0x198] sm:$0xff]
  %v4139 = vld [vmem:[%s5 + $0x1a0] sm:$0xff]
  %v4140 = vld [vmem:[%s5 + $0x1a8] sm:$0xff]
  %v4141 = vld [vmem:[%s5 + $0x1b0] sm:$0xff]
  %v4142 = vld [vmem:[%s5 + $0x1b8] sm:$0xff]
  %v4143 = vld [vmem:[%s5 + $0x1c0] sm:$0xff]
  %v4144 = vld [vmem:[%s5 + $0x1c8] sm:$0xff]
  %v4145 = vld [vmem:[%s5 + $0x1d0] sm:$0xff]
  %v4146 = vld [vmem:[%s5 + $0x1d8] sm:$0xff]
  %v4147 = vld [vmem:[%s5 + $0x1e0] sm:$0xff]
  %v4148 = vld [vmem:[%s5 + $0x1e8] sm:$0xff]
  %v4149 = vld [vmem:[%s5 + $0x1f0] sm:$0xff]
  %v4150 = vld [vmem:[%s5 + $0x1f8] sm:$0xff]
  %v4151 = vld [vmem:[%s5 + $0x200] sm:$0xff]
  %v4152 = vld [vmem:[%s5 + $0x208] sm:$0xff]
  %v4153 = vld [vmem:[%s5 + $0x210] sm:$0xff]
  %v4154 = vld [vmem:[%s5 + $0x218] sm:$0xff]
  %v4155 = vld [vmem:[%s5 + $0x220] sm:$0xff]
  %v4156 = vld [vmem:[%s5 + $0x228] sm:$0xff]
  %v4157 = vld [vmem:[%s5 + $0x230] sm:$0xff]
  %v4158 = vld [vmem:[%s5 + $0x238] sm:$0xff]
  %v4159 = vld [vmem:[%s5 + $0x240] sm:$0xff]
  %v4160 = vld [vmem:[%s5 + $0x248] sm:$0xff]
  %v4161 = vld [vmem:[%s5 + $0x250] sm:$0xff]
  %v4162 = vld [vmem:[%s5 + $0x258] sm:$0xff]
  %v4163 = vld [vmem:[%s5 + $0x260] sm:$0xff]
  %v4164 = vld [vmem:[%s5 + $0x268] sm:$0xff]
  %v4165 = vld [vmem:[%s5 + $0x270] sm:$0xff]
  %v4166 = vld [vmem:[%s5 + $0x278] sm:$0xff]
  %v4247 = vunpack.c.l.b16 %v4087
  %v4248 = vunpack.c.h.b16 %v4087
  %v4249 = vunpack.c.l.b16 %v4088
  %v4250 = vunpack.c.h.b16 %v4088
  %v4251 = vunpack.c.l.b16 %v4089
  %v4252 = vunpack.c.h.b16 %v4089
  %v4253 = vunpack.c.l.b16 %v4090
  %v4254 = vunpack.c.h.b16 %v4090
  %v4255 = vunpack.c.l.b16 %v4091
  %v4256 = vunpack.c.h.b16 %v4091
  %v4257 = vunpack.c.l.b16 %v4092
  %v4258 = vunpack.c.h.b16 %v4092
  %v4259 = vunpack.c.l.b16 %v4093
  %v4260 = vunpack.c.h.b16 %v4093
  %v4261 = vunpack.c.l.b16 %v4094
  %v4262 = vunpack.c.h.b16 %v4094
  %v4263 = vunpack.c.l.b16 %v4095
  %v4264 = vunpack.c.h.b16 %v4095
  %v4265 = vunpack.c.l.b16 %v4096
  %v4266 = vunpack.c.h.b16 %v4096
  %v4267 = vunpack.c.l.b16 %v4097
  %v4268 = vunpack.c.h.b16 %v4097
  %v4269 = vunpack.c.l.b16 %v4098
  %v4270 = vunpack.c.h.b16 %v4098
  %v4271 = vunpack.c.l.b16 %v4099
  %v4272 = vunpack.c.h.b16 %v4099
  %v4273 = vunpack.c.l.b16 %v4100
  %v4274 = vunpack.c.h.b16 %v4100
  %v4275 = vunpack.c.l.b16 %v4101
  %v4276 = vunpack.c.h.b16 %v4101
  %v4277 = vunpack.c.l.b16 %v4102
  %v4278 = vunpack.c.h.b16 %v4102
  %v4279 = vunpack.c.l.b16 %v4103
  %v4280 = vunpack.c.h.b16 %v4103
  %v4281 = vunpack.c.l.b16 %v4104
  %v4282 = vunpack.c.h.b16 %v4104
  %v4283 = vunpack.c.l.b16 %v4105
  %v4284 = vunpack.c.h.b16 %v4105
  %v4285 = vunpack.c.l.b16 %v4106
  %v4286 = vunpack.c.h.b16 %v4106
  %v4287 = vunpack.c.l.b16 %v4107
  %v4288 = vunpack.c.h.b16 %v4107
  %v4289 = vunpack.c.l.b16 %v4108
  %v4290 = vunpack.c.h.b16 %v4108
  %v4291 = vunpack.c.l.b16 %v4109
  %v4292 = vunpack.c.h.b16 %v4109
  %v4293 = vunpack.c.l.b16 %v4110
  %v4294 = vunpack.c.h.b16 %v4110
  %v4295 = vunpack.c.l.b16 %v4111
  %v4296 = vunpack.c.h.b16 %v4111
  %v4297 = vunpack.c.l.b16 %v4112
  %v4298 = vunpack.c.h.b16 %v4112
  %v4299 = vunpack.c.l.b16 %v4113
  %v4300 = vunpack.c.h.b16 %v4113
  %v4301 = vunpack.c.l.b16 %v4114
  %v4302 = vunpack.c.h.b16 %v4114
  %v4303 = vunpack.c.l.b16 %v4115
  %v4304 = vunpack.c.h.b16 %v4115
  %v4305 = vunpack.c.l.b16 %v4116
  %v4306 = vunpack.c.h.b16 %v4116
  %v4307 = vunpack.c.l.b16 %v4117
  %v4308 = vunpack.c.h.b16 %v4117
  %v4309 = vunpack.c.l.b16 %v4118
  %v4310 = vunpack.c.h.b16 %v4118
  %v4311 = vunpack.c.l.b16 %v4119
  %v4312 = vunpack.c.h.b16 %v4119
  %v4313 = vunpack.c.l.b16 %v4120
  %v4314 = vunpack.c.h.b16 %v4120
  %v4315 = vunpack.c.l.b16 %v4121
  %v4316 = vunpack.c.h.b16 %v4121
  %v4317 = vunpack.c.l.b16 %v4122
  %v4318 = vunpack.c.h.b16 %v4122
  %v4319 = vunpack.c.l.b16 %v4123
  %v4320 = vunpack.c.h.b16 %v4123
  %v4321 = vunpack.c.l.b16 %v4124
  %v4322 = vunpack.c.h.b16 %v4124
  %v4323 = vunpack.c.l.b16 %v4125
  %v4324 = vunpack.c.h.b16 %v4125
  %v4325 = vunpack.c.l.b16 %v4126
  %v4326 = vunpack.c.h.b16 %v4126
  %v4327 = vunpack.c.l.b16 %v4127
  %v4328 = vunpack.c.h.b16 %v4127
  %v4329 = vunpack.c.l.b16 %v4128
  %v4330 = vunpack.c.h.b16 %v4128
  %v4331 = vunpack.c.l.b16 %v4129
  %v4332 = vunpack.c.h.b16 %v4129
  %v4333 = vunpack.c.l.b16 %v4130
  %v4334 = vunpack.c.h.b16 %v4130
  %v4335 = vunpack.c.l.b16 %v4131
  %v4336 = vunpack.c.h.b16 %v4131
  %v4337 = vunpack.c.l.b16 %v4132
  %v4338 = vunpack.c.h.b16 %v4132
  %v4339 = vunpack.c.l.b16 %v4133
  %v4340 = vunpack.c.h.b16 %v4133
  %v4341 = vunpack.c.l.b16 %v4134
  %v4342 = vunpack.c.h.b16 %v4134
  %v4343 = vunpack.c.l.b16 %v4135
  %v4344 = vunpack.c.h.b16 %v4135
  %v4345 = vunpack.c.l.b16 %v4136
  %v4346 = vunpack.c.h.b16 %v4136
  %v4347 = vunpack.c.l.b16 %v4137
  %v4348 = vunpack.c.h.b16 %v4137
  %v4349 = vunpack.c.l.b16 %v4138
  %v4350 = vunpack.c.h.b16 %v4138
  %v4351 = vunpack.c.l.b16 %v4139
  %v4352 = vunpack.c.h.b16 %v4139
  %v4353 = vunpack.c.l.b16 %v4140
  %v4354 = vunpack.c.h.b16 %v4140
  %v4355 = vunpack.c.l.b16 %v4141
  %v4356 = vunpack.c.h.b16 %v4141
  %v4357 = vunpack.c.l.b16 %v4142
  %v4358 = vunpack.c.h.b16 %v4142
  %v4359 = vunpack.c.l.b16 %v4143
  %v4360 = vunpack.c.h.b16 %v4143
  %v4361 = vunpack.c.l.b16 %v4144
  %v4362 = vunpack.c.h.b16 %v4144
  %v4363 = vunpack.c.l.b16 %v4145
  %v4364 = vunpack.c.h.b16 %v4145
  %v4365 = vunpack.c.l.b16 %v4146
  %v4366 = vunpack.c.h.b16 %v4146
  %v4367 = vunpack.c.l.b16 %v4147
  %v4368 = vunpack.c.h.b16 %v4147
  %v4369 = vunpack.c.l.b16 %v4148
  %v4370 = vunpack.c.h.b16 %v4148
  %v4371 = vunpack.c.l.b16 %v4149
  %v4372 = vunpack.c.h.b16 %v4149
  %v4373 = vunpack.c.l.b16 %v4150
  %v4374 = vunpack.c.h.b16 %v4150
  %v4375 = vunpack.c.l.b16 %v4151
  %v4376 = vunpack.c.h.b16 %v4151
  %v4377 = vunpack.c.l.b16 %v4152
  %v4378 = vunpack.c.h.b16 %v4152
  %v4379 = vunpack.c.l.b16 %v4153
  %v4380 = vunpack.c.h.b16 %v4153
  %v4381 = vunpack.c.l.b16 %v4154
  %v4382 = vunpack.c.h.b16 %v4154
  %v4383 = vunpack.c.l.b16 %v4155
  %v4384 = vunpack.c.h.b16 %v4155
  %v4385 = vunpack.c.l.b16 %v4156
  %v4386 = vunpack.c.h.b16 %v4156
  %v4387 = vunpack.c.l.b16 %v4157
  %v4388 = vunpack.c.h.b16 %v4157
  %v4389 = vunpack.c.l.b16 %v4158
  %v4390 = vunpack.c.h.b16 %v4158
  %v4391 = vunpack.c.l.b16 %v4159
  %v4392 = vunpack.c.h.b16 %v4159
  %v4393 = vunpack.c.l.b16 %v4160
  %v4394 = vunpack.c.h.b16 %v4160
  %v4395 = vunpack.c.l.b16 %v4161
  %v4396 = vunpack.c.h.b16 %v4161
  %v4397 = vunpack.c.l.b16 %v4162
  %v4398 = vunpack.c.h.b16 %v4162
  %v4399 = vunpack.c.l.b16 %v4163
  %v4400 = vunpack.c.h.b16 %v4163
  %v4401 = vunpack.c.l.b16 %v4164
  %v4402 = vunpack.c.h.b16 %v4164
  %v4403 = vunpack.c.l.b16 %v4165
  %v4404 = vunpack.c.h.b16 %v4165
  %v4405 = vunpack.c.l.b16 %v4166
  %v4406 = vunpack.c.h.b16 %v4166
  %v4407 = vpack.c.b16 %v4249, %v4247
  %v4408 = vpack.c.b16 %v4250, %v4248
  %v4409 = vpack.c.b16 %v4253, %v4251
  %v4410 = vpack.c.b16 %v4254, %v4252
  %v4411 = vpack.c.b16 %v4257, %v4255
  %v4412 = vpack.c.b16 %v4258, %v4256
  %v4413 = vpack.c.b16 %v4261, %v4259
  %v4414 = vpack.c.b16 %v4262, %v4260
  %v4415 = vpack.c.b16 %v4265, %v4263
  %v4416 = vpack.c.b16 %v4266, %v4264
  %v4417 = vpack.c.b16 %v4269, %v4267
  %v4418 = vpack.c.b16 %v4270, %v4268
  %v4419 = vpack.c.b16 %v4273, %v4271
  %v4420 = vpack.c.b16 %v4274, %v4272
  %v4421 = vpack.c.b16 %v4277, %v4275
  %v4422 = vpack.c.b16 %v4278, %v4276
  %v4423 = vpack.c.b16 %v4281, %v4279
  %v4424 = vpack.c.b16 %v4282, %v4280
  %v4425 = vpack.c.b16 %v4285, %v4283
  %v4426 = vpack.c.b16 %v4286, %v4284
  %v4427 = vpack.c.b16 %v4289, %v4287
  %v4428 = vpack.c.b16 %v4290, %v4288
  %v4429 = vpack.c.b16 %v4293, %v4291
  %v4430 = vpack.c.b16 %v4294, %v4292
  %v4431 = vpack.c.b16 %v4297, %v4295
  %v4432 = vpack.c.b16 %v4298, %v4296
  %v4433 = vpack.c.b16 %v4301, %v4299
  %v4434 = vpack.c.b16 %v4302, %v4300
  %v4435 = vpack.c.b16 %v4305, %v4303
  %v4436 = vpack.c.b16 %v4306, %v4304
  %v4437 = vpack.c.b16 %v4309, %v4307
  %v4438 = vpack.c.b16 %v4310, %v4308
  %v4439 = vpack.c.b16 %v4313, %v4311
  %v4440 = vpack.c.b16 %v4314, %v4312
  %v4441 = vpack.c.b16 %v4317, %v4315
  %v4442 = vpack.c.b16 %v4318, %v4316
  %v4443 = vpack.c.b16 %v4321, %v4319
  %v4444 = vpack.c.b16 %v4322, %v4320
  %v4445 = vpack.c.b16 %v4325, %v4323
  %v4446 = vpack.c.b16 %v4326, %v4324
  %v4447 = vpack.c.b16 %v4329, %v4327
  %v4448 = vpack.c.b16 %v4330, %v4328
  %v4449 = vpack.c.b16 %v4333, %v4331
  %v4450 = vpack.c.b16 %v4334, %v4332
  %v4451 = vpack.c.b16 %v4337, %v4335
  %v4452 = vpack.c.b16 %v4338, %v4336
  %v4453 = vpack.c.b16 %v4341, %v4339
  %v4454 = vpack.c.b16 %v4342, %v4340
  %v4455 = vpack.c.b16 %v4345, %v4343
  %v4456 = vpack.c.b16 %v4346, %v4344
  %v4457 = vpack.c.b16 %v4349, %v4347
  %v4458 = vpack.c.b16 %v4350, %v4348
  %v4459 = vpack.c.b16 %v4353, %v4351
  %v4460 = vpack.c.b16 %v4354, %v4352
  %v4461 = vpack.c.b16 %v4357, %v4355
  %v4462 = vpack.c.b16 %v4358, %v4356
  %v4463 = vpack.c.b16 %v4361, %v4359
  %v4464 = vpack.c.b16 %v4362, %v4360
  %v4465 = vpack.c.b16 %v4365, %v4363
  %v4466 = vpack.c.b16 %v4366, %v4364
  %v4467 = vpack.c.b16 %v4369, %v4367
  %v4468 = vpack.c.b16 %v4370, %v4368
  %v4469 = vpack.c.b16 %v4373, %v4371
  %v4470 = vpack.c.b16 %v4374, %v4372
  %v4471 = vpack.c.b16 %v4377, %v4375
  %v4472 = vpack.c.b16 %v4378, %v4376
  %v4473 = vpack.c.b16 %v4381, %v4379
  %v4474 = vpack.c.b16 %v4382, %v4380
  %v4475 = vpack.c.b16 %v4385, %v4383
  %v4476 = vpack.c.b16 %v4386, %v4384
  %v4477 = vpack.c.b16 %v4389, %v4387
  %v4478 = vpack.c.b16 %v4390, %v4388
  %v4479 = vpack.c.b16 %v4393, %v4391
  %v4480 = vpack.c.b16 %v4394, %v4392
  %v4481 = vpack.c.b16 %v4397, %v4395
  %v4482 = vpack.c.b16 %v4398, %v4396
  %v4483 = vpack.c.b16 %v4401, %v4399
  %v4484 = vpack.c.b16 %v4402, %v4400
  %v4485 = vpack.c.b16 %v4405, %v4403
  %v4486 = vpack.c.b16 %v4406, %v4404
  %4567 = vmatprep.subr.bf16.mxu0 %v4408
  %4568 = vmatpush1.bf16.msra.mxu0 %v4407
  %4569 = vmatprep.subr.bf16.mxu0 %v4410
  %4570 = vmatpush1.bf16.msra.mxu0 %v4409
  %4571 = vmatprep.subr.bf16.mxu0 %v4412
  %4572 = vmatpush1.bf16.msra.mxu0 %v4411
  %4573 = vmatprep.subr.bf16.mxu0 %v4414
  %4574 = vmatpush1.bf16.msra.mxu0 %v4413
  %4575 = vmatprep.subr.bf16.mxu0 %v4416
  %4576 = vmatpush1.bf16.msra.mxu0 %v4415
  %4577 = vmatprep.subr.bf16.mxu0 %v4418
  %4578 = vmatpush1.bf16.msra.mxu0 %v4417
  %4579 = vmatprep.subr.bf16.mxu0 %v4420
  %4580 = vmatpush1.bf16.msra.mxu0 %v4419
  %4581 = vmatprep.subr.bf16.mxu0 %v4422
  %4582 = vmatpush1.bf16.msra.mxu0 %v4421
  %4583 = vmatprep.subr.bf16.mxu0 %v4424
  %4584 = vmatpush1.bf16.msra.mxu0 %v4423
  %4585 = vmatprep.subr.bf16.mxu0 %v4426
  %4586 = vmatpush1.bf16.msra.mxu0 %v4425
  %4587 = vmatprep.subr.bf16.mxu0 %v4428
  %4588 = vmatpush1.bf16.msra.mxu0 %v4427
  %4589 = vmatprep.subr.bf16.mxu0 %v4430
  %4590 = vmatpush1.bf16.msra.mxu0 %v4429
  %4591 = vmatprep.subr.bf16.mxu0 %v4432
  %4592 = vmatpush1.bf16.msra.mxu0 %v4431
  %4593 = vmatprep.subr.bf16.mxu0 %v4434
  %4594 = vmatpush1.bf16.msra.mxu0 %v4433
  %4595 = vmatprep.subr.bf16.mxu0 %v4436
  %4596 = vmatpush1.bf16.msra.mxu0 %v4435
  %4597 = vmatprep.subr.bf16.mxu0 %v4438
  %4598 = vmatpush1.bf16.msra.mxu0 %v4437
  %4599 = vmatprep.mubr.bf16.mxu0 %v4083
  %4600 = vmatmul.mubr.bf16.gmra.mrb[0].mxu0 %v4082
  %v4601 = vpop.f32.mrb[0].mxu0
  %v4602 = vadd.f32 0.0, %v4601
  %v4603 = vpop.f32.mrb[0].mxu0
  %v4604 = vadd.f32 0.0, %v4603
  %v4605 = vpop.f32.mrb[0].mxu0
  %v4606 = vpop.f32.mrb[0].mxu0
  %4607 = vdwg.mxu0
  %4608 = vmatprep.subr.bf16.mxu0 %v4440
  %4609 = vmatpush1.bf16.msra.mxu0 %v4439
  %4610 = vmatprep.subr.bf16.mxu0 %v4442
  %4611 = vmatpush1.bf16.msra.mxu0 %v4441
  %4612 = vmatprep.subr.bf16.mxu0 %v4444
  %4613 = vmatpush1.bf16.msra.mxu0 %v4443
  %4614 = vmatprep.subr.bf16.mxu0 %v4446
  %4615 = vmatpush1.bf16.msra.mxu0 %v4445
  %4616 = vmatprep.subr.bf16.mxu0 %v4448
  %4617 = vmatpush1.bf16.msra.mxu0 %v4447
  %4618 = vmatprep.subr.bf16.mxu0 %v4450
  %4619 = vmatpush1.bf16.msra.mxu0 %v4449
  %4620 = vmatprep.subr.bf16.mxu0 %v4452
  %4621 = vmatpush1.bf16.msra.mxu0 %v4451
  %4622 = vmatprep.subr.bf16.mxu0 %v4454
  %4623 = vmatpush1.bf16.msra.mxu0 %v4453
  %4624 = vmatprep.subr.bf16.mxu0 %v4456
  %4625 = vmatpush1.bf16.msra.mxu0 %v4455
  %4626 = vmatprep.subr.bf16.mxu0 %v4458
  %4627 = vmatpush1.bf16.msra.mxu0 %v4457
  %4628 = vmatprep.subr.bf16.mxu0 %v4460
  %4629 = vmatpush1.bf16.msra.mxu0 %v4459
  %4630 = vmatprep.subr.bf16.mxu0 %v4462
  %4631 = vmatpush1.bf16.msra.mxu0 %v4461
  %4632 = vmatprep.subr.bf16.mxu0 %v4464
  %4633 = vmatpush1.bf16.msra.mxu0 %v4463
  %4634 = vmatprep.subr.bf16.mxu0 %v4466
  %4635 = vmatpush1.bf16.msra.mxu0 %v4465
  %4636 = vmatprep.subr.bf16.mxu0 %v4468
  %4637 = vmatpush1.bf16.msra.mxu0 %v4467
  %4638 = vmatprep.subr.bf16.mxu0 %v4470
  %4639 = vmatpush1.bf16.msra.mxu0 %v4469
  %4640 = vmatprep.mubr.bf16.mxu0 %v4085
  %4641 = vmatmul.mubr.bf16.gmra.mrb[0].mxu0 %v4084
  %v4642 = vpop.f32.mrb[0].mxu0
  %v4643 = vadd.f32 %v4602, %v4642
  %v4644 = vpop.f32.mrb[0].mxu0
  %v4645 = vadd.f32 %v4604, %v4644
  %v4646 = vpop.f32.mrb[0].mxu0
  %v4647 = vpop.f32.mrb[0].mxu0
  %4648 = vdwg.mxu0
  %4649 = vmatprep.subr.bf16.mxu0 %v4472
  %4650 = vmatpush1.bf16.msra.mxu0 %v4471
  %4651 = vmatprep.subr.bf16.mxu0 %v4474
  %4652 = vmatpush1.bf16.msra.mxu0 %v4473
  %4653 = vmatprep.subr.bf16.mxu0 %v4476
  %4654 = vmatpush1.bf16.msra.mxu0 %v4475
  %4655 = vmatprep.subr.bf16.mxu0 %v4478
  %4656 = vmatpush1.bf16.msra.mxu0 %v4477
  %4657 = vmatprep.subr.bf16.mxu0 %v4480
  %4658 = vmatpush1.bf16.msra.mxu0 %v4479
  %4659 = vmatprep.subr.bf16.mxu0 %v4482
  %4660 = vmatpush1.bf16.msra.mxu0 %v4481
  %4661 = vmatprep.subr.bf16.mxu0 %v4484
  %4662 = vmatpush1.bf16.msra.mxu0 %v4483
  %4663 = vmatprep.subr.bf16.mxu0 %v4486
  %4664 = vmatpush1.bf16.msra.mxu0 %v4485
  %4665 = vmatprep.subr.bf16.mxu0 0
  %4666 = vmatpush1.bf16.msra.mxu0 0
  %4667 = vmatprep.subr.bf16.mxu0 0
  %4668 = vmatpush1.bf16.msra.mxu0 0
  %4669 = vmatprep.subr.bf16.mxu0 0
  %4670 = vmatpush1.bf16.msra.mxu0 0
  %4671 = vmatprep.subr.bf16.mxu0 0
  %4672 = vmatpush1.bf16.msra.mxu0 0
  %4673 = vmatprep.subr.bf16.mxu0 0
  %4674 = vmatpush1.bf16.msra.mxu0 0
  %4675 = vmatprep.subr.bf16.mxu0 0
  %4676 = vmatpush1.bf16.msra.mxu0 0
  %4677 = vmatprep.subr.bf16.mxu0 0
  %4678 = vmatpush1.bf16.msra.mxu0 0
  %4679 = vmatprep.subr.bf16.mxu0 0
  %4680 = vmatpush1.bf16.msra.mxu0 0
  %4681 = vmatprep.mubr.bf16.mxu0 0
  %4682 = vmatmul.mubr.bf16.gmra.mrb[0].mxu0 %v4086
  %v4683 = vpop.f32.mrb[0].mxu0
  %v4684 = vadd.f32 %v4643, %v4683
  %v4685 = vpop.f32.mrb[0].mxu0
  %v4686 = vadd.f32 %v4645, %v4685
  %v4687 = vpop.f32.mrb[0].mxu0
  %v4688 = vpop.f32.mrb[0].mxu0
  %4689 = vdwg.mxu0
  %v4690 = vld [vmem:[%s6] sm:$0x3]
  %v4692 = vlaneseq
  %v4693 = vshrl.u32 %v4692, 7
  %v4694 = vsub.s32 0, %v4693
  %v4695 = vrot.slane %v4690, %v4694
  %v4696 = vlaneseq
  %v4697 = vshrl.u32 %v4696, 7
  %v4698 = vsub.s32 1, %v4697
  %v4699 = vrot.slane %v4690, %v4698
  %vm4702 = vcmp.gt.f32.partialorder %v4684, %v4695
  %vm4703 = vcmp.gt.f32.partialorder %v4686, %v4699
  %v4704 = vsel %vm4702, 1, 0
  %v4705 = vsel %vm4703, 1, 0
  %v4706 = vcvt.s32.f32 %v4704
  %v4707 = vcvt.s32.f32 %v4705
  %v4708 = vpack.c.bf16 %v4706, %v4706
  %v4709 = vpack.c.bf16 %v4707, %v4707
  %v4710 = vld [vmem:[%s7] sm:$0xf]
  %v4711 = vld [vmem:[%s7 + $0x4] sm:$0xf]
  %v4712 = vld [vmem:[%s7 + $0x8] sm:$0xf]
  %v4713 = vld [vmem:[%s7 + $0xc] sm:$0xf]
  %v4714 = vld [vmem:[%s7 + $0x10] sm:$0xf]
  %v4715 = vld [vmem:[%s7 + $0x14] sm:$0xf]
  %v4716 = vld [vmem:[%s7 + $0x18] sm:$0xf]
  %v4717 = vld [vmem:[%s7 + $0x1c] sm:$0xf]
  %v4718 = vld [vmem:[%s7 + $0x20] sm:$0xf]
  %v4719 = vld [vmem:[%s7 + $0x24] sm:$0xf]
  %v4720 = vld [vmem:[%s7 + $0x28] sm:$0xf]
  %v4721 = vld [vmem:[%s7 + $0x2c] sm:$0xf]
  %v4722 = vld [vmem:[%s7 + $0x30] sm:$0xf]
  %v4723 = vld [vmem:[%s7 + $0x34] sm:$0xf]
  %v4724 = vld [vmem:[%s7 + $0x38] sm:$0xf]
  %v4725 = vld [vmem:[%s7 + $0x3c] sm:$0xf]
  %v4726 = vld [vmem:[%s7 + $0x40] sm:$0xf]
  %v4727 = vld [vmem:[%s7 + $0x44] sm:$0xf]
  %v4728 = vld [vmem:[%s7 + $0x48] sm:$0xf]
  %v4729 = vld [vmem:[%s7 + $0x4c] sm:$0xf]
  %v4730 = vld [vmem:[%s7 + $0x50] sm:$0xf]
  %v4731 = vld [vmem:[%s7 + $0x54] sm:$0xf]
  %v4732 = vld [vmem:[%s7 + $0x58] sm:$0xf]
  %v4733 = vld [vmem:[%s7 + $0x5c] sm:$0xf]
  %v4734 = vld [vmem:[%s7 + $0x60] sm:$0xf]
  %v4735 = vld [vmem:[%s7 + $0x64] sm:$0xf]
  %v4736 = vld [vmem:[%s7 + $0x68] sm:$0xf]
  %v4737 = vld [vmem:[%s7 + $0x6c] sm:$0xf]
  %v4738 = vld [vmem:[%s7 + $0x70] sm:$0xf]
  %v4739 = vld [vmem:[%s7 + $0x74] sm:$0xf]
  %v4740 = vld [vmem:[%s7 + $0x78] sm:$0xf]
  %v4741 = vld [vmem:[%s7 + $0x7c] sm:$0xf]
  %v4742 = vld [vmem:[%s8] sm:$0x1]
  %v4744 = vlaneseq
  %v4745 = vshrl.u32 %v4744, 7
  %v4746 = vsub.s32 0, %v4745
  %v4747 = vrot.slane %v4742, %v4746
  %v4781 = vunpack.c.l.b16 %v4710
  %v4782 = vunpack.c.l.b16 %v4711
  %v4783 = vunpack.c.l.b16 %v4712
  %v4784 = vunpack.c.l.b16 %v4713
  %v4785 = vunpack.c.l.b16 %v4714
  %v4786 = vunpack.c.l.b16 %v4715
  %v4787 = vunpack.c.l.b16 %v4716
  %v4788 = vunpack.c.l.b16 %v4717
  %v4789 = vunpack.c.l.b16 %v4718
  %v4790 = vunpack.c.l.b16 %v4719
  %v4791 = vunpack.c.l.b16 %v4720
  %v4792 = vunpack.c.l.b16 %v4721
  %v4793 = vunpack.c.l.b16 %v4722
  %v4794 = vunpack.c.l.b16 %v4723
  %v4795 = vunpack.c.l.b16 %v4724
  %v4796 = vunpack.c.l.b16 %v4725
  %v4797 = vunpack.c.l.b16 %v4726
  %v4798 = vunpack.c.l.b16 %v4727
  %v4799 = vunpack.c.l.b16 %v4728
  %v4800 = vunpack.c.l.b16 %v4729
  %v4801 = vunpack.c.l.b16 %v4730
  %v4802 = vunpack.c.l.b16 %v4731
  %v4803 = vunpack.c.l.b16 %v4732
  %v4804 = vunpack.c.l.b16 %v4733
  %v4805 = vunpack.c.l.b16 %v4734
  %v4806 = vunpack.c.l.b16 %v4735
  %v4807 = vunpack.c.l.b16 %v4736
  %v4808 = vunpack.c.l.b16 %v4737
  %v4809 = vunpack.c.l.b16 %v4738
  %v4810 = vunpack.c.l.b16 %v4739
  %v4811 = vunpack.c.l.b16 %v4740
  %v4812 = vunpack.c.l.b16 %v4741
  %v4813 = vpack.c.b16 %v4782, %v4781
  %v4814 = vpack.c.b16 %v4784, %v4783
  %v4815 = vpack.c.b16 %v4786, %v4785
  %v4816 = vpack.c.b16 %v4788, %v4787
  %v4817 = vpack.c.b16 %v4790, %v4789
  %v4818 = vpack.c.b16 %v4792, %v4791
  %v4819 = vpack.c.b16 %v4794, %v4793
  %v4820 = vpack.c.b16 %v4796, %v4795
  %v4821 = vpack.c.b16 %v4798, %v4797
  %v4822 = vpack.c.b16 %v4800, %v4799
  %v4823 = vpack.c.b16 %v4802, %v4801
  %v4824 = vpack.c.b16 %v4804, %v4803
  %v4825 = vpack.c.b16 %v4806, %v4805
  %v4826 = vpack.c.b16 %v4808, %v4807
  %v4827 = vpack.c.b16 %v4810, %v4809
  %v4828 = vpack.c.b16 %v4812, %v4811
  %4845 = vmatprep.subr.bf16.mxu0 0
  %4846 = vmatpush1.bf16.msra.mxu0 %v4813
  %4847 = vmatprep.subr.bf16.mxu0 0
  %4848 = vmatpush1.bf16.msra.mxu0 %v4814
  %4849 = vmatprep.subr.bf16.mxu0 0
  %4850 = vmatpush1.bf16.msra.mxu0 %v4815
  %4851 = vmatprep.subr.bf16.mxu0 0
  %4852 = vmatpush1.bf16.msra.mxu0 %v4816
  %4853 = vmatprep.subr.bf16.mxu0 0
  %4854 = vmatpush1.bf16.msra.mxu0 %v4817
  %4855 = vmatprep.subr.bf16.mxu0 0
  %4856 = vmatpush1.bf16.msra.mxu0 %v4818
  %4857 = vmatprep.subr.bf16.mxu0 0
  %4858 = vmatpush1.bf16.msra.mxu0 %v4819
  %4859 = vmatprep.subr.bf16.mxu0 0
  %4860 = vmatpush1.bf16.msra.mxu0 %v4820
  %4861 = vmatprep.subr.bf16.mxu0 0
  %4862 = vmatpush1.bf16.msra.mxu0 %v4821
  %4863 = vmatprep.subr.bf16.mxu0 0
  %4864 = vmatpush1.bf16.msra.mxu0 %v4822
  %4865 = vmatprep.subr.bf16.mxu0 0
  %4866 = vmatpush1.bf16.msra.mxu0 %v4823
  %4867 = vmatprep.subr.bf16.mxu0 0
  %4868 = vmatpush1.bf16.msra.mxu0 %v4824
  %4869 = vmatprep.subr.bf16.mxu0 0
  %4870 = vmatpush1.bf16.msra.mxu0 %v4825
  %4871 = vmatprep.subr.bf16.mxu0 0
  %4872 = vmatpush1.bf16.msra.mxu0 %v4826
  %4873 = vmatprep.subr.bf16.mxu0 0
  %4874 = vmatpush1.bf16.msra.mxu0 %v4827
  %4875 = vmatprep.subr.bf16.mxu0 0
  %4876 = vmatpush1.bf16.msra.mxu0 %v4828
  %4877 = vmatprep.mubr.bf16.mxu0 %v4709
  %4878 = vmatmul.mubr.bf16.gmra.mrb[0].mxu0 %v4708
  %v4879 = vpop.f32.mrb[0].mxu0
  %v4880 = vadd.f32 %v4747, %v4879
  %v4881 = vpop.f32.mrb[0].mxu0
  %v4882 = vpop.f32.mrb[0].mxu0
  %v4883 = vpop.f32.mrb[0].mxu0
  %4884 = vdwg.mxu0
  %4885 = vst [vmem:[%s9] sm:$0xff] %v4880
  // Predicated region
  $region38: #{residual_spiking_forward.1} parent=0 // pred_check
    _
  $region39: #{residual_spiking_forward.1} parent=0 // pred_check_branch
    %4887 = sbr.rel (0) target = $region41
  $region40: #{residual_spiking_forward.1} parent=0 // pred_region
    _
  $region41: #{residual_spiking_forward.1} parent=0 // pred_fallthru
    _
  // Predicated region
  $region42: #{residual_spiking_forward.1} parent=0 // pred_check
    _
  $region43: #{residual_spiking_forward.1} parent=0 // pred_check_branch
    %4889 = sbr.rel (0) target = $region45
  $region44: #{residual_spiking_forward.1} parent=0 // pred_region
    _
  $region45: #{residual_spiking_forward.1} parent=0 // pred_fallthru
    _

</llo_original>
